<compile_context>
chip_gen: v7x
topology: tpu7x:2x2x1
jax: 0.10.0
libtpu: 0.0.40
codegen_flags: <defaults>
</compile_context>

<pallas_src>
import jax
import jax.numpy as jnp
from jax.experimental import pallas as pl
from jax.experimental.pallas import tpu as pltpu

LANES = 128  # TPU vreg / MXU lane width; channel axes are zero-padded to this.


# ------------------------------ Pallas kernel ------------------------------ #

def _mish(x):
    # x * tanh(softplus(x)) with one exp; clamp so exp cannot overflow (for x > 20
    # the ratio is already 1.0 in f32).  approx reciprocal -> ~1e-3 rel. error.
    t = jnp.exp(jnp.minimum(x, 20.0))
    u = t * (t + 2.0)
    return x * u * pl.reciprocal(u + 2.0, approx=True)


def _down_sample_kernel(xph_ref, wds_ref, sds_ref, bds_ref,
                        w1_ref, s1_ref, b1_ref,
                        w2_ref, s2_ref, b2_ref,
                        o_ref, pcol_ref, hpad_ref):
    nb, _, hh, wh, cin_p = xph_ref.shape
    ho, wo = hh - 1, wh - 1
    m = ho * wo
    count = w1_ref.shape[0]
    kds = 9 * cin_p
    kds_p = wds_ref.shape[0]

    # ---- ConvolutionalLayer(3x3, stride 2, pad 1) ---------------------------
    # im2col over the 4 space-to-depth phase planes, assembled column-by-column
    # in a VMEM scratch, then ONE bf16 matmul with K = 9*cin_p (padded to kds_p).
    if kds_p > kds:                                    # zero the K padding once
        pcol_ref[:, :, kds:] = jnp.zeros((nb, m, kds_p - kds), pcol_ref.dtype)
    for b in range(nb):
        planes = xph_ref[b]                            # (4, hh, wh, cin_p)
        for ky in range(3):
            for kx in range(3):
                pr, dr = ky % 2, ky // 2
                pc, dc = kx % 2, kx // 2
                tap = planes[pr * 2 + pc, dr:dr + ho, dc:dc + wo, :]
                c0 = (ky * 3 + kx) * cin_p
                pcol_ref[b, :, c0:c0 + cin_p] = tap.reshape(m, cin_p)
    patches = pcol_ref[...].reshape(nb * m, kds_p).astype(jnp.bfloat16)
    acc = jnp.dot(patches, wds_ref[...], preferred_element_type=jnp.float32)
    y = _mish(acc * sds_ref[...] + bds_ref[...])       # (nb*m, 128) f32, on-chip

    # Zero the padded-h scratch ONCE: the border never changes and the interior
    # is fully overwritten by every residual iteration.
    hpad_ref[...] = jnp.zeros_like(hpad_ref)

    # ---- count x ResidualLayer; every intermediate stays in VMEM / vregs ----
    # TODO(synk): for large `count`, switch this static unroll to lax.fori_loop
    #             (y as carry, dynamic w1_ref[r]/w2_ref[r] indexing) to bound vreg
    #             live ranges and compile time.
    for r in range(count):
        # 1x1 conv -> BN -> Mish (bf16 MXU operands, f32 accumulate/epilogue).
        h = _mish(jnp.dot(y.astype(jnp.bfloat16), w1_ref[r],
                          preferred_element_type=jnp.float32)
                  * s1_ref[r] + b1_ref[r])
        # Padded copy of h (conv padding = 1); only the interior is rewritten.
        hpad_ref[:, 1:ho + 1, 1:wo + 1, :] = h.reshape(nb, ho, wo, LANES)
        # 3x3 conv as ONE bf16 matmul over the tap-concatenated K = 9*128 axis.
        cols = []
        for b in range(nb):
            hp = hpad_ref[b]                           # (ho+2, wo+2, 128) f32
            taps = [hp[ky:ky + ho, kx:kx + wo, :].reshape(m, LANES)
                    for ky in range(3) for kx in range(3)]
            cols.append(jnp.concatenate(taps, axis=-1).astype(jnp.bfloat16))
        patches2 = cols[0] if nb == 1 else jnp.concatenate(cols, axis=0)
        acc2 = jnp.dot(patches2, w2_ref[r], preferred_element_type=jnp.float32)
        y = y + _mish(acc2 * s2_ref[r] + b2_ref[r])    # residual add in f32

    o_ref[...] = y.reshape(nb, ho, wo, LANES)          # dense 128-lane store


# ------------------------------- JAX wrapper -------------------------------- #

def _space_to_depth_phases(x_nhwc):
    """phases[n, pr*2+pc, i, j, c] = xpad[n, 2i+pr, 2j+pc, c] (pad=1; layout only)."""
    n, h, w, c = x_nhwc.shape
    xp = jnp.pad(x_nhwc, ((0, 0), (1, 1), (1, 1), (0, 0)))
    hh, wh = (h + 2) // 2, (w + 2) // 2
    xp = xp.reshape(n, hh, 2, wh, 2, c)
    return jnp.transpose(xp, (0, 2, 4, 1, 3, 5)).reshape(n, 4, hh, wh, c)


def _pad_last(x, width):
    return jnp.pad(x, [(0, 0)] * (x.ndim - 1) + [(0, width - x.shape[-1])])


def _pack_params(params, cin_p):
    """PyTorch-order conv weights + folded BN -> lane-padded bf16 matmul operands."""
    (w, s, b), res = params
    cout, cin = w.shape[0], w.shape[1]
    kds = 9 * cin_p
    kds_p = -(-kds // LANES) * LANES
    wds = jnp.transpose(w, (2, 3, 1, 0)).reshape(9, cin, cout)        # (tap, ci, co)
    wds = jnp.pad(wds, ((0, 0), (0, cin_p - cin), (0, LANES - cout)))
    wds = jnp.pad(wds.reshape(kds, LANES), ((0, kds_p - kds), (0, 0)))
    sds = _pad_last(s.reshape(1, cout), LANES)
    bds = _pad_last(b.reshape(1, cout), LANES)
    w1l, s1l, b1l, w2l, s2l, b2l = [], [], [], [], [], []
    for (w1, s1, b1), (w2, s2, b2) in res:
        c2 = w1.shape[0]
        m1 = jnp.zeros((LANES, LANES), jnp.float32).at[:cout, :c2].set(w1[:, :, 0, 0].T)
        w1l.append(m1)
        s1l.append(_pad_last(s1.reshape(1, c2), LANES))
        b1l.append(_pad_last(b1.reshape(1, c2), LANES))
        m2 = jnp.transpose(w2, (2, 3, 1, 0)).reshape(9, c2, cout)     # (tap, ci, co)
        m2 = jnp.zeros((9, LANES, LANES), jnp.float32).at[:, :c2, :cout].set(m2)
        w2l.append(m2.reshape(9 * LANES, LANES))
        s2l.append(_pad_last(s2.reshape(1, cout), LANES))
        b2l.append(_pad_last(b2.reshape(1, cout), LANES))
    bf16 = lambda t: t.astype(jnp.bfloat16)
    return (bf16(wds), sds, bds,
            bf16(jnp.stack(w1l)), jnp.stack(s1l), jnp.stack(b1l),
            bf16(jnp.stack(w2l)), jnp.stack(s2l), jnp.stack(b2l))


def _default_batches_per_step(n):
    """v7x has 2 TensorCores/chip -> keep >=2 'parallel' grid steps when possible.
    Single-TC chips (v5e/v6e): grid is a serial loop, so fold the whole batch into
    the matmul M dimension (fewer ~0.35us grid steps, fuller MXU M)."""
    try:
        kind = jax.devices()[0].device_kind.lower()
    except Exception:
        kind = ""
    if ("v7" in kind or "7x" in kind) and n >= 2 and n % 2 == 0:
        return n // 2
    return n


def down_sample_layer(x_nhwc, params, batches_per_step=None):
    """Fused DownSampleLayer forward (eval-mode BN), one pallas_call."""
    n, h, w, cin = x_nhwc.shape
    assert h % 2 == 0 and w % 2 == 0
    (w_ds, _, _), res = params
    cout = w_ds.shape[0]
    count = len(res)
    ho, wo = h // 2, w // 2
    m = ho * wo
    cin_p = ((cin + 7) // 8) * 8                     # sublane-align input channels
    nb = batches_per_step if batches_per_step is not None else _default_batches_per_step(n)
    assert n % nb == 0
    steps = n // nb

    x_in = jnp.pad(x_nhwc, ((0, 0), (0, 0), (0, 0), (0, cin_p - cin)))
    xph = _space_to_depth_phases(x_in)               # (n, 4, ho+1, wo+1, cin_p)
    packed = _pack_params(params, cin_p)
    hh, wh = ho + 1, wo + 1
    kds_p = packed[0].shape[0]

    grid_spec = pltpu.PrefetchScalarGridSpec(
        num_scalar_prefetch=0,
        grid=(steps,),
        in_specs=[
            pl.BlockSpec((nb, 4, hh, wh, cin_p), lambda g: (g, 0, 0, 0, 0)),
            pl.BlockSpec((kds_p, LANES), lambda g: (0, 0)),
            pl.BlockSpec((1, LANES), lambda g: (0, 0)),
            pl.BlockSpec((1, LANES), lambda g: (0, 0)),
            pl.BlockSpec((count, LANES, LANES), lambda g: (0, 0, 0)),
            pl.BlockSpec((count, 1, LANES), lambda g: (0, 0, 0)),
            pl.BlockSpec((count, 1, LANES), lambda g: (0, 0, 0)),
            pl.BlockSpec((count, 9 * LANES, LANES), lambda g: (0, 0, 0)),
            pl.BlockSpec((count, 1, LANES), lambda g: (0, 0, 0)),
            pl.BlockSpec((count, 1, LANES), lambda g: (0, 0, 0)),
        ],
        out_specs=pl.BlockSpec((nb, ho, wo, LANES), lambda g: (g, 0, 0, 0)),
        scratch_shapes=[
            pltpu.VMEM((nb, m, kds_p), jnp.float32),                 # downsample im2col
            pltpu.VMEM((nb, ho + 2, wo + 2, LANES), jnp.float32),    # padded residual h
        ],
    )
    out = pl.pallas_call(
        _down_sample_kernel,
        out_shape=jax.ShapeDtypeStruct((n, ho, wo, LANES), jnp.float32),
        grid_spec=grid_spec,
        compiler_params=pltpu.CompilerParams(
            dimension_semantics=("parallel",),
            vmem_limit_bytes=32 * 1024 * 1024),
    )(xph, *packed)
    return out[..., :cout]                           # (n, ho, wo, cout), NHWC


# -------------------------- pure-JAX/XLA reference --------------------------- #

def _mish_ref(x):
    return x * jnp.tanh(jax.nn.softplus(x))


def _conv_bn_mish_ref(x_nhwc, w, scale, bias, stride, padding):
    y = jax.lax.conv_general_dilated(
        x_nhwc, jnp.transpose(w, (2, 3, 1, 0)),
        window_strides=(stride, stride),
        padding=[(padding, padding), (padding, padding)],
        dimension_numbers=("NHWC", "HWIO", "NHWC"),
        precision=jax.lax.Precision.HIGHEST)
    return _mish_ref(y * scale + bias)


def down_sample_ref(x_nhwc, params):
    (w, s, b), res = params
    y = _conv_bn_mish_ref(x_nhwc, w, s, b, 2, 1)
    for (w1, s1, b1), (w2, s2, b2) in res:
        h = _conv_bn_mish_ref(y, w1, s1, b1, 1, 0)
        y = y + _conv_bn_mish_ref(h, w2, s2, b2, 1, 1)
    return y


# --------------------------- deterministic params ---------------------------- #

def _init_conv_bn(key, cin, cout, k):
    kw_, kg, kb, km, kv = jax.random.split(key, 5)
    fan_in = cin * k * k
    w = jax.random.normal(kw_, (cout, cin, k, k), jnp.float32) / jnp.sqrt(jnp.float32(fan_in))
    gamma = 1.0 + 0.1 * jax.random.normal(kg, (cout,), jnp.float32)
    beta = 0.05 * jax.random.normal(kb, (cout,), jnp.float32)
    running_mean = 0.1 * jax.random.normal(km, (cout,), jnp.float32)
    running_var = 0.5 + 0.5 * jnp.abs(jax.random.normal(kv, (cout,), jnp.float32))
    scale = gamma / jnp.sqrt(running_var + 1e-5)     # eval-mode BN folded
    bias = beta - running_mean * scale
    return w, scale, bias


def init_down_sample_layer(key, in_channels, out_channels, count):
    keys = jax.random.split(key, 1 + 2 * count)
    ds = _init_conv_bn(keys[0], in_channels, out_channels, 3)
    res = []
    for i in range(count):
        p1 = _init_conv_bn(keys[1 + 2 * i], out_channels, out_channels // 2, 1)
        p2 = _init_conv_bn(keys[2 + 2 * i], out_channels // 2, out_channels, 3)
        res.append((p1, p2))
    return ds, res


# ----------------------------------- main ------------------------------------ #

if __name__ == "__main__":
    key = jax.random.PRNGKey(0)
    k_x, k_p = jax.random.split(key)

    # Module config: DownSampleLayer(in_channels=4, out_channels=8, count=2)
    N, CIN, COUT, H, W, COUNT = 2, 4, 8, 16, 16, 2

    x_nchw = jax.random.normal(k_x, (N, CIN, H, W), jnp.float32)   # PyTorch layout
    x_nhwc = jnp.transpose(x_nchw, (0, 2, 3, 1))                   # kernel layout
    params = init_down_sample_layer(k_p, CIN, COUT, COUNT)

    y_nhwc = jax.jit(down_sample_layer)(x_nhwc, params)
    jax.block_until_ready(y_nhwc)

    # correctness vs an XLA f32 reference of the same eval-mode module
    # (bf16 MXU operands + approx reciprocal in Mish -> 5e-2 tolerance)
    y_ref = down_sample_ref(x_nhwc, params)
    err = float(jnp.max(jnp.abs(y_nhwc - y_ref)))
    assert err < 5e-2, f"max abs error {err}"

    y_nchw = jnp.transpose(y_nhwc, (0, 3, 1, 2))                   # back to PyTorch layout
    assert y_nchw.shape == (N, COUT, H // 2, W // 2), y_nchw.shape
    print("KERNEL_OK")
</pallas_src>

<mosaic_0001>
module attributes {stable_mosaic.version = 11 : i64} {
  func.func @_down_sample_kernel(%arg0: i32, %arg1: memref<2x4x9x9x8xf32, #tpu.memory_space<vmem>>, %arg2: memref<128x128xbf16, #tpu.memory_space<vmem>>, %arg3: memref<1x128xf32, #tpu.memory_space<vmem>>, %arg4: memref<1x128xf32, #tpu.memory_space<vmem>>, %arg5: memref<2x128x128xbf16, #tpu.memory_space<vmem>>, %arg6: memref<2x1x128xf32, #tpu.memory_space<vmem>>, %arg7: memref<2x1x128xf32, #tpu.memory_space<vmem>>, %arg8: memref<2x1152x128xbf16, #tpu.memory_space<vmem>>, %arg9: memref<2x1x128xf32, #tpu.memory_space<vmem>>, %arg10: memref<2x1x128xf32, #tpu.memory_space<vmem>>, %arg11: memref<2x8x8x128xf32, #tpu.memory_space<vmem>>, %arg12: memref<2x64x128xf32, #tpu.memory_space<vmem>>, %arg13: memref<2x10x10x128xf32, #tpu.memory_space<vmem>>) attributes {dimension_semantics = [#tpu.dimension_semantics<parallel>], iteration_bounds = array<i64: 1>, scalar_prefetch = 0 : i64, scratch_operands = 2 : i64, tpu.core_type = #tpu.core_type<tc>, window_params = [{transform_indices = @transform_0, window_bounds = array<i64: 2, 4, 9, 9, 8>}, {pipeline_mode = #tpu.pipeline_mode<synchronous>, transform_indices = @transform_1, window_bounds = array<i64: 128, 128>}, {pipeline_mode = #tpu.pipeline_mode<synchronous>, transform_indices = @transform_2, window_bounds = array<i64: 1, 128>}, {pipeline_mode = #tpu.pipeline_mode<synchronous>, transform_indices = @transform_3, window_bounds = array<i64: 1, 128>}, {pipeline_mode = #tpu.pipeline_mode<synchronous>, transform_indices = @transform_4, window_bounds = array<i64: 2, 128, 128>}, {pipeline_mode = #tpu.pipeline_mode<synchronous>, transform_indices = @transform_5, window_bounds = array<i64: 2, 1, 128>}, {pipeline_mode = #tpu.pipeline_mode<synchronous>, transform_indices = @transform_6, window_bounds = array<i64: 2, 1, 128>}, {pipeline_mode = #tpu.pipeline_mode<synchronous>, transform_indices = @transform_7, window_bounds = array<i64: 2, 1152, 128>}, {pipeline_mode = #tpu.pipeline_mode<synchronous>, transform_indices = @transform_8, window_bounds = array<i64: 2, 1, 128>}, {pipeline_mode = #tpu.pipeline_mode<synchronous>, transform_indices = @transform_9, window_bounds = array<i64: 2, 1, 128>}, {transform_indices = @transform_10, window_bounds = array<i64: 2, 8, 8, 128>}]} {
    %cst = arith.constant 0.000000e+00 : f32
    %0 = vector.broadcast %cst : f32 to vector<2x64x56xf32>
    %c0 = arith.constant 0 : index
    %c0_0 = arith.constant 0 : index
    %c72 = arith.constant 72 : index
    %1 = vector.load %arg12[%c0, %c0_0, %c72] : memref<2x64x128xf32, #tpu.memory_space<vmem>>, vector<2x64x56xf32>
    tpu.vector_store %arg12[%c0, %c0_0, %c72], %0 {strides = array<i32>} : memref<2x64x128xf32, #tpu.memory_space<vmem>>, vector<2x64x56xf32>,
    %c0_1 = arith.constant 0 : index
    %c0_2 = arith.constant 0 : index
    %c0_3 = arith.constant 0 : index
    %c0_4 = arith.constant 0 : index
    %c0_5 = arith.constant 0 : index
    %2 = vector.load %arg1[%c0_1, %c0_2, %c0_3, %c0_4, %c0_5] : memref<2x4x9x9x8xf32, #tpu.memory_space<vmem>>, vector<1x4x9x9x8xf32>
    %3 = vector.shape_cast %2 : vector<1x4x9x9x8xf32> to vector<4x9x9x8xf32>
    %4 = vector.extract_strided_slice %3 {offsets = [0, 0, 0, 0], sizes = [1, 8, 8, 8], strides = [1, 1, 1, 1]} : vector<4x9x9x8xf32> to vector<1x8x8x8xf32>
    %5 = vector.shape_cast %4 : vector<1x8x8x8xf32> to vector<8x8x8xf32>
    %6 = vector.shape_cast %5 : vector<8x8x8xf32> to vector<64x8xf32>
    %c0_6 = arith.constant 0 : index
    %c0_7 = arith.constant 0 : index
    %c0_8 = arith.constant 0 : index
    %7 = vector.load %arg12[%c0_6, %c0_7, %c0_8] : memref<2x64x128xf32, #tpu.memory_space<vmem>>, vector<1x64x8xf32>
    %8 = vector.shape_cast %7 : vector<1x64x8xf32> to vector<64x8xf32>
    %9 = vector.shape_cast %6 : vector<64x8xf32> to vector<1x64x8xf32>
    tpu.vector_store %arg12[%c0_6, %c0_7, %c0_8], %9 {strides = array<i32>} : memref<2x64x128xf32, #tpu.memory_space<vmem>>, vector<1x64x8xf32>,
    %10 = vector.extract_strided_slice %3 {offsets = [1, 0, 0, 0], sizes = [1, 8, 8, 8], strides = [1, 1, 1, 1]} : vector<4x9x9x8xf32> to vector<1x8x8x8xf32>
    %11 = vector.shape_cast %10 : vector<1x8x8x8xf32> to vector<8x8x8xf32>
    %12 = vector.shape_cast %11 : vector<8x8x8xf32> to vector<64x8xf32>
    %c0_9 = arith.constant 0 : index
    %c0_10 = arith.constant 0 : index
    %c8 = arith.constant 8 : index
    %13 = vector.load %arg12[%c0_9, %c0_10, %c8] : memref<2x64x128xf32, #tpu.memory_space<vmem>>, vector<1x64x8xf32>
    %14 = vector.shape_cast %13 : vector<1x64x8xf32> to vector<64x8xf32>
    %15 = vector.shape_cast %12 : vector<64x8xf32> to vector<1x64x8xf32>
    tpu.vector_store %arg12[%c0_9, %c0_10, %c8], %15 {strides = array<i32>} : memref<2x64x128xf32, #tpu.memory_space<vmem>>, vector<1x64x8xf32>,
    %16 = vector.extract_strided_slice %3 {offsets = [0, 0, 1, 0], sizes = [1, 8, 8, 8], strides = [1, 1, 1, 1]} : vector<4x9x9x8xf32> to vector<1x8x8x8xf32>
    %17 = vector.shape_cast %16 : vector<1x8x8x8xf32> to vector<8x8x8xf32>
    %18 = vector.shape_cast %17 : vector<8x8x8xf32> to vector<64x8xf32>
    %c0_11 = arith.constant 0 : index
    %c0_12 = arith.constant 0 : index
    %c16 = arith.constant 16 : index
    %19 = vector.load %arg12[%c0_11, %c0_12, %c16] : memref<2x64x128xf32, #tpu.memory_space<vmem>>, vector<1x64x8xf32>
    %20 = vector.shape_cast %19 : vector<1x64x8xf32> to vector<64x8xf32>
    %21 = vector.shape_cast %18 : vector<64x8xf32> to vector<1x64x8xf32>
    tpu.vector_store %arg12[%c0_11, %c0_12, %c16], %21 {strides = array<i32>} : memref<2x64x128xf32, #tpu.memory_space<vmem>>, vector<1x64x8xf32>,
    %22 = vector.extract_strided_slice %3 {offsets = [2, 0, 0, 0], sizes = [1, 8, 8, 8], strides = [1, 1, 1, 1]} : vector<4x9x9x8xf32> to vector<1x8x8x8xf32>
    %23 = vector.shape_cast %22 : vector<1x8x8x8xf32> to vector<8x8x8xf32>
    %24 = vector.shape_cast %23 : vector<8x8x8xf32> to vector<64x8xf32>
    %c0_13 = arith.constant 0 : index
    %c0_14 = arith.constant 0 : index
    %c24 = arith.constant 24 : index
    %25 = vector.load %arg12[%c0_13, %c0_14, %c24] : memref<2x64x128xf32, #tpu.memory_space<vmem>>, vector<1x64x8xf32>
    %26 = vector.shape_cast %25 : vector<1x64x8xf32> to vector<64x8xf32>
    %27 = vector.shape_cast %24 : vector<64x8xf32> to vector<1x64x8xf32>
    tpu.vector_store %arg12[%c0_13, %c0_14, %c24], %27 {strides = array<i32>} : memref<2x64x128xf32, #tpu.memory_space<vmem>>, vector<1x64x8xf32>,
    %28 = vector.extract_strided_slice %3 {offsets = [3, 0, 0, 0], sizes = [1, 8, 8, 8], strides = [1, 1, 1, 1]} : vector<4x9x9x8xf32> to vector<1x8x8x8xf32>
    %29 = vector.shape_cast %28 : vector<1x8x8x8xf32> to vector<8x8x8xf32>
    %30 = vector.shape_cast %29 : vector<8x8x8xf32> to vector<64x8xf32>
    %c0_15 = arith.constant 0 : index
    %c0_16 = arith.constant 0 : index
    %c32 = arith.constant 32 : index
    %31 = vector.load %arg12[%c0_15, %c0_16, %c32] : memref<2x64x128xf32, #tpu.memory_space<vmem>>, vector<1x64x8xf32>
    %32 = vector.shape_cast %31 : vector<1x64x8xf32> to vector<64x8xf32>
    %33 = vector.shape_cast %30 : vector<64x8xf32> to vector<1x64x8xf32>
    tpu.vector_store %arg12[%c0_15, %c0_16, %c32], %33 {strides = array<i32>} : memref<2x64x128xf32, #tpu.memory_space<vmem>>, vector<1x64x8xf32>,
    %34 = vector.extract_strided_slice %3 {offsets = [2, 0, 1, 0], sizes = [1, 8, 8, 8], strides = [1, 1, 1, 1]} : vector<4x9x9x8xf32> to vector<1x8x8x8xf32>
    %35 = vector.shape_cast %34 : vector<1x8x8x8xf32> to vector<8x8x8xf32>
    %36 = vector.shape_cast %35 : vector<8x8x8xf32> to vector<64x8xf32>
    %c0_17 = arith.constant 0 : index
    %c0_18 = arith.constant 0 : index
    %c40 = arith.constant 40 : index
    %37 = vector.load %arg12[%c0_17, %c0_18, %c40] : memref<2x64x128xf32, #tpu.memory_space<vmem>>, vector<1x64x8xf32>
    %38 = vector.shape_cast %37 : vector<1x64x8xf32> to vector<64x8xf32>
    %39 = vector.shape_cast %36 : vector<64x8xf32> to vector<1x64x8xf32>
    tpu.vector_store %arg12[%c0_17, %c0_18, %c40], %39 {strides = array<i32>} : memref<2x64x128xf32, #tpu.memory_space<vmem>>, vector<1x64x8xf32>,
    %40 = vector.extract_strided_slice %3 {offsets = [0, 1, 0, 0], sizes = [1, 8, 8, 8], strides = [1, 1, 1, 1]} : vector<4x9x9x8xf32> to vector<1x8x8x8xf32>
    %41 = vector.shape_cast %40 : vector<1x8x8x8xf32> to vector<8x8x8xf32>
    %42 = vector.shape_cast %41 : vector<8x8x8xf32> to vector<64x8xf32>
    %c0_19 = arith.constant 0 : index
    %c0_20 = arith.constant 0 : index
    %c48 = arith.constant 48 : index
    %43 = vector.load %arg12[%c0_19, %c0_20, %c48] : memref<2x64x128xf32, #tpu.memory_space<vmem>>, vector<1x64x8xf32>
    %44 = vector.shape_cast %43 : vector<1x64x8xf32> to vector<64x8xf32>
    %45 = vector.shape_cast %42 : vector<64x8xf32> to vector<1x64x8xf32>
    tpu.vector_store %arg12[%c0_19, %c0_20, %c48], %45 {strides = array<i32>} : memref<2x64x128xf32, #tpu.memory_space<vmem>>, vector<1x64x8xf32>,
    %46 = vector.extract_strided_slice %3 {offsets = [1, 1, 0, 0], sizes = [1, 8, 8, 8], strides = [1, 1, 1, 1]} : vector<4x9x9x8xf32> to vector<1x8x8x8xf32>
    %47 = vector.shape_cast %46 : vector<1x8x8x8xf32> to vector<8x8x8xf32>
    %48 = vector.shape_cast %47 : vector<8x8x8xf32> to vector<64x8xf32>
    %c0_21 = arith.constant 0 : index
    %c0_22 = arith.constant 0 : index
    %c56 = arith.constant 56 : index
    %49 = vector.load %arg12[%c0_21, %c0_22, %c56] : memref<2x64x128xf32, #tpu.memory_space<vmem>>, vector<1x64x8xf32>
    %50 = vector.shape_cast %49 : vector<1x64x8xf32> to vector<64x8xf32>
    %51 = vector.shape_cast %48 : vector<64x8xf32> to vector<1x64x8xf32>
    tpu.vector_store %arg12[%c0_21, %c0_22, %c56], %51 {strides = array<i32>} : memref<2x64x128xf32, #tpu.memory_space<vmem>>, vector<1x64x8xf32>,
    %52 = vector.extract_strided_slice %3 {offsets = [0, 1, 1, 0], sizes = [1, 8, 8, 8], strides = [1, 1, 1, 1]} : vector<4x9x9x8xf32> to vector<1x8x8x8xf32>
    %53 = vector.shape_cast %52 : vector<1x8x8x8xf32> to vector<8x8x8xf32>
    %54 = vector.shape_cast %53 : vector<8x8x8xf32> to vector<64x8xf32>
    %c0_23 = arith.constant 0 : index
    %c0_24 = arith.constant 0 : index
    %c64 = arith.constant 64 : index
    %55 = vector.load %arg12[%c0_23, %c0_24, %c64] : memref<2x64x128xf32, #tpu.memory_space<vmem>>, vector<1x64x8xf32>
    %56 = vector.shape_cast %55 : vector<1x64x8xf32> to vector<64x8xf32>
    %57 = vector.shape_cast %54 : vector<64x8xf32> to vector<1x64x8xf32>
    tpu.vector_store %arg12[%c0_23, %c0_24, %c64], %57 {strides = array<i32>} : memref<2x64x128xf32, #tpu.memory_space<vmem>>, vector<1x64x8xf32>,
    %c1 = arith.constant 1 : index
    %c0_25 = arith.constant 0 : index
    %c0_26 = arith.constant 0 : index
    %c0_27 = arith.constant 0 : index
    %c0_28 = arith.constant 0 : index
    %58 = vector.load %arg1[%c1, %c0_25, %c0_26, %c0_27, %c0_28] : memref<2x4x9x9x8xf32, #tpu.memory_space<vmem>>, vector<1x4x9x9x8xf32>
    %59 = vector.shape_cast %58 : vector<1x4x9x9x8xf32> to vector<4x9x9x8xf32>
    %60 = vector.extract_strided_slice %59 {offsets = [0, 0, 0, 0], sizes = [1, 8, 8, 8], strides = [1, 1, 1, 1]} : vector<4x9x9x8xf32> to vector<1x8x8x8xf32>
    %61 = vector.shape_cast %60 : vector<1x8x8x8xf32> to vector<8x8x8xf32>
    %62 = vector.shape_cast %61 : vector<8x8x8xf32> to vector<64x8xf32>
    %c1_29 = arith.constant 1 : index
    %c0_30 = arith.constant 0 : index
    %c0_31 = arith.constant 0 : index
    %63 = vector.load %arg12[%c1_29, %c0_30, %c0_31] : memref<2x64x128xf32, #tpu.memory_space<vmem>>, vector<1x64x8xf32>
    %64 = vector.shape_cast %63 : vector<1x64x8xf32> to vector<64x8xf32>
    %65 = vector.shape_cast %62 : vector<64x8xf32> to vector<1x64x8xf32>
    tpu.vector_store %arg12[%c1_29, %c0_30, %c0_31], %65 {strides = array<i32>} : memref<2x64x128xf32, #tpu.memory_space<vmem>>, vector<1x64x8xf32>,
    %66 = vector.extract_strided_slice %59 {offsets = [1, 0, 0, 0], sizes = [1, 8, 8, 8], strides = [1, 1, 1, 1]} : vector<4x9x9x8xf32> to vector<1x8x8x8xf32>
    %67 = vector.shape_cast %66 : vector<1x8x8x8xf32> to vector<8x8x8xf32>
    %68 = vector.shape_cast %67 : vector<8x8x8xf32> to vector<64x8xf32>
    %c1_32 = arith.constant 1 : index
    %c0_33 = arith.constant 0 : index
    %c8_34 = arith.constant 8 : index
    %69 = vector.load %arg12[%c1_32, %c0_33, %c8_34] : memref<2x64x128xf32, #tpu.memory_space<vmem>>, vector<1x64x8xf32>
    %70 = vector.shape_cast %69 : vector<1x64x8xf32> to vector<64x8xf32>
    %71 = vector.shape_cast %68 : vector<64x8xf32> to vector<1x64x8xf32>
    tpu.vector_store %arg12[%c1_32, %c0_33, %c8_34], %71 {strides = array<i32>} : memref<2x64x128xf32, #tpu.memory_space<vmem>>, vector<1x64x8xf32>,
    %72 = vector.extract_strided_slice %59 {offsets = [0, 0, 1, 0], sizes = [1, 8, 8, 8], strides = [1, 1, 1, 1]} : vector<4x9x9x8xf32> to vector<1x8x8x8xf32>
    %73 = vector.shape_cast %72 : vector<1x8x8x8xf32> to vector<8x8x8xf32>
    %74 = vector.shape_cast %73 : vector<8x8x8xf32> to vector<64x8xf32>
    %c1_35 = arith.constant 1 : index
    %c0_36 = arith.constant 0 : index
    %c16_37 = arith.constant 16 : index
    %75 = vector.load %arg12[%c1_35, %c0_36, %c16_37] : memref<2x64x128xf32, #tpu.memory_space<vmem>>, vector<1x64x8xf32>
    %76 = vector.shape_cast %75 : vector<1x64x8xf32> to vector<64x8xf32>
    %77 = vector.shape_cast %74 : vector<64x8xf32> to vector<1x64x8xf32>
    tpu.vector_store %arg12[%c1_35, %c0_36, %c16_37], %77 {strides = array<i32>} : memref<2x64x128xf32, #tpu.memory_space<vmem>>, vector<1x64x8xf32>,
    %78 = vector.extract_strided_slice %59 {offsets = [2, 0, 0, 0], sizes = [1, 8, 8, 8], strides = [1, 1, 1, 1]} : vector<4x9x9x8xf32> to vector<1x8x8x8xf32>
    %79 = vector.shape_cast %78 : vector<1x8x8x8xf32> to vector<8x8x8xf32>
    %80 = vector.shape_cast %79 : vector<8x8x8xf32> to vector<64x8xf32>
    %c1_38 = arith.constant 1 : index
    %c0_39 = arith.constant 0 : index
    %c24_40 = arith.constant 24 : index
    %81 = vector.load %arg12[%c1_38, %c0_39, %c24_40] : memref<2x64x128xf32, #tpu.memory_space<vmem>>, vector<1x64x8xf32>
    %82 = vector.shape_cast %81 : vector<1x64x8xf32> to vector<64x8xf32>
    %83 = vector.shape_cast %80 : vector<64x8xf32> to vector<1x64x8xf32>
    tpu.vector_store %arg12[%c1_38, %c0_39, %c24_40], %83 {strides = array<i32>} : memref<2x64x128xf32, #tpu.memory_space<vmem>>, vector<1x64x8xf32>,
    %84 = vector.extract_strided_slice %59 {offsets = [3, 0, 0, 0], sizes = [1, 8, 8, 8], strides = [1, 1, 1, 1]} : vector<4x9x9x8xf32> to vector<1x8x8x8xf32>
    %85 = vector.shape_cast %84 : vector<1x8x8x8xf32> to vector<8x8x8xf32>
    %86 = vector.shape_cast %85 : vector<8x8x8xf32> to vector<64x8xf32>
    %c1_41 = arith.constant 1 : index
    %c0_42 = arith.constant 0 : index
    %c32_43 = arith.constant 32 : index
    %87 = vector.load %arg12[%c1_41, %c0_42, %c32_43] : memref<2x64x128xf32, #tpu.memory_space<vmem>>, vector<1x64x8xf32>
    %88 = vector.shape_cast %87 : vector<1x64x8xf32> to vector<64x8xf32>
    %89 = vector.shape_cast %86 : vector<64x8xf32> to vector<1x64x8xf32>
    tpu.vector_store %arg12[%c1_41, %c0_42, %c32_43], %89 {strides = array<i32>} : memref<2x64x128xf32, #tpu.memory_space<vmem>>, vector<1x64x8xf32>,
    %90 = vector.extract_strided_slice %59 {offsets = [2, 0, 1, 0], sizes = [1, 8, 8, 8], strides = [1, 1, 1, 1]} : vector<4x9x9x8xf32> to vector<1x8x8x8xf32>
    %91 = vector.shape_cast %90 : vector<1x8x8x8xf32> to vector<8x8x8xf32>
    %92 = vector.shape_cast %91 : vector<8x8x8xf32> to vector<64x8xf32>
    %c1_44 = arith.constant 1 : index
    %c0_45 = arith.constant 0 : index
    %c40_46 = arith.constant 40 : index
    %93 = vector.load %arg12[%c1_44, %c0_45, %c40_46] : memref<2x64x128xf32, #tpu.memory_space<vmem>>, vector<1x64x8xf32>
    %94 = vector.shape_cast %93 : vector<1x64x8xf32> to vector<64x8xf32>
    %95 = vector.shape_cast %92 : vector<64x8xf32> to vector<1x64x8xf32>
    tpu.vector_store %arg12[%c1_44, %c0_45, %c40_46], %95 {strides = array<i32>} : memref<2x64x128xf32, #tpu.memory_space<vmem>>, vector<1x64x8xf32>,
    %96 = vector.extract_strided_slice %59 {offsets = [0, 1, 0, 0], sizes = [1, 8, 8, 8], strides = [1, 1, 1, 1]} : vector<4x9x9x8xf32> to vector<1x8x8x8xf32>
    %97 = vector.shape_cast %96 : vector<1x8x8x8xf32> to vector<8x8x8xf32>
    %98 = vector.shape_cast %97 : vector<8x8x8xf32> to vector<64x8xf32>
    %c1_47 = arith.constant 1 : index
    %c0_48 = arith.constant 0 : index
    %c48_49 = arith.constant 48 : index
    %99 = vector.load %arg12[%c1_47, %c0_48, %c48_49] : memref<2x64x128xf32, #tpu.memory_space<vmem>>, vector<1x64x8xf32>
    %100 = vector.shape_cast %99 : vector<1x64x8xf32> to vector<64x8xf32>
    %101 = vector.shape_cast %98 : vector<64x8xf32> to vector<1x64x8xf32>
    tpu.vector_store %arg12[%c1_47, %c0_48, %c48_49], %101 {strides = array<i32>} : memref<2x64x128xf32, #tpu.memory_space<vmem>>, vector<1x64x8xf32>,
    %102 = vector.extract_strided_slice %59 {offsets = [1, 1, 0, 0], sizes = [1, 8, 8, 8], strides = [1, 1, 1, 1]} : vector<4x9x9x8xf32> to vector<1x8x8x8xf32>
    %103 = vector.shape_cast %102 : vector<1x8x8x8xf32> to vector<8x8x8xf32>
    %104 = vector.shape_cast %103 : vector<8x8x8xf32> to vector<64x8xf32>
    %c1_50 = arith.constant 1 : index
    %c0_51 = arith.constant 0 : index
    %c56_52 = arith.constant 56 : index
    %105 = vector.load %arg12[%c1_50, %c0_51, %c56_52] : memref<2x64x128xf32, #tpu.memory_space<vmem>>, vector<1x64x8xf32>
    %106 = vector.shape_cast %105 : vector<1x64x8xf32> to vector<64x8xf32>
    %107 = vector.shape_cast %104 : vector<64x8xf32> to vector<1x64x8xf32>
    tpu.vector_store %arg12[%c1_50, %c0_51, %c56_52], %107 {strides = array<i32>} : memref<2x64x128xf32, #tpu.memory_space<vmem>>, vector<1x64x8xf32>,
    %108 = vector.extract_strided_slice %59 {offsets = [0, 1, 1, 0], sizes = [1, 8, 8, 8], strides = [1, 1, 1, 1]} : vector<4x9x9x8xf32> to vector<1x8x8x8xf32>
    %109 = vector.shape_cast %108 : vector<1x8x8x8xf32> to vector<8x8x8xf32>
    %110 = vector.shape_cast %109 : vector<8x8x8xf32> to vector<64x8xf32>
    %c1_53 = arith.constant 1 : index
    %c0_54 = arith.constant 0 : index
    %c64_55 = arith.constant 64 : index
    %111 = vector.load %arg12[%c1_53, %c0_54, %c64_55] : memref<2x64x128xf32, #tpu.memory_space<vmem>>, vector<1x64x8xf32>
    %112 = vector.shape_cast %111 : vector<1x64x8xf32> to vector<64x8xf32>
    %113 = vector.shape_cast %110 : vector<64x8xf32> to vector<1x64x8xf32>
    tpu.vector_store %arg12[%c1_53, %c0_54, %c64_55], %113 {strides = array<i32>} : memref<2x64x128xf32, #tpu.memory_space<vmem>>, vector<1x64x8xf32>,
    %c0_56 = arith.constant 0 : index
    %c0_57 = arith.constant 0 : index
    %c0_58 = arith.constant 0 : index
    %114 = vector.load %arg12[%c0_56, %c0_57, %c0_58] : memref<2x64x128xf32, #tpu.memory_space<vmem>>, vector<2x64x128xf32>
    %115 = vector.shape_cast %114 : vector<2x64x128xf32> to vector<128x128xf32>
    %116 = arith.truncf %115 : vector<128x128xf32> to vector<128x128xbf16>
    %c0_59 = arith.constant 0 : index
    %c0_60 = arith.constant 0 : index
    %117 = vector.load %arg2[%c0_59, %c0_60] : memref<128x128xbf16, #tpu.memory_space<vmem>>, vector<128x128xbf16>
    %cst_61 = arith.constant dense<0.000000e+00> : vector<128x128xf32>
    %118 = tpu.matmul %116, %117, %cst_61 {dimension_numbers = #tpu.dot_dimension_numbers<[1], [0], [0], [1], [0, 0, 1, 1], [], []>} : vector<128x128xbf16>, vector<128x128xbf16>, vector<128x128xf32> -> vector<128x128xf32>
    %c0_62 = arith.constant 0 : index
    %c0_63 = arith.constant 0 : index
    %119 = vector.load %arg3[%c0_62, %c0_63] : memref<1x128xf32, #tpu.memory_space<vmem>>, vector<1x128xf32>
    %120 = vector.broadcast %119 : vector<1x128xf32> to vector<128x128xf32>
    %121 = arith.mulf %118, %120 : vector<128x128xf32>
    %c0_64 = arith.constant 0 : index
    %c0_65 = arith.constant 0 : index
    %122 = vector.load %arg4[%c0_64, %c0_65] : memref<1x128xf32, #tpu.memory_space<vmem>>, vector<1x128xf32>
    %123 = vector.broadcast %122 : vector<1x128xf32> to vector<128x128xf32>
    %124 = arith.addf %121, %123 : vector<128x128xf32>
    %cst_66 = arith.constant 2.000000e+01 : f32
    %125 = vector.broadcast %cst_66 : f32 to vector<128x128xf32>
    %126 = arith.minimumf %124, %125 : vector<128x128xf32>
    %127 = math.exp %126 : vector<128x128xf32>
    %cst_67 = arith.constant 2.000000e+00 : f32
    %128 = vector.broadcast %cst_67 : f32 to vector<128x128xf32>
    %129 = arith.addf %127, %128 : vector<128x128xf32>
    %130 = arith.mulf %127, %129 : vector<128x128xf32>
    %131 = arith.mulf %124, %130 : vector<128x128xf32>
    %cst_68 = arith.constant 2.000000e+00 : f32
    %132 = vector.broadcast %cst_68 : f32 to vector<128x128xf32>
    %133 = arith.addf %130, %132 : vector<128x128xf32>
    %134 = tpu.reciprocal %133 {approx = true} : vector<128x128xf32> -> vector<128x128xf32>
    %135 = arith.mulf %131, %134 : vector<128x128xf32>
    %cst_69 = arith.constant 0.000000e+00 : f32
    %136 = vector.broadcast %cst_69 : f32 to vector<2x10x10x128xf32>
    %c0_70 = arith.constant 0 : index
    %c0_71 = arith.constant 0 : index
    %c0_72 = arith.constant 0 : index
    %c0_73 = arith.constant 0 : index
    %137 = vector.load %arg13[%c0_70, %c0_71, %c0_72, %c0_73] : memref<2x10x10x128xf32, #tpu.memory_space<vmem>>, vector<2x10x10x128xf32>
    tpu.vector_store %arg13[%c0_70, %c0_71, %c0_72, %c0_73], %136 {strides = array<i32>} : memref<2x10x10x128xf32, #tpu.memory_space<vmem>>, vector<2x10x10x128xf32>,
    %138 = arith.truncf %135 : vector<128x128xf32> to vector<128x128xbf16>
    %c0_74 = arith.constant 0 : index
    %c0_75 = arith.constant 0 : index
    %c0_76 = arith.constant 0 : index
    %139 = vector.load %arg5[%c0_74, %c0_75, %c0_76] : memref<2x128x128xbf16, #tpu.memory_space<vmem>>, vector<1x128x128xbf16>
    %140 = vector.shape_cast %139 : vector<1x128x128xbf16> to vector<128x128xbf16>
    %cst_77 = arith.constant dense<0.000000e+00> : vector<128x128xf32>
    %141 = tpu.matmul %138, %140, %cst_77 {dimension_numbers = #tpu.dot_dimension_numbers<[1], [0], [0], [1], [0, 0, 1, 1], [], []>} : vector<128x128xbf16>, vector<128x128xbf16>, vector<128x128xf32> -> vector<128x128xf32>
    %c0_78 = arith.constant 0 : index
    %c0_79 = arith.constant 0 : index
    %c0_80 = arith.constant 0 : index
    %142 = vector.load %arg6[%c0_78, %c0_79, %c0_80] : memref<2x1x128xf32, #tpu.memory_space<vmem>>, vector<1x1x128xf32>
    %143 = vector.shape_cast %142 : vector<1x1x128xf32> to vector<1x128xf32>
    %144 = vector.broadcast %143 : vector<1x128xf32> to vector<128x128xf32>
    %145 = arith.mulf %141, %144 : vector<128x128xf32>
    %c0_81 = arith.constant 0 : index
    %c0_82 = arith.constant 0 : index
    %c0_83 = arith.constant 0 : index
    %146 = vector.load %arg7[%c0_81, %c0_82, %c0_83] : memref<2x1x128xf32, #tpu.memory_space<vmem>>, vector<1x1x128xf32>
    %147 = vector.shape_cast %146 : vector<1x1x128xf32> to vector<1x128xf32>
    %148 = vector.broadcast %147 : vector<1x128xf32> to vector<128x128xf32>
    %149 = arith.addf %145, %148 : vector<128x128xf32>
    %cst_84 = arith.constant 2.000000e+01 : f32
    %150 = vector.broadcast %cst_84 : f32 to vector<128x128xf32>
    %151 = arith.minimumf %149, %150 : vector<128x128xf32>
    %152 = math.exp %151 : vector<128x128xf32>
    %cst_85 = arith.constant 2.000000e+00 : f32
    %153 = vector.broadcast %cst_85 : f32 to vector<128x128xf32>
    %154 = arith.addf %152, %153 : vector<128x128xf32>
    %155 = arith.mulf %152, %154 : vector<128x128xf32>
    %156 = arith.mulf %149, %155 : vector<128x128xf32>
    %cst_86 = arith.constant 2.000000e+00 : f32
    %157 = vector.broadcast %cst_86 : f32 to vector<128x128xf32>
    %158 = arith.addf %155, %157 : vector<128x128xf32>
    %159 = tpu.reciprocal %158 {approx = true} : vector<128x128xf32> -> vector<128x128xf32>
    %160 = arith.mulf %156, %159 : vector<128x128xf32>
    %161 = vector.shape_cast %160 : vector<128x128xf32> to vector<2x8x8x128xf32>
    %c0_87 = arith.constant 0 : index
    %c1_88 = arith.constant 1 : index
    %c1_89 = arith.constant 1 : index
    %c0_90 = arith.constant 0 : index
    %162 = vector.load %arg13[%c0_87, %c1_88, %c1_89, %c0_90] : memref<2x10x10x128xf32, #tpu.memory_space<vmem>>, vector<2x8x8x128xf32>
    tpu.vector_store %arg13[%c0_87, %c1_88, %c1_89, %c0_90], %161 {strides = array<i32>} : memref<2x10x10x128xf32, #tpu.memory_space<vmem>>, vector<2x8x8x128xf32>,
    %c0_91 = arith.constant 0 : index
    %c0_92 = arith.constant 0 : index
    %c0_93 = arith.constant 0 : index
    %c0_94 = arith.constant 0 : index
    %163 = vector.load %arg13[%c0_91, %c0_92, %c0_93, %c0_94] : memref<2x10x10x128xf32, #tpu.memory_space<vmem>>, vector<1x10x10x128xf32>
    %164 = vector.shape_cast %163 : vector<1x10x10x128xf32> to vector<10x10x128xf32>
    %165 = vector.extract_strided_slice %164 {offsets = [0, 0, 0], sizes = [8, 8, 128], strides = [1, 1, 1]} : vector<10x10x128xf32> to vector<8x8x128xf32>
    %166 = vector.shape_cast %165 : vector<8x8x128xf32> to vector<64x128xf32>
    %167 = vector.extract_strided_slice %164 {offsets = [0, 1, 0], sizes = [8, 8, 128], strides = [1, 1, 1]} : vector<10x10x128xf32> to vector<8x8x128xf32>
    %168 = vector.shape_cast %167 : vector<8x8x128xf32> to vector<64x128xf32>
    %169 = vector.extract_strided_slice %164 {offsets = [0, 2, 0], sizes = [8, 8, 128], strides = [1, 1, 1]} : vector<10x10x128xf32> to vector<8x8x128xf32>
    %170 = vector.shape_cast %169 : vector<8x8x128xf32> to vector<64x128xf32>
    %171 = vector.extract_strided_slice %164 {offsets = [1, 0, 0], sizes = [8, 8, 128], strides = [1, 1, 1]} : vector<10x10x128xf32> to vector<8x8x128xf32>
    %172 = vector.shape_cast %171 : vector<8x8x128xf32> to vector<64x128xf32>
    %173 = vector.extract_strided_slice %164 {offsets = [1, 1, 0], sizes = [8, 8, 128], strides = [1, 1, 1]} : vector<10x10x128xf32> to vector<8x8x128xf32>
    %174 = vector.shape_cast %173 : vector<8x8x128xf32> to vector<64x128xf32>
    %175 = vector.extract_strided_slice %164 {offsets = [1, 2, 0], sizes = [8, 8, 128], strides = [1, 1, 1]} : vector<10x10x128xf32> to vector<8x8x128xf32>
    %176 = vector.shape_cast %175 : vector<8x8x128xf32> to vector<64x128xf32>
    %177 = vector.extract_strided_slice %164 {offsets = [2, 0, 0], sizes = [8, 8, 128], strides = [1, 1, 1]} : vector<10x10x128xf32> to vector<8x8x128xf32>
    %178 = vector.shape_cast %177 : vector<8x8x128xf32> to vector<64x128xf32>
    %179 = vector.extract_strided_slice %164 {offsets = [2, 1, 0], sizes = [8, 8, 128], strides = [1, 1, 1]} : vector<10x10x128xf32> to vector<8x8x128xf32>
    %180 = vector.shape_cast %179 : vector<8x8x128xf32> to vector<64x128xf32>
    %181 = vector.extract_strided_slice %164 {offsets = [2, 2, 0], sizes = [8, 8, 128], strides = [1, 1, 1]} : vector<10x10x128xf32> to vector<8x8x128xf32>
    %182 = vector.shape_cast %181 : vector<8x8x128xf32> to vector<64x128xf32>
    %183 = tpu.concatenate %166, %168, %170, %172, %174, %176, %178, %180, %182 in 1 : vector<64x128xf32>, vector<64x128xf32>, vector<64x128xf32>, vector<64x128xf32>, vector<64x128xf32>, vector<64x128xf32>, vector<64x128xf32>, vector<64x128xf32>, vector<64x128xf32> -> vector<64x1152xf32>
    %184 = arith.truncf %183 : vector<64x1152xf32> to vector<64x1152xbf16>
    %c1_95 = arith.constant 1 : index
    %c0_96 = arith.constant 0 : index
    %c0_97 = arith.constant 0 : index
    %c0_98 = arith.constant 0 : index
    %185 = vector.load %arg13[%c1_95, %c0_96, %c0_97, %c0_98] : memref<2x10x10x128xf32, #tpu.memory_space<vmem>>, vector<1x10x10x128xf32>
    %186 = vector.shape_cast %185 : vector<1x10x10x128xf32> to vector<10x10x128xf32>
    %187 = vector.extract_strided_slice %186 {offsets = [0, 0, 0], sizes = [8, 8, 128], strides = [1, 1, 1]} : vector<10x10x128xf32> to vector<8x8x128xf32>
    %188 = vector.shape_cast %187 : vector<8x8x128xf32> to vector<64x128xf32>
    %189 = vector.extract_strided_slice %186 {offsets = [0, 1, 0], sizes = [8, 8, 128], strides = [1, 1, 1]} : vector<10x10x128xf32> to vector<8x8x128xf32>
    %190 = vector.shape_cast %189 : vector<8x8x128xf32> to vector<64x128xf32>
    %191 = vector.extract_strided_slice %186 {offsets = [0, 2, 0], sizes = [8, 8, 128], strides = [1, 1, 1]} : vector<10x10x128xf32> to vector<8x8x128xf32>
    %192 = vector.shape_cast %191 : vector<8x8x128xf32> to vector<64x128xf32>
    %193 = vector.extract_strided_slice %186 {offsets = [1, 0, 0], sizes = [8, 8, 128], strides = [1, 1, 1]} : vector<10x10x128xf32> to vector<8x8x128xf32>
    %194 = vector.shape_cast %193 : vector<8x8x128xf32> to vector<64x128xf32>
    %195 = vector.extract_strided_slice %186 {offsets = [1, 1, 0], sizes = [8, 8, 128], strides = [1, 1, 1]} : vector<10x10x128xf32> to vector<8x8x128xf32>
    %196 = vector.shape_cast %195 : vector<8x8x128xf32> to vector<64x128xf32>
    %197 = vector.extract_strided_slice %186 {offsets = [1, 2, 0], sizes = [8, 8, 128], strides = [1, 1, 1]} : vector<10x10x128xf32> to vector<8x8x128xf32>
    %198 = vector.shape_cast %197 : vector<8x8x128xf32> to vector<64x128xf32>
    %199 = vector.extract_strided_slice %186 {offsets = [2, 0, 0], sizes = [8, 8, 128], strides = [1, 1, 1]} : vector<10x10x128xf32> to vector<8x8x128xf32>
    %200 = vector.shape_cast %199 : vector<8x8x128xf32> to vector<64x128xf32>
    %201 = vector.extract_strided_slice %186 {offsets = [2, 1, 0], sizes = [8, 8, 128], strides = [1, 1, 1]} : vector<10x10x128xf32> to vector<8x8x128xf32>
    %202 = vector.shape_cast %201 : vector<8x8x128xf32> to vector<64x128xf32>
    %203 = vector.extract_strided_slice %186 {offsets = [2, 2, 0], sizes = [8, 8, 128], strides = [1, 1, 1]} : vector<10x10x128xf32> to vector<8x8x128xf32>
    %204 = vector.shape_cast %203 : vector<8x8x128xf32> to vector<64x128xf32>
    %205 = tpu.concatenate %188, %190, %192, %194, %196, %198, %200, %202, %204 in 1 : vector<64x128xf32>, vector<64x128xf32>, vector<64x128xf32>, vector<64x128xf32>, vector<64x128xf32>, vector<64x128xf32>, vector<64x128xf32>, vector<64x128xf32>, vector<64x128xf32> -> vector<64x1152xf32>
    %206 = arith.truncf %205 : vector<64x1152xf32> to vector<64x1152xbf16>
    %207 = tpu.concatenate %184, %206 in 0 : vector<64x1152xbf16>, vector<64x1152xbf16> -> vector<128x1152xbf16>
    %c0_99 = arith.constant 0 : index
    %c0_100 = arith.constant 0 : index
    %c0_101 = arith.constant 0 : index
    %208 = vector.load %arg8[%c0_99, %c0_100, %c0_101] : memref<2x1152x128xbf16, #tpu.memory_space<vmem>>, vector<1x1152x128xbf16>
    %209 = vector.shape_cast %208 : vector<1x1152x128xbf16> to vector<1152x128xbf16>
    %cst_102 = arith.constant dense<0.000000e+00> : vector<128x128xf32>
    %210 = tpu.matmul %207, %209, %cst_102 {dimension_numbers = #tpu.dot_dimension_numbers<[1], [0], [0], [1], [0, 0, 1, 1], [], []>} : vector<128x1152xbf16>, vector<1152x128xbf16>, vector<128x128xf32> -> vector<128x128xf32>
    %c0_103 = arith.constant 0 : index
    %c0_104 = arith.constant 0 : index
    %c0_105 = arith.constant 0 : index
    %211 = vector.load %arg9[%c0_103, %c0_104, %c0_105] : memref<2x1x128xf32, #tpu.memory_space<vmem>>, vector<1x1x128xf32>
    %212 = vector.shape_cast %211 : vector<1x1x128xf32> to vector<1x128xf32>
    %213 = vector.broadcast %212 : vector<1x128xf32> to vector<128x128xf32>
    %214 = arith.mulf %210, %213 : vector<128x128xf32>
    %c0_106 = arith.constant 0 : index
    %c0_107 = arith.constant 0 : index
    %c0_108 = arith.constant 0 : index
    %215 = vector.load %arg10[%c0_106, %c0_107, %c0_108] : memref<2x1x128xf32, #tpu.memory_space<vmem>>, vector<1x1x128xf32>
    %216 = vector.shape_cast %215 : vector<1x1x128xf32> to vector<1x128xf32>
    %217 = vector.broadcast %216 : vector<1x128xf32> to vector<128x128xf32>
    %218 = arith.addf %214, %217 : vector<128x128xf32>
    %cst_109 = arith.constant 2.000000e+01 : f32
    %219 = vector.broadcast %cst_109 : f32 to vector<128x128xf32>
    %220 = arith.minimumf %218, %219 : vector<128x128xf32>
    %221 = math.exp %220 : vector<128x128xf32>
    %cst_110 = arith.constant 2.000000e+00 : f32
    %222 = vector.broadcast %cst_110 : f32 to vector<128x128xf32>
    %223 = arith.addf %221, %222 : vector<128x128xf32>
    %224 = arith.mulf %221, %223 : vector<128x128xf32>
    %225 = arith.mulf %218, %224 : vector<128x128xf32>
    %cst_111 = arith.constant 2.000000e+00 : f32
    %226 = vector.broadcast %cst_111 : f32 to vector<128x128xf32>
    %227 = arith.addf %224, %226 : vector<128x128xf32>
    %228 = tpu.reciprocal %227 {approx = true} : vector<128x128xf32> -> vector<128x128xf32>
    %229 = arith.mulf %225, %228 : vector<128x128xf32>
    %230 = arith.addf %135, %229 : vector<128x128xf32>
    %231 = arith.truncf %230 : vector<128x128xf32> to vector<128x128xbf16>
    %c1_112 = arith.constant 1 : index
    %c0_113 = arith.constant 0 : index
    %c0_114 = arith.constant 0 : index
    %232 = vector.load %arg5[%c1_112, %c0_113, %c0_114] : memref<2x128x128xbf16, #tpu.memory_space<vmem>>, vector<1x128x128xbf16>
    %233 = vector.shape_cast %232 : vector<1x128x128xbf16> to vector<128x128xbf16>
    %cst_115 = arith.constant dense<0.000000e+00> : vector<128x128xf32>
    %234 = tpu.matmul %231, %233, %cst_115 {dimension_numbers = #tpu.dot_dimension_numbers<[1], [0], [0], [1], [0, 0, 1, 1], [], []>} : vector<128x128xbf16>, vector<128x128xbf16>, vector<128x128xf32> -> vector<128x128xf32>
    %c1_116 = arith.constant 1 : index
    %c0_117 = arith.constant 0 : index
    %c0_118 = arith.constant 0 : index
    %235 = vector.load %arg6[%c1_116, %c0_117, %c0_118] : memref<2x1x128xf32, #tpu.memory_space<vmem>>, vector<1x1x128xf32>
    %236 = vector.shape_cast %235 : vector<1x1x128xf32> to vector<1x128xf32>
    %237 = vector.broadcast %236 : vector<1x128xf32> to vector<128x128xf32>
    %238 = arith.mulf %234, %237 : vector<128x128xf32>
    %c1_119 = arith.constant 1 : index
    %c0_120 = arith.constant 0 : index
    %c0_121 = arith.constant 0 : index
    %239 = vector.load %arg7[%c1_119, %c0_120, %c0_121] : memref<2x1x128xf32, #tpu.memory_space<vmem>>, vector<1x1x128xf32>
    %240 = vector.shape_cast %239 : vector<1x1x128xf32> to vector<1x128xf32>
    %241 = vector.broadcast %240 : vector<1x128xf32> to vector<128x128xf32>
    %242 = arith.addf %238, %241 : vector<128x128xf32>
    %cst_122 = arith.constant 2.000000e+01 : f32
    %243 = vector.broadcast %cst_122 : f32 to vector<128x128xf32>
    %244 = arith.minimumf %242, %243 : vector<128x128xf32>
    %245 = math.exp %244 : vector<128x128xf32>
    %cst_123 = arith.constant 2.000000e+00 : f32
    %246 = vector.broadcast %cst_123 : f32 to vector<128x128xf32>
    %247 = arith.addf %245, %246 : vector<128x128xf32>
    %248 = arith.mulf %245, %247 : vector<128x128xf32>
    %249 = arith.mulf %242, %248 : vector<128x128xf32>
    %cst_124 = arith.constant 2.000000e+00 : f32
    %250 = vector.broadcast %cst_124 : f32 to vector<128x128xf32>
    %251 = arith.addf %248, %250 : vector<128x128xf32>
    %252 = tpu.reciprocal %251 {approx = true} : vector<128x128xf32> -> vector<128x128xf32>
    %253 = arith.mulf %249, %252 : vector<128x128xf32>
    %254 = vector.shape_cast %253 : vector<128x128xf32> to vector<2x8x8x128xf32>
    %c0_125 = arith.constant 0 : index
    %c1_126 = arith.constant 1 : index
    %c1_127 = arith.constant 1 : index
    %c0_128 = arith.constant 0 : index
    %255 = vector.load %arg13[%c0_125, %c1_126, %c1_127, %c0_128] : memref<2x10x10x128xf32, #tpu.memory_space<vmem>>, vector<2x8x8x128xf32>
    tpu.vector_store %arg13[%c0_125, %c1_126, %c1_127, %c0_128], %254 {strides = array<i32>} : memref<2x10x10x128xf32, #tpu.memory_space<vmem>>, vector<2x8x8x128xf32>,
    %c0_129 = arith.constant 0 : index
    %c0_130 = arith.constant 0 : index
    %c0_131 = arith.constant 0 : index
    %c0_132 = arith.constant 0 : index
    %256 = vector.load %arg13[%c0_129, %c0_130, %c0_131, %c0_132] : memref<2x10x10x128xf32, #tpu.memory_space<vmem>>, vector<1x10x10x128xf32>
    %257 = vector.shape_cast %256 : vector<1x10x10x128xf32> to vector<10x10x128xf32>
    %258 = vector.extract_strided_slice %257 {offsets = [0, 0, 0], sizes = [8, 8, 128], strides = [1, 1, 1]} : vector<10x10x128xf32> to vector<8x8x128xf32>
    %259 = vector.shape_cast %258 : vector<8x8x128xf32> to vector<64x128xf32>
    %260 = vector.extract_strided_slice %257 {offsets = [0, 1, 0], sizes = [8, 8, 128], strides = [1, 1, 1]} : vector<10x10x128xf32> to vector<8x8x128xf32>
    %261 = vector.shape_cast %260 : vector<8x8x128xf32> to vector<64x128xf32>
    %262 = vector.extract_strided_slice %257 {offsets = [0, 2, 0], sizes = [8, 8, 128], strides = [1, 1, 1]} : vector<10x10x128xf32> to vector<8x8x128xf32>
    %263 = vector.shape_cast %262 : vector<8x8x128xf32> to vector<64x128xf32>
    %264 = vector.extract_strided_slice %257 {offsets = [1, 0, 0], sizes = [8, 8, 128], strides = [1, 1, 1]} : vector<10x10x128xf32> to vector<8x8x128xf32>
    %265 = vector.shape_cast %264 : vector<8x8x128xf32> to vector<64x128xf32>
    %266 = vector.extract_strided_slice %257 {offsets = [1, 1, 0], sizes = [8, 8, 128], strides = [1, 1, 1]} : vector<10x10x128xf32> to vector<8x8x128xf32>
    %267 = vector.shape_cast %266 : vector<8x8x128xf32> to vector<64x128xf32>
    %268 = vector.extract_strided_slice %257 {offsets = [1, 2, 0], sizes = [8, 8, 128], strides = [1, 1, 1]} : vector<10x10x128xf32> to vector<8x8x128xf32>
    %269 = vector.shape_cast %268 : vector<8x8x128xf32> to vector<64x128xf32>
    %270 = vector.extract_strided_slice %257 {offsets = [2, 0, 0], sizes = [8, 8, 128], strides = [1, 1, 1]} : vector<10x10x128xf32> to vector<8x8x128xf32>
    %271 = vector.shape_cast %270 : vector<8x8x128xf32> to vector<64x128xf32>
    %272 = vector.extract_strided_slice %257 {offsets = [2, 1, 0], sizes = [8, 8, 128], strides = [1, 1, 1]} : vector<10x10x128xf32> to vector<8x8x128xf32>
    %273 = vector.shape_cast %272 : vector<8x8x128xf32> to vector<64x128xf32>
    %274 = vector.extract_strided_slice %257 {offsets = [2, 2, 0], sizes = [8, 8, 128], strides = [1, 1, 1]} : vector<10x10x128xf32> to vector<8x8x128xf32>
    %275 = vector.shape_cast %274 : vector<8x8x128xf32> to vector<64x128xf32>
    %276 = tpu.concatenate %259, %261, %263, %265, %267, %269, %271, %273, %275 in 1 : vector<64x128xf32>, vector<64x128xf32>, vector<64x128xf32>, vector<64x128xf32>, vector<64x128xf32>, vector<64x128xf32>, vector<64x128xf32>, vector<64x128xf32>, vector<64x128xf32> -> vector<64x1152xf32>
    %277 = arith.truncf %276 : vector<64x1152xf32> to vector<64x1152xbf16>
    %c1_133 = arith.constant 1 : index
    %c0_134 = arith.constant 0 : index
    %c0_135 = arith.constant 0 : index
    %c0_136 = arith.constant 0 : index
    %278 = vector.load %arg13[%c1_133, %c0_134, %c0_135, %c0_136] : memref<2x10x10x128xf32, #tpu.memory_space<vmem>>, vector<1x10x10x128xf32>
    %279 = vector.shape_cast %278 : vector<1x10x10x128xf32> to vector<10x10x128xf32>
    %280 = vector.extract_strided_slice %279 {offsets = [0, 0, 0], sizes = [8, 8, 128], strides = [1, 1, 1]} : vector<10x10x128xf32> to vector<8x8x128xf32>
    %281 = vector.shape_cast %280 : vector<8x8x128xf32> to vector<64x128xf32>
    %282 = vector.extract_strided_slice %279 {offsets = [0, 1, 0], sizes = [8, 8, 128], strides = [1, 1, 1]} : vector<10x10x128xf32> to vector<8x8x128xf32>
    %283 = vector.shape_cast %282 : vector<8x8x128xf32> to vector<64x128xf32>
    %284 = vector.extract_strided_slice %279 {offsets = [0, 2, 0], sizes = [8, 8, 128], strides = [1, 1, 1]} : vector<10x10x128xf32> to vector<8x8x128xf32>
    %285 = vector.shape_cast %284 : vector<8x8x128xf32> to vector<64x128xf32>
    %286 = vector.extract_strided_slice %279 {offsets = [1, 0, 0], sizes = [8, 8, 128], strides = [1, 1, 1]} : vector<10x10x128xf32> to vector<8x8x128xf32>
    %287 = vector.shape_cast %286 : vector<8x8x128xf32> to vector<64x128xf32>
    %288 = vector.extract_strided_slice %279 {offsets = [1, 1, 0], sizes = [8, 8, 128], strides = [1, 1, 1]} : vector<10x10x128xf32> to vector<8x8x128xf32>
    %289 = vector.shape_cast %288 : vector<8x8x128xf32> to vector<64x128xf32>
    %290 = vector.extract_strided_slice %279 {offsets = [1, 2, 0], sizes = [8, 8, 128], strides = [1, 1, 1]} : vector<10x10x128xf32> to vector<8x8x128xf32>
    %291 = vector.shape_cast %290 : vector<8x8x128xf32> to vector<64x128xf32>
    %292 = vector.extract_strided_slice %279 {offsets = [2, 0, 0], sizes = [8, 8, 128], strides = [1, 1, 1]} : vector<10x10x128xf32> to vector<8x8x128xf32>
    %293 = vector.shape_cast %292 : vector<8x8x128xf32> to vector<64x128xf32>
    %294 = vector.extract_strided_slice %279 {offsets = [2, 1, 0], sizes = [8, 8, 128], strides = [1, 1, 1]} : vector<10x10x128xf32> to vector<8x8x128xf32>
    %295 = vector.shape_cast %294 : vector<8x8x128xf32> to vector<64x128xf32>
    %296 = vector.extract_strided_slice %279 {offsets = [2, 2, 0], sizes = [8, 8, 128], strides = [1, 1, 1]} : vector<10x10x128xf32> to vector<8x8x128xf32>
    %297 = vector.shape_cast %296 : vector<8x8x128xf32> to vector<64x128xf32>
    %298 = tpu.concatenate %281, %283, %285, %287, %289, %291, %293, %295, %297 in 1 : vector<64x128xf32>, vector<64x128xf32>, vector<64x128xf32>, vector<64x128xf32>, vector<64x128xf32>, vector<64x128xf32>, vector<64x128xf32>, vector<64x128xf32>, vector<64x128xf32> -> vector<64x1152xf32>
    %299 = arith.truncf %298 : vector<64x1152xf32> to vector<64x1152xbf16>
    %300 = tpu.concatenate %277, %299 in 0 : vector<64x1152xbf16>, vector<64x1152xbf16> -> vector<128x1152xbf16>
    %c1_137 = arith.constant 1 : index
    %c0_138 = arith.constant 0 : index
    %c0_139 = arith.constant 0 : index
    %301 = vector.load %arg8[%c1_137, %c0_138, %c0_139] : memref<2x1152x128xbf16, #tpu.memory_space<vmem>>, vector<1x1152x128xbf16>
    %302 = vector.shape_cast %301 : vector<1x1152x128xbf16> to vector<1152x128xbf16>
    %cst_140 = arith.constant dense<0.000000e+00> : vector<128x128xf32>
    %303 = tpu.matmul %300, %302, %cst_140 {dimension_numbers = #tpu.dot_dimension_numbers<[1], [0], [0], [1], [0, 0, 1, 1], [], []>} : vector<128x1152xbf16>, vector<1152x128xbf16>, vector<128x128xf32> -> vector<128x128xf32>
    %c1_141 = arith.constant 1 : index
    %c0_142 = arith.constant 0 : index
    %c0_143 = arith.constant 0 : index
    %304 = vector.load %arg9[%c1_141, %c0_142, %c0_143] : memref<2x1x128xf32, #tpu.memory_space<vmem>>, vector<1x1x128xf32>
    %305 = vector.shape_cast %304 : vector<1x1x128xf32> to vector<1x128xf32>
    %306 = vector.broadcast %305 : vector<1x128xf32> to vector<128x128xf32>
    %307 = arith.mulf %303, %306 : vector<128x128xf32>
    %c1_144 = arith.constant 1 : index
    %c0_145 = arith.constant 0 : index
    %c0_146 = arith.constant 0 : index
    %308 = vector.load %arg10[%c1_144, %c0_145, %c0_146] : memref<2x1x128xf32, #tpu.memory_space<vmem>>, vector<1x1x128xf32>
    %309 = vector.shape_cast %308 : vector<1x1x128xf32> to vector<1x128xf32>
    %310 = vector.broadcast %309 : vector<1x128xf32> to vector<128x128xf32>
    %311 = arith.addf %307, %310 : vector<128x128xf32>
    %cst_147 = arith.constant 2.000000e+01 : f32
    %312 = vector.broadcast %cst_147 : f32 to vector<128x128xf32>
    %313 = arith.minimumf %311, %312 : vector<128x128xf32>
    %314 = math.exp %313 : vector<128x128xf32>
    %cst_148 = arith.constant 2.000000e+00 : f32
    %315 = vector.broadcast %cst_148 : f32 to vector<128x128xf32>
    %316 = arith.addf %314, %315 : vector<128x128xf32>
    %317 = arith.mulf %314, %316 : vector<128x128xf32>
    %318 = arith.mulf %311, %317 : vector<128x128xf32>
    %cst_149 = arith.constant 2.000000e+00 : f32
    %319 = vector.broadcast %cst_149 : f32 to vector<128x128xf32>
    %320 = arith.addf %317, %319 : vector<128x128xf32>
    %321 = tpu.reciprocal %320 {approx = true} : vector<128x128xf32> -> vector<128x128xf32>
    %322 = arith.mulf %318, %321 : vector<128x128xf32>
    %323 = arith.addf %230, %322 : vector<128x128xf32>
    %324 = vector.shape_cast %323 : vector<128x128xf32> to vector<2x8x8x128xf32>
    %c0_150 = arith.constant 0 : index
    %c0_151 = arith.constant 0 : index
    %c0_152 = arith.constant 0 : index
    %c0_153 = arith.constant 0 : index
    %325 = vector.load %arg11[%c0_150, %c0_151, %c0_152, %c0_153] : memref<2x8x8x128xf32, #tpu.memory_space<vmem>>, vector<2x8x8x128xf32>
    tpu.vector_store %arg11[%c0_150, %c0_151, %c0_152, %c0_153], %324 {strides = array<i32>} : memref<2x8x8x128xf32, #tpu.memory_space<vmem>>, vector<2x8x8x128xf32>,
    return
  }
  func.func @transform_0(%arg0: i32) -> (i32, i32, i32, i32, i32) {
    %c0_i32 = arith.constant 0 : i32
    %c0_i32_0 = arith.constant 0 : i32
    %c0_i32_1 = arith.constant 0 : i32
    %c0_i32_2 = arith.constant 0 : i32
    %c0_i32_3 = arith.constant 0 : i32
    return %arg0, %c0_i32, %c0_i32_0, %c0_i32_1, %c0_i32_2 : i32, i32, i32, i32, i32
  }
  func.func @transform_1(%arg0: i32) -> (i32, i32) {
    %c0_i32 = arith.constant 0 : i32
    %c0_i32_0 = arith.constant 0 : i32
    %c0_i32_1 = arith.constant 0 : i32
    return %c0_i32, %c0_i32_0 : i32, i32
  }
  func.func @transform_2(%arg0: i32) -> (i32, i32) {
    %c0_i32 = arith.constant 0 : i32
    %c0_i32_0 = arith.constant 0 : i32
    %c0_i32_1 = arith.constant 0 : i32
    return %c0_i32, %c0_i32_0 : i32, i32
  }
  func.func @transform_3(%arg0: i32) -> (i32, i32) {
    %c0_i32 = arith.constant 0 : i32
    %c0_i32_0 = arith.constant 0 : i32
    %c0_i32_1 = arith.constant 0 : i32
    return %c0_i32, %c0_i32_0 : i32, i32
  }
  func.func @transform_4(%arg0: i32) -> (i32, i32, i32) {
    %c0_i32 = arith.constant 0 : i32
    %c0_i32_0 = arith.constant 0 : i32
    %c0_i32_1 = arith.constant 0 : i32
    %c0_i32_2 = arith.constant 0 : i32
    return %c0_i32, %c0_i32_0, %c0_i32_1 : i32, i32, i32
  }
  func.func @transform_5(%arg0: i32) -> (i32, i32, i32) {
    %c0_i32 = arith.constant 0 : i32
    %c0_i32_0 = arith.constant 0 : i32
    %c0_i32_1 = arith.constant 0 : i32
    %c0_i32_2 = arith.constant 0 : i32
    return %c0_i32, %c0_i32_0, %c0_i32_1 : i32, i32, i32
  }
  func.func @transform_6(%arg0: i32) -> (i32, i32, i32) {
    %c0_i32 = arith.constant 0 : i32
    %c0_i32_0 = arith.constant 0 : i32
    %c0_i32_1 = arith.constant 0 : i32
    %c0_i32_2 = arith.constant 0 : i32
    return %c0_i32, %c0_i32_0, %c0_i32_1 : i32, i32, i32
  }
  func.func @transform_7(%arg0: i32) -> (i32, i32, i32) {
    %c0_i32 = arith.constant 0 : i32
    %c0_i32_0 = arith.constant 0 : i32
    %c0_i32_1 = arith.constant 0 : i32
    %c0_i32_2 = arith.constant 0 : i32
    return %c0_i32, %c0_i32_0, %c0_i32_1 : i32, i32, i32
  }
  func.func @transform_8(%arg0: i32) -> (i32, i32, i32) {
    %c0_i32 = arith.constant 0 : i32
    %c0_i32_0 = arith.constant 0 : i32
    %c0_i32_1 = arith.constant 0 : i32
    %c0_i32_2 = arith.constant 0 : i32
    return %c0_i32, %c0_i32_0, %c0_i32_1 : i32, i32, i32
  }
  func.func @transform_9(%arg0: i32) -> (i32, i32, i32) {
    %c0_i32 = arith.constant 0 : i32
    %c0_i32_0 = arith.constant 0 : i32
    %c0_i32_1 = arith.constant 0 : i32
    %c0_i32_2 = arith.constant 0 : i32
    return %c0_i32, %c0_i32_0, %c0_i32_1 : i32, i32, i32
  }
  func.func @transform_10(%arg0: i32) -> (i32, i32, i32, i32) {
    %c0_i32 = arith.constant 0 : i32
    %c0_i32_0 = arith.constant 0 : i32
    %c0_i32_1 = arith.constant 0 : i32
    %c0_i32_2 = arith.constant 0 : i32
    return %arg0, %c0_i32, %c0_i32_0, %c0_i32_1 : i32, i32, i32, i32
  }
}

</mosaic_0001>

<llo_original>
// kernel: down_sample_layer.1
$region0: #{down_sample_layer.1}
  #allocation0 [shape = 'u32[]', space=smem, size = 0x4, offset = 0x4, fixed_abs, tag = 'smem constant byte address 0x4 - core index']
  #allocation1 [shape = 'u32[144,128]{1,0:T(1,128)}', space=vmem, size = 0x12000, scoped, tag = 'internal scratch']
  #allocation2 [shape = 'f32[2,64,128]{2,1,0:T(8,128)}', space=vmem, size = 0x10000, scoped, tag = 'scratch operand']
  #allocation3 [shape = 'f32[2,10,10,128]{3,2,1,0:T(8,128)}', space=vmem, size = 0x28000, scoped, tag = 'scratch operand']
  %s0 = inlined_call_operand.vmem [shape: f32[2,4,9,9,8], index: 0, kind: input, shape index: {}]
  %s1 = inlined_call_operand.vmem [shape: bf16[128,128], index: 1, kind: input, shape index: {}]
  %s2 = inlined_call_operand.vmem [shape: f32[1,128], index: 2, kind: input, shape index: {}]
  %s3 = inlined_call_operand.vmem [shape: f32[1,128], index: 3, kind: input, shape index: {}]
  %s4 = inlined_call_operand.vmem [shape: bf16[2,128,128], index: 4, kind: input, shape index: {}]
  %s5 = inlined_call_operand.vmem [shape: f32[2,1,128], index: 5, kind: input, shape index: {}]
  %s6 = inlined_call_operand.vmem [shape: f32[2,1,128], index: 6, kind: input, shape index: {}]
  %s7 = inlined_call_operand.vmem [shape: bf16[2,1152,128], index: 7, kind: input, shape index: {}]
  %s8 = inlined_call_operand.vmem [shape: f32[2,1,128], index: 8, kind: input, shape index: {}]
  %s9 = inlined_call_operand.vmem [shape: f32[2,1,128], index: 9, kind: input, shape index: {}]
  %s10 = inlined_call_operand.hbm [shape: f32[2,8,8,128], index: 10, kind: output, shape index: {}]
  %s11 = sld [smem:[#allocation0]]
  $region50: #{down_sample_layer.1} parent=0
    _
  %s13 = ssub.s32 1, %s11
  %s14 = scalar_select 0, %s13, %s11
  $region1: #{down_sample_layer.1} parent=0
    #allocation4 [shape = 'u8[65536]{0}', space=vmem, size = 0x10000, scoped, tag = 'output window, operand 0, single buffered']
    #allocation5 [shape = 's32[1]{0}', space=sflag, size = 0x4, scoped, tag = 'scoped memory for down_sample_layer.1']
    %15 = vsyncpa [#allocation5], 0
    // Predicated region
    $region2: #{down_sample_layer.1} parent=1 // pred_check
      _
    $region3: #{down_sample_layer.1} parent=1 // pred_check_branch
      %17 = sbr.rel (0) target = $region5
    $region4: #{down_sample_layer.1} parent=1 // pred_region
      _
    $region5: #{down_sample_layer.1} parent=1 // pred_fallthru
      _
    // Predicated region
    $region6: #{down_sample_layer.1} parent=1 // pred_check
      _
    $region7: #{down_sample_layer.1} parent=1 // pred_check_branch
      %19 = sbr.rel (0) target = $region9
    $region8: #{down_sample_layer.1} parent=1 // pred_region
      _
    $region9: #{down_sample_layer.1} parent=1 // pred_fallthru
      _
    // Predicated region
    $region10: #{down_sample_layer.1} parent=1 // pred_check
      _
    $region11: #{down_sample_layer.1} parent=1 // pred_check_branch
      %21 = sbr.rel (0) target = $region13
    $region12: #{down_sample_layer.1} parent=1 // pred_region
      _
    $region13: #{down_sample_layer.1} parent=1 // pred_fallthru
      _
    // Predicated region
    $region14: #{down_sample_layer.1} parent=1 // pred_check
      _
    $region15: #{down_sample_layer.1} parent=1 // pred_check_branch
      %23 = sbr.rel (0) target = $region17
    $region16: #{down_sample_layer.1} parent=1 // pred_region
      _
    $region17: #{down_sample_layer.1} parent=1 // pred_fallthru
      _
    // Predicated region
    $region18: #{down_sample_layer.1} parent=1 // pred_check
      _
    $region19: #{down_sample_layer.1} parent=1 // pred_check_branch
      %25 = sbr.rel (0) target = $region21
    $region20: #{down_sample_layer.1} parent=1 // pred_region
      _
    $region21: #{down_sample_layer.1} parent=1 // pred_fallthru
      _
    // Predicated region
    $region22: #{down_sample_layer.1} parent=1 // pred_check
      _
    $region23: #{down_sample_layer.1} parent=1 // pred_check_branch
      %27 = sbr.rel (0) target = $region25
    $region24: #{down_sample_layer.1} parent=1 // pred_region
      _
    $region25: #{down_sample_layer.1} parent=1 // pred_fallthru
      _
    // Predicated region
    $region26: #{down_sample_layer.1} parent=1 // pred_check
      _
    $region27: #{down_sample_layer.1} parent=1 // pred_check_branch
      %29 = sbr.rel (0) target = $region29
    $region28: #{down_sample_layer.1} parent=1 // pred_region
      _
    $region29: #{down_sample_layer.1} parent=1 // pred_fallthru
      _
    // Predicated region
    $region30: #{down_sample_layer.1} parent=1 // pred_check
      _
    $region31: #{down_sample_layer.1} parent=1 // pred_check_branch
      %31 = sbr.rel (0) target = $region33
    $region32: #{down_sample_layer.1} parent=1 // pred_region
      _
    $region33: #{down_sample_layer.1} parent=1 // pred_fallthru
      _
    // Predicated region
    $region34: #{down_sample_layer.1} parent=1 // pred_check
      _
    $region35: #{down_sample_layer.1} parent=1 // pred_check_branch
      %33 = sbr.rel (0) target = $region37
    $region36: #{down_sample_layer.1} parent=1 // pred_region
      _
    $region37: #{down_sample_layer.1} parent=1 // pred_fallthru
      _
    // Predicated region
    $region38: #{down_sample_layer.1} parent=1 // pred_check
      _
    $region39: #{down_sample_layer.1} parent=1 // pred_check_branch
      %35 = sbr.rel (0) target = $region41
    $region40: #{down_sample_layer.1} parent=1 // pred_region
      _
    $region41: #{down_sample_layer.1} parent=1 // pred_fallthru
      _
    %vm37 = vcmask 1048128
    %38 = vst.msk [vmem:[#allocation2] sm:$0xff] %vm37, 0.0
    %39 = vst.msk [vmem:[#allocation2 + $0x8] sm:$0xff] %vm37, 0.0
    %40 = vst.msk [vmem:[#allocation2 + $0x10] sm:$0xff] %vm37, 0.0
    %41 = vst.msk [vmem:[#allocation2 + $0x18] sm:$0xff] %vm37, 0.0
    %42 = vst.msk [vmem:[#allocation2 + $0x20] sm:$0xff] %vm37, 0.0
    %43 = vst.msk [vmem:[#allocation2 + $0x28] sm:$0xff] %vm37, 0.0
    %44 = vst.msk [vmem:[#allocation2 + $0x30] sm:$0xff] %vm37, 0.0
    %45 = vst.msk [vmem:[#allocation2 + $0x38] sm:$0xff] %vm37, 0.0
    %46 = vst.msk [vmem:[#allocation2 + $0x40] sm:$0xff] %vm37, 0.0
    %47 = vst.msk [vmem:[#allocation2 + $0x48] sm:$0xff] %vm37, 0.0
    %48 = vst.msk [vmem:[#allocation2 + $0x50] sm:$0xff] %vm37, 0.0
    %49 = vst.msk [vmem:[#allocation2 + $0x58] sm:$0xff] %vm37, 0.0
    %50 = vst.msk [vmem:[#allocation2 + $0x60] sm:$0xff] %vm37, 0.0
    %51 = vst.msk [vmem:[#allocation2 + $0x68] sm:$0xff] %vm37, 0.0
    %52 = vst.msk [vmem:[#allocation2 + $0x70] sm:$0xff] %vm37, 0.0
    %53 = vst.msk [vmem:[#allocation2 + $0x78] sm:$0xff] %vm37, 0.0
    %v54 = vld [vmem:[%s0] sm:$0xff]
    %v55 = vld [vmem:[%s0 + $0x8] sm:$0x1]
    %v56 = vld [vmem:[%s0 + $0x10] sm:$0xff]
    %v57 = vld [vmem:[%s0 + $0x18] sm:$0x1]
    %v58 = vld [vmem:[%s0 + $0x20] sm:$0xff]
    %v59 = vld [vmem:[%s0 + $0x28] sm:$0x1]
    %v60 = vld [vmem:[%s0 + $0x30] sm:$0xff]
    %v61 = vld [vmem:[%s0 + $0x38] sm:$0x1]
    %v62 = vld [vmem:[%s0 + $0x40] sm:$0xff]
    %v63 = vld [vmem:[%s0 + $0x48] sm:$0x1]
    %v64 = vld [vmem:[%s0 + $0x50] sm:$0xff]
    %v65 = vld [vmem:[%s0 + $0x58] sm:$0x1]
    %v66 = vld [vmem:[%s0 + $0x60] sm:$0xff]
    %v67 = vld [vmem:[%s0 + $0x68] sm:$0x1]
    %v68 = vld [vmem:[%s0 + $0x70] sm:$0xff]
    %v69 = vld [vmem:[%s0 + $0x78] sm:$0x1]
    %v70 = vld [vmem:[%s0 + $0x80] sm:$0xff]
    %v71 = vld [vmem:[%s0 + $0x88] sm:$0x1]
    %v72 = vld [vmem:[%s0 + $0x90] sm:$0xff]
    %v73 = vld [vmem:[%s0 + $0xa0] sm:$0xff]
    %v74 = vld [vmem:[%s0 + $0xb0] sm:$0xff]
    %v75 = vld [vmem:[%s0 + $0xc0] sm:$0xff]
    %v76 = vld [vmem:[%s0 + $0xd0] sm:$0xff]
    %v77 = vld [vmem:[%s0 + $0xe0] sm:$0xff]
    %v78 = vld [vmem:[%s0 + $0xf0] sm:$0xff]
    %v79 = vld [vmem:[%s0 + $0x100] sm:$0xff]
    %v80 = vld [vmem:[%s0 + $0x110] sm:$0xff]
    %v81 = vld [vmem:[%s0 + $0x120] sm:$0xff]
    %v82 = vld [vmem:[%s0 + $0x128] sm:$0x1]
    %v83 = vld [vmem:[%s0 + $0x130] sm:$0xff]
    %v84 = vld [vmem:[%s0 + $0x138] sm:$0x1]
    %v85 = vld [vmem:[%s0 + $0x140] sm:$0xff]
    %v86 = vld [vmem:[%s0 + $0x148] sm:$0x1]
    %v87 = vld [vmem:[%s0 + $0x150] sm:$0xff]
    %v88 = vld [vmem:[%s0 + $0x158] sm:$0x1]
    %v89 = vld [vmem:[%s0 + $0x160] sm:$0xff]
    %v90 = vld [vmem:[%s0 + $0x168] sm:$0x1]
    %v91 = vld [vmem:[%s0 + $0x170] sm:$0xff]
    %v92 = vld [vmem:[%s0 + $0x178] sm:$0x1]
    %v93 = vld [vmem:[%s0 + $0x180] sm:$0xff]
    %v94 = vld [vmem:[%s0 + $0x188] sm:$0x1]
    %v95 = vld [vmem:[%s0 + $0x190] sm:$0xff]
    %v96 = vld [vmem:[%s0 + $0x198] sm:$0x1]
    %v97 = vld [vmem:[%s0 + $0x1b0] sm:$0xff]
    %v98 = vld [vmem:[%s0 + $0x1c0] sm:$0xff]
    %v99 = vld [vmem:[%s0 + $0x1d0] sm:$0xff]
    %v100 = vld [vmem:[%s0 + $0x1e0] sm:$0xff]
    %v101 = vld [vmem:[%s0 + $0x1f0] sm:$0xff]
    %v102 = vld [vmem:[%s0 + $0x200] sm:$0xff]
    %v103 = vld [vmem:[%s0 + $0x210] sm:$0xff]
    %v104 = vld [vmem:[%s0 + $0x220] sm:$0xff]
    %vm105 = vcmask 64512
    %106 = vst.msk [vmem:[#allocation2] sm:$0xff] %vm105, %v54
    %107 = vst.msk [vmem:[#allocation2 + $0x8] sm:$0xff] %vm105, %v56
    %108 = vst.msk [vmem:[#allocation2 + $0x10] sm:$0xff] %vm105, %v58
    %109 = vst.msk [vmem:[#allocation2 + $0x18] sm:$0xff] %vm105, %v60
    %110 = vst.msk [vmem:[#allocation2 + $0x20] sm:$0xff] %vm105, %v62
    %111 = vst.msk [vmem:[#allocation2 + $0x28] sm:$0xff] %vm105, %v64
    %112 = vst.msk [vmem:[#allocation2 + $0x30] sm:$0xff] %vm105, %v66
    %113 = vst.msk [vmem:[#allocation2 + $0x38] sm:$0xff] %vm105, %v68
    %122 = vrot.lane.b32.xlu0 %v72, 8
    %v123 = vpop.permute.xlu0 %122
    %124 = vrot.lane.b32.xlu0 %v73, 8
    %v125 = vpop.permute.xlu0 %124
    %126 = vrot.lane.b32.xlu0 %v74, 8
    %v127 = vpop.permute.xlu0 %126
    %128 = vrot.lane.b32.xlu0 %v75, 8
    %v129 = vpop.permute.xlu0 %128
    %130 = vrot.lane.b32.xlu0 %v76, 8
    %v131 = vpop.permute.xlu0 %130
    %132 = vrot.lane.b32.xlu0 %v77, 8
    %v133 = vpop.permute.xlu0 %132
    %134 = vrot.lane.b32.xlu0 %v78, 8
    %v135 = vpop.permute.xlu0 %134
    %136 = vrot.lane.b32.xlu0 %v79, 8
    %v137 = vpop.permute.xlu0 %136
    %vm146 = vcmask 130112
    %147 = vst.msk [vmem:[#allocation2] sm:$0xff] %vm146, %v123
    %148 = vst.msk [vmem:[#allocation2 + $0x8] sm:$0xff] %vm146, %v125
    %149 = vst.msk [vmem:[#allocation2 + $0x10] sm:$0xff] %vm146, %v127
    %150 = vst.msk [vmem:[#allocation2 + $0x18] sm:$0xff] %vm146, %v129
    %151 = vst.msk [vmem:[#allocation2 + $0x20] sm:$0xff] %vm146, %v131
    %152 = vst.msk [vmem:[#allocation2 + $0x28] sm:$0xff] %vm146, %v133
    %153 = vst.msk [vmem:[#allocation2 + $0x30] sm:$0xff] %vm146, %v135
    %154 = vst.msk [vmem:[#allocation2 + $0x38] sm:$0xff] %vm146, %v137
    %vm171 = vcmask 1046528
    %v172 = vrot.slane %v54, 1
    %v173 = vrot.slane %v55, 1
    %v174 = vsel %vm171, %v172, %v173
    %v175 = vrot.slane %v56, 1
    %v176 = vrot.slane %v57, 1
    %v177 = vsel %vm171, %v175, %v176
    %v178 = vrot.slane %v58, 1
    %v179 = vrot.slane %v59, 1
    %v180 = vsel %vm171, %v178, %v179
    %v181 = vrot.slane %v60, 1
    %v182 = vrot.slane %v61, 1
    %v183 = vsel %vm171, %v181, %v182
    %v184 = vrot.slane %v62, 1
    %v185 = vrot.slane %v63, 1
    %v186 = vsel %vm171, %v184, %v185
    %v187 = vrot.slane %v64, 1
    %v188 = vrot.slane %v65, 1
    %v189 = vsel %vm171, %v187, %v188
    %v190 = vrot.slane %v66, 1
    %v191 = vrot.slane %v67, 1
    %v192 = vsel %vm171, %v190, %v191
    %v193 = vrot.slane %v68, 1
    %v194 = vrot.slane %v69, 1
    %v195 = vsel %vm171, %v193, %v194
    %196 = vrot.lane.b32.xlu0 %v174, 16
    %v197 = vpop.permute.xlu0 %196
    %198 = vrot.lane.b32.xlu0 %v177, 16
    %v199 = vpop.permute.xlu0 %198
    %200 = vrot.lane.b32.xlu0 %v180, 16
    %v201 = vpop.permute.xlu0 %200
    %202 = vrot.lane.b32.xlu0 %v183, 16
    %v203 = vpop.permute.xlu0 %202
    %204 = vrot.lane.b32.xlu0 %v186, 16
    %v205 = vpop.permute.xlu0 %204
    %206 = vrot.lane.b32.xlu0 %v189, 16
    %v207 = vpop.permute.xlu0 %206
    %208 = vrot.lane.b32.xlu0 %v192, 16
    %v209 = vpop.permute.xlu0 %208
    %210 = vrot.lane.b32.xlu0 %v195, 16
    %v211 = vpop.permute.xlu0 %210
    %vm220 = vcmask 195712
    %221 = vst.msk [vmem:[#allocation2] sm:$0xff] %vm220, %v197
    %222 = vst.msk [vmem:[#allocation2 + $0x8] sm:$0xff] %vm220, %v199
    %223 = vst.msk [vmem:[#allocation2 + $0x10] sm:$0xff] %vm220, %v201
    %224 = vst.msk [vmem:[#allocation2 + $0x18] sm:$0xff] %vm220, %v203
    %225 = vst.msk [vmem:[#allocation2 + $0x20] sm:$0xff] %vm220, %v205
    %226 = vst.msk [vmem:[#allocation2 + $0x28] sm:$0xff] %vm220, %v207
    %227 = vst.msk [vmem:[#allocation2 + $0x30] sm:$0xff] %vm220, %v209
    %228 = vst.msk [vmem:[#allocation2 + $0x38] sm:$0xff] %vm220, %v211
    %237 = vrot.lane.b32.xlu0 %v81, 24
    %v238 = vpop.permute.xlu0 %237
    %239 = vrot.lane.b32.xlu0 %v83, 24
    %v240 = vpop.permute.xlu0 %239
    %241 = vrot.lane.b32.xlu0 %v85, 24
    %v242 = vpop.permute.xlu0 %241
    %243 = vrot.lane.b32.xlu0 %v87, 24
    %v244 = vpop.permute.xlu0 %243
    %245 = vrot.lane.b32.xlu0 %v89, 24
    %v246 = vpop.permute.xlu0 %245
    %247 = vrot.lane.b32.xlu0 %v91, 24
    %v248 = vpop.permute.xlu0 %247
    %249 = vrot.lane.b32.xlu0 %v93, 24
    %v250 = vpop.permute.xlu0 %249
    %251 = vrot.lane.b32.xlu0 %v95, 24
    %v252 = vpop.permute.xlu0 %251
    %vm261 = vcmask 261312
    %262 = vst.msk [vmem:[#allocation2] sm:$0xff] %vm261, %v238
    %263 = vst.msk [vmem:[#allocation2 + $0x8] sm:$0xff] %vm261, %v240
    %264 = vst.msk [vmem:[#allocation2 + $0x10] sm:$0xff] %vm261, %v242
    %265 = vst.msk [vmem:[#allocation2 + $0x18] sm:$0xff] %vm261, %v244
    %266 = vst.msk [vmem:[#allocation2 + $0x20] sm:$0xff] %vm261, %v246
    %267 = vst.msk [vmem:[#allocation2 + $0x28] sm:$0xff] %vm261, %v248
    %268 = vst.msk [vmem:[#allocation2 + $0x30] sm:$0xff] %vm261, %v250
    %269 = vst.msk [vmem:[#allocation2 + $0x38] sm:$0xff] %vm261, %v252
    %278 = vrot.lane.b32.xlu0 %v97, 32
    %v279 = vpop.permute.xlu0 %278
    %280 = vrot.lane.b32.xlu0 %v98, 32
    %v281 = vpop.permute.xlu0 %280
    %282 = vrot.lane.b32.xlu0 %v99, 32
    %v283 = vpop.permute.xlu0 %282
    %284 = vrot.lane.b32.xlu0 %v100, 32
    %v285 = vpop.permute.xlu0 %284
    %286 = vrot.lane.b32.xlu0 %v101, 32
    %v287 = vpop.permute.xlu0 %286
    %288 = vrot.lane.b32.xlu0 %v102, 32
    %v289 = vpop.permute.xlu0 %288
    %290 = vrot.lane.b32.xlu0 %v103, 32
    %v291 = vpop.permute.xlu0 %290
    %292 = vrot.lane.b32.xlu0 %v104, 32
    %v293 = vpop.permute.xlu0 %292
    %vm302 = vcmask 326912
    %303 = vst.msk [vmem:[#allocation2] sm:$0xff] %vm302, %v279
    %304 = vst.msk [vmem:[#allocation2 + $0x8] sm:$0xff] %vm302, %v281
    %305 = vst.msk [vmem:[#allocation2 + $0x10] sm:$0xff] %vm302, %v283
    %306 = vst.msk [vmem:[#allocation2 + $0x18] sm:$0xff] %vm302, %v285
    %307 = vst.msk [vmem:[#allocation2 + $0x20] sm:$0xff] %vm302, %v287
    %308 = vst.msk [vmem:[#allocation2 + $0x28] sm:$0xff] %vm302, %v289
    %309 = vst.msk [vmem:[#allocation2 + $0x30] sm:$0xff] %vm302, %v291
    %310 = vst.msk [vmem:[#allocation2 + $0x38] sm:$0xff] %vm302, %v293
    %v319 = vrot.slane %v81, 1
    %v320 = vrot.slane %v82, 1
    %v321 = vsel %vm171, %v319, %v320
    %v322 = vrot.slane %v83, 1
    %v323 = vrot.slane %v84, 1
    %v324 = vsel %vm171, %v322, %v323
    %v325 = vrot.slane %v85, 1
    %v326 = vrot.slane %v86, 1
    %v327 = vsel %vm171, %v325, %v326
    %v328 = vrot.slane %v87, 1
    %v329 = vrot.slane %v88, 1
    %v330 = vsel %vm171, %v328, %v329
    %v331 = vrot.slane %v89, 1
    %v332 = vrot.slane %v90, 1
    %v333 = vsel %vm171, %v331, %v332
    %v334 = vrot.slane %v91, 1
    %v335 = vrot.slane %v92, 1
    %v336 = vsel %vm171, %v334, %v335
    %v337 = vrot.slane %v93, 1
    %v338 = vrot.slane %v94, 1
    %v339 = vsel %vm171, %v337, %v338
    %v340 = vrot.slane %v95, 1
    %v341 = vrot.slane %v96, 1
    %v342 = vsel %vm171, %v340, %v341
    %343 = vrot.lane.b32.xlu0 %v321, 40
    %v344 = vpop.permute.xlu0 %343
    %345 = vrot.lane.b32.xlu0 %v324, 40
    %v346 = vpop.permute.xlu0 %345
    %347 = vrot.lane.b32.xlu0 %v327, 40
    %v348 = vpop.permute.xlu0 %347
    %349 = vrot.lane.b32.xlu0 %v330, 40
    %v350 = vpop.permute.xlu0 %349
    %351 = vrot.lane.b32.xlu0 %v333, 40
    %v352 = vpop.permute.xlu0 %351
    %353 = vrot.lane.b32.xlu0 %v336, 40
    %v354 = vpop.permute.xlu0 %353
    %355 = vrot.lane.b32.xlu0 %v339, 40
    %v356 = vpop.permute.xlu0 %355
    %357 = vrot.lane.b32.xlu0 %v342, 40
    %v358 = vpop.permute.xlu0 %357
    %vm367 = vcmask 392512
    %368 = vst.msk [vmem:[#allocation2] sm:$0xff] %vm367, %v344
    %369 = vst.msk [vmem:[#allocation2 + $0x8] sm:$0xff] %vm367, %v346
    %370 = vst.msk [vmem:[#allocation2 + $0x10] sm:$0xff] %vm367, %v348
    %371 = vst.msk [vmem:[#allocation2 + $0x18] sm:$0xff] %vm367, %v350
    %372 = vst.msk [vmem:[#allocation2 + $0x20] sm:$0xff] %vm367, %v352
    %373 = vst.msk [vmem:[#allocation2 + $0x28] sm:$0xff] %vm367, %v354
    %374 = vst.msk [vmem:[#allocation2 + $0x30] sm:$0xff] %vm367, %v356
    %375 = vst.msk [vmem:[#allocation2 + $0x38] sm:$0xff] %vm367, %v358
    %377 = vrot.lane.b32.xlu0 %v56, 48
    %v378 = vpop.permute.xlu0 %377
    %379 = vrot.lane.b32.xlu0 %v58, 48
    %v380 = vpop.permute.xlu0 %379
    %381 = vrot.lane.b32.xlu0 %v60, 48
    %v382 = vpop.permute.xlu0 %381
    %383 = vrot.lane.b32.xlu0 %v62, 48
    %v384 = vpop.permute.xlu0 %383
    %385 = vrot.lane.b32.xlu0 %v64, 48
    %v386 = vpop.permute.xlu0 %385
    %387 = vrot.lane.b32.xlu0 %v66, 48
    %v388 = vpop.permute.xlu0 %387
    %389 = vrot.lane.b32.xlu0 %v68, 48
    %v390 = vpop.permute.xlu0 %389
    %391 = vrot.lane.b32.xlu0 %v70, 48
    %v392 = vpop.permute.xlu0 %391
    %vm401 = vcmask 458112
    %402 = vst.msk [vmem:[#allocation2] sm:$0xff] %vm401, %v378
    %403 = vst.msk [vmem:[#allocation2 + $0x8] sm:$0xff] %vm401, %v380
    %404 = vst.msk [vmem:[#allocation2 + $0x10] sm:$0xff] %vm401, %v382
    %405 = vst.msk [vmem:[#allocation2 + $0x18] sm:$0xff] %vm401, %v384
    %406 = vst.msk [vmem:[#allocation2 + $0x20] sm:$0xff] %vm401, %v386
    %407 = vst.msk [vmem:[#allocation2 + $0x28] sm:$0xff] %vm401, %v388
    %408 = vst.msk [vmem:[#allocation2 + $0x30] sm:$0xff] %vm401, %v390
    %409 = vst.msk [vmem:[#allocation2 + $0x38] sm:$0xff] %vm401, %v392
    %411 = vrot.lane.b32.xlu0 %v73, 56
    %v412 = vpop.permute.xlu0 %411
    %413 = vrot.lane.b32.xlu0 %v74, 56
    %v414 = vpop.permute.xlu0 %413
    %415 = vrot.lane.b32.xlu0 %v75, 56
    %v416 = vpop.permute.xlu0 %415
    %417 = vrot.lane.b32.xlu0 %v76, 56
    %v418 = vpop.permute.xlu0 %417
    %419 = vrot.lane.b32.xlu0 %v77, 56
    %v420 = vpop.permute.xlu0 %419
    %421 = vrot.lane.b32.xlu0 %v78, 56
    %v422 = vpop.permute.xlu0 %421
    %423 = vrot.lane.b32.xlu0 %v79, 56
    %v424 = vpop.permute.xlu0 %423
    %425 = vrot.lane.b32.xlu0 %v80, 56
    %v426 = vpop.permute.xlu0 %425
    %vm435 = vcmask 523712
    %436 = vst.msk [vmem:[#allocation2] sm:$0xff] %vm435, %v412
    %437 = vst.msk [vmem:[#allocation2 + $0x8] sm:$0xff] %vm435, %v414
    %438 = vst.msk [vmem:[#allocation2 + $0x10] sm:$0xff] %vm435, %v416
    %439 = vst.msk [vmem:[#allocation2 + $0x18] sm:$0xff] %vm435, %v418
    %440 = vst.msk [vmem:[#allocation2 + $0x20] sm:$0xff] %vm435, %v420
    %441 = vst.msk [vmem:[#allocation2 + $0x28] sm:$0xff] %vm435, %v422
    %442 = vst.msk [vmem:[#allocation2 + $0x30] sm:$0xff] %vm435, %v424
    %443 = vst.msk [vmem:[#allocation2 + $0x38] sm:$0xff] %vm435, %v426
    %v445 = vrot.slane %v70, 1
    %v446 = vrot.slane %v71, 1
    %v447 = vsel %vm171, %v445, %v446
    %448 = vrot.lane.b32.xlu0 %v177, 64
    %v449 = vpop.permute.xlu0 %448
    %450 = vrot.lane.b32.xlu0 %v180, 64
    %v451 = vpop.permute.xlu0 %450
    %452 = vrot.lane.b32.xlu0 %v183, 64
    %v453 = vpop.permute.xlu0 %452
    %454 = vrot.lane.b32.xlu0 %v186, 64
    %v455 = vpop.permute.xlu0 %454
    %456 = vrot.lane.b32.xlu0 %v189, 64
    %v457 = vpop.permute.xlu0 %456
    %458 = vrot.lane.b32.xlu0 %v192, 64
    %v459 = vpop.permute.xlu0 %458
    %460 = vrot.lane.b32.xlu0 %v195, 64
    %v461 = vpop.permute.xlu0 %460
    %462 = vrot.lane.b32.xlu0 %v447, 64
    %v463 = vpop.permute.xlu0 %462
    %vm472 = vcmask 589312
    %473 = vst.msk [vmem:[#allocation2] sm:$0xff] %vm472, %v449
    %474 = vst.msk [vmem:[#allocation2 + $0x8] sm:$0xff] %vm472, %v451
    %475 = vst.msk [vmem:[#allocation2 + $0x10] sm:$0xff] %vm472, %v453
    %476 = vst.msk [vmem:[#allocation2 + $0x18] sm:$0xff] %vm472, %v455
    %477 = vst.msk [vmem:[#allocation2 + $0x20] sm:$0xff] %vm472, %v457
    %478 = vst.msk [vmem:[#allocation2 + $0x28] sm:$0xff] %vm472, %v459
    %479 = vst.msk [vmem:[#allocation2 + $0x30] sm:$0xff] %vm472, %v461
    %480 = vst.msk [vmem:[#allocation2 + $0x38] sm:$0xff] %vm472, %v463
    %s481 = scalar_lea.vmem %s0, 576
    %v482 = vld [vmem:[%s481] sm:$0xff]
    %v483 = vld [vmem:[%s481 + $0x8] sm:$0x1]
    %v484 = vld [vmem:[%s481 + $0x10] sm:$0xff]
    %v485 = vld [vmem:[%s481 + $0x18] sm:$0x1]
    %v486 = vld [vmem:[%s481 + $0x20] sm:$0xff]
    %v487 = vld [vmem:[%s481 + $0x28] sm:$0x1]
    %v488 = vld [vmem:[%s481 + $0x30] sm:$0xff]
    %v489 = vld [vmem:[%s481 + $0x38] sm:$0x1]
    %v490 = vld [vmem:[%s481 + $0x40] sm:$0xff]
    %v491 = vld [vmem:[%s481 + $0x48] sm:$0x1]
    %v492 = vld [vmem:[%s481 + $0x50] sm:$0xff]
    %v493 = vld [vmem:[%s481 + $0x58] sm:$0x1]
    %v494 = vld [vmem:[%s481 + $0x60] sm:$0xff]
    %v495 = vld [vmem:[%s481 + $0x68] sm:$0x1]
    %v496 = vld [vmem:[%s481 + $0x70] sm:$0xff]
    %v497 = vld [vmem:[%s481 + $0x78] sm:$0x1]
    %v498 = vld [vmem:[%s481 + $0x80] sm:$0xff]
    %v499 = vld [vmem:[%s481 + $0x88] sm:$0x1]
    %v500 = vld [vmem:[%s481 + $0x90] sm:$0xff]
    %v501 = vld [vmem:[%s481 + $0xa0] sm:$0xff]
    %v502 = vld [vmem:[%s481 + $0xb0] sm:$0xff]
    %v503 = vld [vmem:[%s481 + $0xc0] sm:$0xff]
    %v504 = vld [vmem:[%s481 + $0xd0] sm:$0xff]
    %v505 = vld [vmem:[%s481 + $0xe0] sm:$0xff]
    %v506 = vld [vmem:[%s481 + $0xf0] sm:$0xff]
    %v507 = vld [vmem:[%s481 + $0x100] sm:$0xff]
    %v508 = vld [vmem:[%s481 + $0x110] sm:$0xff]
    %v509 = vld [vmem:[%s481 + $0x120] sm:$0xff]
    %v510 = vld [vmem:[%s481 + $0x128] sm:$0x1]
    %v511 = vld [vmem:[%s481 + $0x130] sm:$0xff]
    %v512 = vld [vmem:[%s481 + $0x138] sm:$0x1]
    %v513 = vld [vmem:[%s481 + $0x140] sm:$0xff]
    %v514 = vld [vmem:[%s481 + $0x148] sm:$0x1]
    %v515 = vld [vmem:[%s481 + $0x150] sm:$0xff]
    %v516 = vld [vmem:[%s481 + $0x158] sm:$0x1]
    %v517 = vld [vmem:[%s481 + $0x160] sm:$0xff]
    %v518 = vld [vmem:[%s481 + $0x168] sm:$0x1]
    %v519 = vld [vmem:[%s481 + $0x170] sm:$0xff]
    %v520 = vld [vmem:[%s481 + $0x178] sm:$0x1]
    %v521 = vld [vmem:[%s481 + $0x180] sm:$0xff]
    %v522 = vld [vmem:[%s481 + $0x188] sm:$0x1]
    %v523 = vld [vmem:[%s481 + $0x190] sm:$0xff]
    %v524 = vld [vmem:[%s481 + $0x198] sm:$0x1]
    %v525 = vld [vmem:[%s481 + $0x1b0] sm:$0xff]
    %v526 = vld [vmem:[%s481 + $0x1c0] sm:$0xff]
    %v527 = vld [vmem:[%s481 + $0x1d0] sm:$0xff]
    %v528 = vld [vmem:[%s481 + $0x1e0] sm:$0xff]
    %v529 = vld [vmem:[%s481 + $0x1f0] sm:$0xff]
    %v530 = vld [vmem:[%s481 + $0x200] sm:$0xff]
    %v531 = vld [vmem:[%s481 + $0x210] sm:$0xff]
    %v532 = vld [vmem:[%s481 + $0x220] sm:$0xff]
    %s533 = scalar_lea.vmem [#allocation2], 64
    %534 = vst.msk [vmem:[%s533] sm:$0xff] %vm105, %v482
    %535 = vst.msk [vmem:[%s533 + $0x8] sm:$0xff] %vm105, %v484
    %536 = vst.msk [vmem:[%s533 + $0x10] sm:$0xff] %vm105, %v486
    %537 = vst.msk [vmem:[%s533 + $0x18] sm:$0xff] %vm105, %v488
    %538 = vst.msk [vmem:[%s533 + $0x20] sm:$0xff] %vm105, %v490
    %539 = vst.msk [vmem:[%s533 + $0x28] sm:$0xff] %vm105, %v492
    %540 = vst.msk [vmem:[%s533 + $0x30] sm:$0xff] %vm105, %v494
    %541 = vst.msk [vmem:[%s533 + $0x38] sm:$0xff] %vm105, %v496
    %550 = vrot.lane.b32.xlu0 %v500, 8
    %v551 = vpop.permute.xlu0 %550
    %552 = vrot.lane.b32.xlu0 %v501, 8
    %v553 = vpop.permute.xlu0 %552
    %554 = vrot.lane.b32.xlu0 %v502, 8
    %v555 = vpop.permute.xlu0 %554
    %556 = vrot.lane.b32.xlu0 %v503, 8
    %v557 = vpop.permute.xlu0 %556
    %558 = vrot.lane.b32.xlu0 %v504, 8
    %v559 = vpop.permute.xlu0 %558
    %560 = vrot.lane.b32.xlu0 %v505, 8
    %v561 = vpop.permute.xlu0 %560
    %562 = vrot.lane.b32.xlu0 %v506, 8
    %v563 = vpop.permute.xlu0 %562
    %564 = vrot.lane.b32.xlu0 %v507, 8
    %v565 = vpop.permute.xlu0 %564
    %574 = vst.msk [vmem:[%s533] sm:$0xff] %vm146, %v551
    %575 = vst.msk [vmem:[%s533 + $0x8] sm:$0xff] %vm146, %v553
    %576 = vst.msk [vmem:[%s533 + $0x10] sm:$0xff] %vm146, %v555
    %577 = vst.msk [vmem:[%s533 + $0x18] sm:$0xff] %vm146, %v557
    %578 = vst.msk [vmem:[%s533 + $0x20] sm:$0xff] %vm146, %v559
    %579 = vst.msk [vmem:[%s533 + $0x28] sm:$0xff] %vm146, %v561
    %580 = vst.msk [vmem:[%s533 + $0x30] sm:$0xff] %vm146, %v563
    %581 = vst.msk [vmem:[%s533 + $0x38] sm:$0xff] %vm146, %v565
    %v598 = vrot.slane %v482, 1
    %v599 = vrot.slane %v483, 1
    %v600 = vsel %vm171, %v598, %v599
    %v601 = vrot.slane %v484, 1
    %v602 = vrot.slane %v485, 1
    %v603 = vsel %vm171, %v601, %v602
    %v604 = vrot.slane %v486, 1
    %v605 = vrot.slane %v487, 1
    %v606 = vsel %vm171, %v604, %v605
    %v607 = vrot.slane %v488, 1
    %v608 = vrot.slane %v489, 1
    %v609 = vsel %vm171, %v607, %v608
    %v610 = vrot.slane %v490, 1
    %v611 = vrot.slane %v491, 1
    %v612 = vsel %vm171, %v610, %v611
    %v613 = vrot.slane %v492, 1
    %v614 = vrot.slane %v493, 1
    %v615 = vsel %vm171, %v613, %v614
    %v616 = vrot.slane %v494, 1
    %v617 = vrot.slane %v495, 1
    %v618 = vsel %vm171, %v616, %v617
    %v619 = vrot.slane %v496, 1
    %v620 = vrot.slane %v497, 1
    %v621 = vsel %vm171, %v619, %v620
    %622 = vrot.lane.b32.xlu0 %v600, 16
    %v623 = vpop.permute.xlu0 %622
    %624 = vrot.lane.b32.xlu0 %v603, 16
    %v625 = vpop.permute.xlu0 %624
    %626 = vrot.lane.b32.xlu0 %v606, 16
    %v627 = vpop.permute.xlu0 %626
    %628 = vrot.lane.b32.xlu0 %v609, 16
    %v629 = vpop.permute.xlu0 %628
    %630 = vrot.lane.b32.xlu0 %v612, 16
    %v631 = vpop.permute.xlu0 %630
    %632 = vrot.lane.b32.xlu0 %v615, 16
    %v633 = vpop.permute.xlu0 %632
    %634 = vrot.lane.b32.xlu0 %v618, 16
    %v635 = vpop.permute.xlu0 %634
    %636 = vrot.lane.b32.xlu0 %v621, 16
    %v637 = vpop.permute.xlu0 %636
    %646 = vst.msk [vmem:[%s533] sm:$0xff] %vm220, %v623
    %647 = vst.msk [vmem:[%s533 + $0x8] sm:$0xff] %vm220, %v625
    %648 = vst.msk [vmem:[%s533 + $0x10] sm:$0xff] %vm220, %v627
    %649 = vst.msk [vmem:[%s533 + $0x18] sm:$0xff] %vm220, %v629
    %650 = vst.msk [vmem:[%s533 + $0x20] sm:$0xff] %vm220, %v631
    %651 = vst.msk [vmem:[%s533 + $0x28] sm:$0xff] %vm220, %v633
    %652 = vst.msk [vmem:[%s533 + $0x30] sm:$0xff] %vm220, %v635
    %653 = vst.msk [vmem:[%s533 + $0x38] sm:$0xff] %vm220, %v637
    %662 = vrot.lane.b32.xlu0 %v509, 24
    %v663 = vpop.permute.xlu0 %662
    %664 = vrot.lane.b32.xlu0 %v511, 24
    %v665 = vpop.permute.xlu0 %664
    %666 = vrot.lane.b32.xlu0 %v513, 24
    %v667 = vpop.permute.xlu0 %666
    %668 = vrot.lane.b32.xlu0 %v515, 24
    %v669 = vpop.permute.xlu0 %668
    %670 = vrot.lane.b32.xlu0 %v517, 24
    %v671 = vpop.permute.xlu0 %670
    %672 = vrot.lane.b32.xlu0 %v519, 24
    %v673 = vpop.permute.xlu0 %672
    %674 = vrot.lane.b32.xlu0 %v521, 24
    %v675 = vpop.permute.xlu0 %674
    %676 = vrot.lane.b32.xlu0 %v523, 24
    %v677 = vpop.permute.xlu0 %676
    %686 = vst.msk [vmem:[%s533] sm:$0xff] %vm261, %v663
    %687 = vst.msk [vmem:[%s533 + $0x8] sm:$0xff] %vm261, %v665
    %688 = vst.msk [vmem:[%s533 + $0x10] sm:$0xff] %vm261, %v667
    %689 = vst.msk [vmem:[%s533 + $0x18] sm:$0xff] %vm261, %v669
    %690 = vst.msk [vmem:[%s533 + $0x20] sm:$0xff] %vm261, %v671
    %691 = vst.msk [vmem:[%s533 + $0x28] sm:$0xff] %vm261, %v673
    %692 = vst.msk [vmem:[%s533 + $0x30] sm:$0xff] %vm261, %v675
    %693 = vst.msk [vmem:[%s533 + $0x38] sm:$0xff] %vm261, %v677
    %702 = vrot.lane.b32.xlu0 %v525, 32
    %v703 = vpop.permute.xlu0 %702
    %704 = vrot.lane.b32.xlu0 %v526, 32
    %v705 = vpop.permute.xlu0 %704
    %706 = vrot.lane.b32.xlu0 %v527, 32
    %v707 = vpop.permute.xlu0 %706
    %708 = vrot.lane.b32.xlu0 %v528, 32
    %v709 = vpop.permute.xlu0 %708
    %710 = vrot.lane.b32.xlu0 %v529, 32
    %v711 = vpop.permute.xlu0 %710
    %712 = vrot.lane.b32.xlu0 %v530, 32
    %v713 = vpop.permute.xlu0 %712
    %714 = vrot.lane.b32.xlu0 %v531, 32
    %v715 = vpop.permute.xlu0 %714
    %716 = vrot.lane.b32.xlu0 %v532, 32
    %v717 = vpop.permute.xlu0 %716
    %726 = vst.msk [vmem:[%s533] sm:$0xff] %vm302, %v703
    %727 = vst.msk [vmem:[%s533 + $0x8] sm:$0xff] %vm302, %v705
    %728 = vst.msk [vmem:[%s533 + $0x10] sm:$0xff] %vm302, %v707
    %729 = vst.msk [vmem:[%s533 + $0x18] sm:$0xff] %vm302, %v709
    %730 = vst.msk [vmem:[%s533 + $0x20] sm:$0xff] %vm302, %v711
    %731 = vst.msk [vmem:[%s533 + $0x28] sm:$0xff] %vm302, %v713
    %732 = vst.msk [vmem:[%s533 + $0x30] sm:$0xff] %vm302, %v715
    %733 = vst.msk [vmem:[%s533 + $0x38] sm:$0xff] %vm302, %v717
    %v742 = vrot.slane %v509, 1
    %v743 = vrot.slane %v510, 1
    %v744 = vsel %vm171, %v742, %v743
    %v745 = vrot.slane %v511, 1
    %v746 = vrot.slane %v512, 1
    %v747 = vsel %vm171, %v745, %v746
    %v748 = vrot.slane %v513, 1
    %v749 = vrot.slane %v514, 1
    %v750 = vsel %vm171, %v748, %v749
    %v751 = vrot.slane %v515, 1
    %v752 = vrot.slane %v516, 1
    %v753 = vsel %vm171, %v751, %v752
    %v754 = vrot.slane %v517, 1
    %v755 = vrot.slane %v518, 1
    %v756 = vsel %vm171, %v754, %v755
    %v757 = vrot.slane %v519, 1
    %v758 = vrot.slane %v520, 1
    %v759 = vsel %vm171, %v757, %v758
    %v760 = vrot.slane %v521, 1
    %v761 = vrot.slane %v522, 1
    %v762 = vsel %vm171, %v760, %v761
    %v763 = vrot.slane %v523, 1
    %v764 = vrot.slane %v524, 1
    %v765 = vsel %vm171, %v763, %v764
    %766 = vrot.lane.b32.xlu0 %v744, 40
    %v767 = vpop.permute.xlu0 %766
    %768 = vrot.lane.b32.xlu0 %v747, 40
    %v769 = vpop.permute.xlu0 %768
    %770 = vrot.lane.b32.xlu0 %v750, 40
    %v771 = vpop.permute.xlu0 %770
    %772 = vrot.lane.b32.xlu0 %v753, 40
    %v773 = vpop.permute.xlu0 %772
    %774 = vrot.lane.b32.xlu0 %v756, 40
    %v775 = vpop.permute.xlu0 %774
    %776 = vrot.lane.b32.xlu0 %v759, 40
    %v777 = vpop.permute.xlu0 %776
    %778 = vrot.lane.b32.xlu0 %v762, 40
    %v779 = vpop.permute.xlu0 %778
    %780 = vrot.lane.b32.xlu0 %v765, 40
    %v781 = vpop.permute.xlu0 %780
    %790 = vst.msk [vmem:[%s533] sm:$0xff] %vm367, %v767
    %791 = vst.msk [vmem:[%s533 + $0x8] sm:$0xff] %vm367, %v769
    %792 = vst.msk [vmem:[%s533 + $0x10] sm:$0xff] %vm367, %v771
    %793 = vst.msk [vmem:[%s533 + $0x18] sm:$0xff] %vm367, %v773
    %794 = vst.msk [vmem:[%s533 + $0x20] sm:$0xff] %vm367, %v775
    %795 = vst.msk [vmem:[%s533 + $0x28] sm:$0xff] %vm367, %v777
    %796 = vst.msk [vmem:[%s533 + $0x30] sm:$0xff] %vm367, %v779
    %797 = vst.msk [vmem:[%s533 + $0x38] sm:$0xff] %vm367, %v781
    %799 = vrot.lane.b32.xlu0 %v484, 48
    %v800 = vpop.permute.xlu0 %799
    %801 = vrot.lane.b32.xlu0 %v486, 48
    %v802 = vpop.permute.xlu0 %801
    %803 = vrot.lane.b32.xlu0 %v488, 48
    %v804 = vpop.permute.xlu0 %803
    %805 = vrot.lane.b32.xlu0 %v490, 48
    %v806 = vpop.permute.xlu0 %805
    %807 = vrot.lane.b32.xlu0 %v492, 48
    %v808 = vpop.permute.xlu0 %807
    %809 = vrot.lane.b32.xlu0 %v494, 48
    %v810 = vpop.permute.xlu0 %809
    %811 = vrot.lane.b32.xlu0 %v496, 48
    %v812 = vpop.permute.xlu0 %811
    %813 = vrot.lane.b32.xlu0 %v498, 48
    %v814 = vpop.permute.xlu0 %813
    %823 = vst.msk [vmem:[%s533] sm:$0xff] %vm401, %v800
    %824 = vst.msk [vmem:[%s533 + $0x8] sm:$0xff] %vm401, %v802
    %825 = vst.msk [vmem:[%s533 + $0x10] sm:$0xff] %vm401, %v804
    %826 = vst.msk [vmem:[%s533 + $0x18] sm:$0xff] %vm401, %v806
    %827 = vst.msk [vmem:[%s533 + $0x20] sm:$0xff] %vm401, %v808
    %828 = vst.msk [vmem:[%s533 + $0x28] sm:$0xff] %vm401, %v810
    %829 = vst.msk [vmem:[%s533 + $0x30] sm:$0xff] %vm401, %v812
    %830 = vst.msk [vmem:[%s533 + $0x38] sm:$0xff] %vm401, %v814
    %832 = vrot.lane.b32.xlu0 %v501, 56
    %v833 = vpop.permute.xlu0 %832
    %834 = vrot.lane.b32.xlu0 %v502, 56
    %v835 = vpop.permute.xlu0 %834
    %836 = vrot.lane.b32.xlu0 %v503, 56
    %v837 = vpop.permute.xlu0 %836
    %838 = vrot.lane.b32.xlu0 %v504, 56
    %v839 = vpop.permute.xlu0 %838
    %840 = vrot.lane.b32.xlu0 %v505, 56
    %v841 = vpop.permute.xlu0 %840
    %842 = vrot.lane.b32.xlu0 %v506, 56
    %v843 = vpop.permute.xlu0 %842
    %844 = vrot.lane.b32.xlu0 %v507, 56
    %v845 = vpop.permute.xlu0 %844
    %846 = vrot.lane.b32.xlu0 %v508, 56
    %v847 = vpop.permute.xlu0 %846
    %856 = vst.msk [vmem:[%s533] sm:$0xff] %vm435, %v833
    %857 = vst.msk [vmem:[%s533 + $0x8] sm:$0xff] %vm435, %v835
    %858 = vst.msk [vmem:[%s533 + $0x10] sm:$0xff] %vm435, %v837
    %859 = vst.msk [vmem:[%s533 + $0x18] sm:$0xff] %vm435, %v839
    %860 = vst.msk [vmem:[%s533 + $0x20] sm:$0xff] %vm435, %v841
    %861 = vst.msk [vmem:[%s533 + $0x28] sm:$0xff] %vm435, %v843
    %862 = vst.msk [vmem:[%s533 + $0x30] sm:$0xff] %vm435, %v845
    %863 = vst.msk [vmem:[%s533 + $0x38] sm:$0xff] %vm435, %v847
    %v865 = vrot.slane %v498, 1
    %v866 = vrot.slane %v499, 1
    %v867 = vsel %vm171, %v865, %v866
    %868 = vrot.lane.b32.xlu0 %v603, 64
    %v869 = vpop.permute.xlu0 %868
    %870 = vrot.lane.b32.xlu0 %v606, 64
    %v871 = vpop.permute.xlu0 %870
    %872 = vrot.lane.b32.xlu0 %v609, 64
    %v873 = vpop.permute.xlu0 %872
    %874 = vrot.lane.b32.xlu0 %v612, 64
    %v875 = vpop.permute.xlu0 %874
    %876 = vrot.lane.b32.xlu0 %v615, 64
    %v877 = vpop.permute.xlu0 %876
    %878 = vrot.lane.b32.xlu0 %v618, 64
    %v879 = vpop.permute.xlu0 %878
    %880 = vrot.lane.b32.xlu0 %v621, 64
    %v881 = vpop.permute.xlu0 %880
    %882 = vrot.lane.b32.xlu0 %v867, 64
    %v883 = vpop.permute.xlu0 %882
    %892 = vst.msk [vmem:[%s533] sm:$0xff] %vm472, %v869
    %893 = vst.msk [vmem:[%s533 + $0x8] sm:$0xff] %vm472, %v871
    %894 = vst.msk [vmem:[%s533 + $0x10] sm:$0xff] %vm472, %v873
    %895 = vst.msk [vmem:[%s533 + $0x18] sm:$0xff] %vm472, %v875
    %896 = vst.msk [vmem:[%s533 + $0x20] sm:$0xff] %vm472, %v877
    %897 = vst.msk [vmem:[%s533 + $0x28] sm:$0xff] %vm472, %v879
    %898 = vst.msk [vmem:[%s533 + $0x30] sm:$0xff] %vm472, %v881
    %899 = vst.msk [vmem:[%s533 + $0x38] sm:$0xff] %vm472, %v883
    %v900 = vld [vmem:[#allocation2] sm:$0xff]
    %v901 = vld [vmem:[#allocation2 + $0x8] sm:$0xff]
    %v902 = vld [vmem:[#allocation2 + $0x10] sm:$0xff]
    %v903 = vld [vmem:[#allocation2 + $0x18] sm:$0xff]
    %v904 = vld [vmem:[#allocation2 + $0x20] sm:$0xff]
    %v905 = vld [vmem:[#allocation2 + $0x28] sm:$0xff]
    %v906 = vld [vmem:[#allocation2 + $0x30] sm:$0xff]
    %v907 = vld [vmem:[#allocation2 + $0x38] sm:$0xff]
    %v908 = vld [vmem:[#allocation2 + $0x40] sm:$0xff]
    %v909 = vld [vmem:[#allocation2 + $0x48] sm:$0xff]
    %v910 = vld [vmem:[#allocation2 + $0x50] sm:$0xff]
    %v911 = vld [vmem:[#allocation2 + $0x58] sm:$0xff]
    %v912 = vld [vmem:[#allocation2 + $0x60] sm:$0xff]
    %v913 = vld [vmem:[#allocation2 + $0x68] sm:$0xff]
    %v914 = vld [vmem:[#allocation2 + $0x70] sm:$0xff]
    %v915 = vld [vmem:[#allocation2 + $0x78] sm:$0xff]
    %v916 = vpack.c.bf16 %v901, %v900
    %v917 = vpack.c.bf16 %v903, %v902
    %v918 = vpack.c.bf16 %v905, %v904
    %v919 = vpack.c.bf16 %v907, %v906
    %v920 = vpack.c.bf16 %v909, %v908
    %v921 = vpack.c.bf16 %v911, %v910
    %v922 = vpack.c.bf16 %v913, %v912
    %v923 = vpack.c.bf16 %v915, %v914
    %v924 = vld [vmem:[%s1] sm:$0xf]
    %v925 = vld [vmem:[%s1 + $0x4] sm:$0xf]
    %v926 = vld [vmem:[%s1 + $0x8] sm:$0xf]
    %v927 = vld [vmem:[%s1 + $0xc] sm:$0xf]
    %v928 = vld [vmem:[%s1 + $0x10] sm:$0xf]
    %v929 = vld [vmem:[%s1 + $0x14] sm:$0xf]
    %v930 = vld [vmem:[%s1 + $0x18] sm:$0xf]
    %v931 = vld [vmem:[%s1 + $0x1c] sm:$0xf]
    %v932 = vld [vmem:[%s1 + $0x20] sm:$0xf]
    %v933 = vld [vmem:[%s1 + $0x24] sm:$0xf]
    %v934 = vld [vmem:[%s1 + $0x28] sm:$0xf]
    %v935 = vld [vmem:[%s1 + $0x2c] sm:$0xf]
    %v936 = vld [vmem:[%s1 + $0x30] sm:$0xf]
    %v937 = vld [vmem:[%s1 + $0x34] sm:$0xf]
    %v938 = vld [vmem:[%s1 + $0x38] sm:$0xf]
    %v939 = vld [vmem:[%s1 + $0x3c] sm:$0xf]
    %v956 = vunpack.c.l.b16 %v924
    %v957 = vunpack.c.l.b16 %v925
    %v958 = vunpack.c.l.b16 %v926
    %v959 = vunpack.c.l.b16 %v927
    %v960 = vunpack.c.l.b16 %v928
    %v961 = vunpack.c.l.b16 %v929
    %v962 = vunpack.c.l.b16 %v930
    %v963 = vunpack.c.l.b16 %v931
    %v964 = vunpack.c.l.b16 %v932
    %v965 = vunpack.c.l.b16 %v933
    %v966 = vunpack.c.l.b16 %v934
    %v967 = vunpack.c.l.b16 %v935
    %v968 = vunpack.c.l.b16 %v936
    %v969 = vunpack.c.l.b16 %v937
    %v970 = vunpack.c.l.b16 %v938
    %v971 = vunpack.c.l.b16 %v939
    %v972 = vpack.c.b16 %v957, %v956
    %v973 = vpack.c.b16 %v959, %v958
    %v974 = vpack.c.b16 %v961, %v960
    %v975 = vpack.c.b16 %v963, %v962
    %v976 = vpack.c.b16 %v965, %v964
    %v977 = vpack.c.b16 %v967, %v966
    %v978 = vpack.c.b16 %v969, %v968
    %v979 = vpack.c.b16 %v971, %v970
    %988 = vmatprep.subr.bf16.mxu0 0
    %989 = vmatpush1.bf16.msra.mxu0 %v972
    %990 = vmatprep.subr.bf16.mxu0 0
    %991 = vmatpush1.bf16.msra.mxu0 %v973
    %992 = vmatprep.subr.bf16.mxu0 0
    %993 = vmatpush1.bf16.msra.mxu0 %v974
    %994 = vmatprep.subr.bf16.mxu0 0
    %995 = vmatpush1.bf16.msra.mxu0 %v975
    %996 = vmatprep.subr.bf16.mxu0 0
    %997 = vmatpush1.bf16.msra.mxu0 %v976
    %998 = vmatprep.subr.bf16.mxu0 0
    %999 = vmatpush1.bf16.msra.mxu0 %v977
    %1000 = vmatprep.subr.bf16.mxu0 0
    %1001 = vmatpush1.bf16.msra.mxu0 %v978
    %1002 = vmatprep.subr.bf16.mxu0 0
    %1003 = vmatpush1.bf16.msra.mxu0 %v979
    %1004 = vmatprep.subr.bf16.mxu0 0
    %1005 = vmatpush1.bf16.msra.mxu0 0
    %1006 = vmatprep.subr.bf16.mxu0 0
    %1007 = vmatpush1.bf16.msra.mxu0 0
    %1008 = vmatprep.subr.bf16.mxu0 0
    %1009 = vmatpush1.bf16.msra.mxu0 0
    %1010 = vmatprep.subr.bf16.mxu0 0
    %1011 = vmatpush1.bf16.msra.mxu0 0
    %1012 = vmatprep.subr.bf16.mxu0 0
    %1013 = vmatpush1.bf16.msra.mxu0 0
    %1014 = vmatprep.subr.bf16.mxu0 0
    %1015 = vmatpush1.bf16.msra.mxu0 0
    %1016 = vmatprep.subr.bf16.mxu0 0
    %1017 = vmatpush1.bf16.msra.mxu0 0
    %1018 = vmatprep.subr.bf16.mxu0 0
    %1019 = vmatpush1.bf16.msra.mxu0 0
    %1020 = vmatprep.mubr.bf16.mxu0 0
    %1021 = vmatmul.mubr.bf16.gmra.mrb[0].mxu0 %v916
    %v1022 = vpop.f32.mrb[0].mxu0
    %v1023 = vadd.f32 0.0, %v1022
    %v1024 = vpop.f32.mrb[0].mxu0
    %v1025 = vpop.f32.mrb[0].mxu0
    %v1026 = vadd.f32 0.0, %v1025
    %v1027 = vpop.f32.mrb[0].mxu0
    %1028 = vmatprep.mubr.bf16.mxu0 0
    %1029 = vmatmul.mubr.bf16.gmra.mrb[0].mxu0 %v917
    %v1030 = vpop.f32.mrb[0].mxu0
    %v1031 = vadd.f32 0.0, %v1030
    %v1032 = vpop.f32.mrb[0].mxu0
    %v1033 = vpop.f32.mrb[0].mxu0
    %v1034 = vadd.f32 0.0, %v1033
    %v1035 = vpop.f32.mrb[0].mxu0
    %1036 = vmatprep.mubr.bf16.mxu0 0
    %1037 = vmatmul.mubr.bf16.gmra.mrb[0].mxu0 %v918
    %v1038 = vpop.f32.mrb[0].mxu0
    %v1039 = vadd.f32 0.0, %v1038
    %v1040 = vpop.f32.mrb[0].mxu0
    %v1041 = vpop.f32.mrb[0].mxu0
    %v1042 = vadd.f32 0.0, %v1041
    %v1043 = vpop.f32.mrb[0].mxu0
    %1044 = vmatprep.mubr.bf16.mxu0 0
    %1045 = vmatmul.mubr.bf16.gmra.mrb[0].mxu0 %v919
    %v1046 = vpop.f32.mrb[0].mxu0
    %v1047 = vadd.f32 0.0, %v1046
    %v1048 = vpop.f32.mrb[0].mxu0
    %v1049 = vpop.f32.mrb[0].mxu0
    %v1050 = vadd.f32 0.0, %v1049
    %v1051 = vpop.f32.mrb[0].mxu0
    %1052 = vmatprep.mubr.bf16.mxu0 0
    %1053 = vmatmul.mubr.bf16.gmra.mrb[0].mxu0 %v920
    %v1054 = vpop.f32.mrb[0].mxu0
    %v1055 = vadd.f32 0.0, %v1054
    %v1056 = vpop.f32.mrb[0].mxu0
    %v1057 = vpop.f32.mrb[0].mxu0
    %v1058 = vadd.f32 0.0, %v1057
    %v1059 = vpop.f32.mrb[0].mxu0
    %1060 = vmatprep.mubr.bf16.mxu0 0
    %1061 = vmatmul.mubr.bf16.gmra.mrb[0].mxu0 %v921
    %v1062 = vpop.f32.mrb[0].mxu0
    %v1063 = vadd.f32 0.0, %v1062
    %v1064 = vpop.f32.mrb[0].mxu0
    %v1065 = vpop.f32.mrb[0].mxu0
    %v1066 = vadd.f32 0.0, %v1065
    %v1067 = vpop.f32.mrb[0].mxu0
    %1068 = vmatprep.mubr.bf16.mxu0 0
    %1069 = vmatmul.mubr.bf16.gmra.mrb[0].mxu0 %v922
    %v1070 = vpop.f32.mrb[0].mxu0
    %v1071 = vadd.f32 0.0, %v1070
    %v1072 = vpop.f32.mrb[0].mxu0
    %v1073 = vpop.f32.mrb[0].mxu0
    %v1074 = vadd.f32 0.0, %v1073
    %v1075 = vpop.f32.mrb[0].mxu0
    %1076 = vmatprep.mubr.bf16.mxu0 0
    %1077 = vmatmul.mubr.bf16.gmra.mrb[0].mxu0 %v923
    %v1078 = vpop.f32.mrb[0].mxu0
    %v1079 = vadd.f32 0.0, %v1078
    %v1080 = vpop.f32.mrb[0].mxu0
    %v1081 = vpop.f32.mrb[0].mxu0
    %v1082 = vadd.f32 0.0, %v1081
    %v1083 = vpop.f32.mrb[0].mxu0
    %1084 = vdwg.mxu0
    %v1085 = vld [vmem:[%s2] sm:$0x1]
    %v1087 = vlaneseq
    %v1088 = vshrl.u32 %v1087, 7
    %v1089 = vsub.s32 0, %v1088
    %v1090 = vrot.slane %v1085, %v1089
    %v1092 = vmul.f32 %v1023, %v1090
    %v1093 = vmul.f32 %v1026, %v1090
    %v1094 = vmul.f32 %v1031, %v1090
    %v1095 = vmul.f32 %v1034, %v1090
    %v1096 = vmul.f32 %v1039, %v1090
    %v1097 = vmul.f32 %v1042, %v1090
    %v1098 = vmul.f32 %v1047, %v1090
    %v1099 = vmul.f32 %v1050, %v1090
    %v1100 = vmul.f32 %v1055, %v1090
    %v1101 = vmul.f32 %v1058, %v1090
    %v1102 = vmul.f32 %v1063, %v1090
    %v1103 = vmul.f32 %v1066, %v1090
    %v1104 = vmul.f32 %v1071, %v1090
    %v1105 = vmul.f32 %v1074, %v1090
    %v1106 = vmul.f32 %v1079, %v1090
    %v1107 = vmul.f32 %v1082, %v1090
    %v1108 = vld [vmem:[%s3] sm:$0x1]
    %v1110 = vlaneseq
    %v1111 = vshrl.u32 %v1110, 7
    %v1112 = vsub.s32 0, %v1111
    %v1113 = vrot.slane %v1108, %v1112
    %v1115 = vadd.f32 %v1092, %v1113
    %v1116 = vadd.f32 %v1093, %v1113
    %v1117 = vadd.f32 %v1094, %v1113
    %v1118 = vadd.f32 %v1095, %v1113
    %v1119 = vadd.f32 %v1096, %v1113
    %v1120 = vadd.f32 %v1097, %v1113
    %v1121 = vadd.f32 %v1098, %v1113
    %v1122 = vadd.f32 %v1099, %v1113
    %v1123 = vadd.f32 %v1100, %v1113
    %v1124 = vadd.f32 %v1101, %v1113
    %v1125 = vadd.f32 %v1102, %v1113
    %v1126 = vadd.f32 %v1103, %v1113
    %v1127 = vadd.f32 %v1104, %v1113
    %v1128 = vadd.f32 %v1105, %v1113
    %v1129 = vadd.f32 %v1106, %v1113
    %v1130 = vadd.f32 %v1107, %v1113
    %v1131 = vmin.f32 %v1115, 20.0
    %v1132 = vmin.f32 %v1116, 20.0
    %v1133 = vmin.f32 %v1117, 20.0
    %v1134 = vmin.f32 %v1118, 20.0
    %v1135 = vmin.f32 %v1119, 20.0
    %v1136 = vmin.f32 %v1120, 20.0
    %v1137 = vmin.f32 %v1121, 20.0
    %v1138 = vmin.f32 %v1122, 20.0
    %v1139 = vmin.f32 %v1123, 20.0
    %v1140 = vmin.f32 %v1124, 20.0
    %v1141 = vmin.f32 %v1125, 20.0
    %v1142 = vmin.f32 %v1126, 20.0
    %v1143 = vmin.f32 %v1127, 20.0
    %v1144 = vmin.f32 %v1128, 20.0
    %v1145 = vmin.f32 %v1129, 20.0
    %v1146 = vmin.f32 %v1130, 20.0
    %v1147 = vmul.f32 %v1131, 1.442695
    %v1148 = vpow.pop %v1147
    %v1149 = vmul.f32 %v1132, 1.442695
    %v1150 = vpow.pop %v1149
    %v1151 = vmul.f32 %v1133, 1.442695
    %v1152 = vpow.pop %v1151
    %v1153 = vmul.f32 %v1134, 1.442695
    %v1154 = vpow.pop %v1153
    %v1155 = vmul.f32 %v1135, 1.442695
    %v1156 = vpow.pop %v1155
    %v1157 = vmul.f32 %v1136, 1.442695
    %v1158 = vpow.pop %v1157
    %v1159 = vmul.f32 %v1137, 1.442695
    %v1160 = vpow.pop %v1159
    %v1161 = vmul.f32 %v1138, 1.442695
    %v1162 = vpow.pop %v1161
    %v1163 = vmul.f32 %v1139, 1.442695
    %v1164 = vpow.pop %v1163
    %v1165 = vmul.f32 %v1140, 1.442695
    %v1166 = vpow.pop %v1165
    %v1167 = vmul.f32 %v1141, 1.442695
    %v1168 = vpow.pop %v1167
    %v1169 = vmul.f32 %v1142, 1.442695
    %v1170 = vpow.pop %v1169
    %v1171 = vmul.f32 %v1143, 1.442695
    %v1172 = vpow.pop %v1171
    %v1173 = vmul.f32 %v1144, 1.442695
    %v1174 = vpow.pop %v1173
    %v1175 = vmul.f32 %v1145, 1.442695
    %v1176 = vpow.pop %v1175
    %v1177 = vmul.f32 %v1146, 1.442695
    %v1178 = vpow.pop %v1177
    %v1179 = vadd.f32 %v1148, 2.0
    %v1180 = vadd.f32 %v1150, 2.0
    %v1181 = vadd.f32 %v1152, 2.0
    %v1182 = vadd.f32 %v1154, 2.0
    %v1183 = vadd.f32 %v1156, 2.0
    %v1184 = vadd.f32 %v1158, 2.0
    %v1185 = vadd.f32 %v1160, 2.0
    %v1186 = vadd.f32 %v1162, 2.0
    %v1187 = vadd.f32 %v1164, 2.0
    %v1188 = vadd.f32 %v1166, 2.0
    %v1189 = vadd.f32 %v1168, 2.0
    %v1190 = vadd.f32 %v1170, 2.0
    %v1191 = vadd.f32 %v1172, 2.0
    %v1192 = vadd.f32 %v1174, 2.0
    %v1193 = vadd.f32 %v1176, 2.0
    %v1194 = vadd.f32 %v1178, 2.0
    %v1195 = vmul.f32 %v1148, %v1179
    %v1196 = vmul.f32 %v1150, %v1180
    %v1197 = vmul.f32 %v1152, %v1181
    %v1198 = vmul.f32 %v1154, %v1182
    %v1199 = vmul.f32 %v1156, %v1183
    %v1200 = vmul.f32 %v1158, %v1184
    %v1201 = vmul.f32 %v1160, %v1185
    %v1202 = vmul.f32 %v1162, %v1186
    %v1203 = vmul.f32 %v1164, %v1187
    %v1204 = vmul.f32 %v1166, %v1188
    %v1205 = vmul.f32 %v1168, %v1189
    %v1206 = vmul.f32 %v1170, %v1190
    %v1207 = vmul.f32 %v1172, %v1191
    %v1208 = vmul.f32 %v1174, %v1192
    %v1209 = vmul.f32 %v1176, %v1193
    %v1210 = vmul.f32 %v1178, %v1194
    %v1211 = vmul.f32 %v1115, %v1195
    %v1212 = vmul.f32 %v1116, %v1196
    %v1213 = vmul.f32 %v1117, %v1197
    %v1214 = vmul.f32 %v1118, %v1198
    %v1215 = vmul.f32 %v1119, %v1199
    %v1216 = vmul.f32 %v1120, %v1200
    %v1217 = vmul.f32 %v1121, %v1201
    %v1218 = vmul.f32 %v1122, %v1202
    %v1219 = vmul.f32 %v1123, %v1203
    %v1220 = vmul.f32 %v1124, %v1204
    %v1221 = vmul.f32 %v1125, %v1205
    %v1222 = vmul.f32 %v1126, %v1206
    %v1223 = vmul.f32 %v1127, %v1207
    %v1224 = vmul.f32 %v1128, %v1208
    %v1225 = vmul.f32 %v1129, %v1209
    %v1226 = vmul.f32 %v1130, %v1210
    %v1227 = vadd.f32 %v1195, 2.0
    %v1228 = vadd.f32 %v1196, 2.0
    %v1229 = vadd.f32 %v1197, 2.0
    %v1230 = vadd.f32 %v1198, 2.0
    %v1231 = vadd.f32 %v1199, 2.0
    %v1232 = vadd.f32 %v1200, 2.0
    %v1233 = vadd.f32 %v1201, 2.0
    %v1234 = vadd.f32 %v1202, 2.0
    %v1235 = vadd.f32 %v1203, 2.0
    %v1236 = vadd.f32 %v1204, 2.0
    %v1237 = vadd.f32 %v1205, 2.0
    %v1238 = vadd.f32 %v1206, 2.0
    %v1239 = vadd.f32 %v1207, 2.0
    %v1240 = vadd.f32 %v1208, 2.0
    %v1241 = vadd.f32 %v1209, 2.0
    %v1242 = vadd.f32 %v1210, 2.0
    %v1243 = vrcp.pop %v1227
    %v1244 = vrcp.pop %v1228
    %v1245 = vrcp.pop %v1229
    %v1246 = vrcp.pop %v1230
    %v1247 = vrcp.pop %v1231
    %v1248 = vrcp.pop %v1232
    %v1249 = vrcp.pop %v1233
    %v1250 = vrcp.pop %v1234
    %v1251 = vrcp.pop %v1235
    %v1252 = vrcp.pop %v1236
    %v1253 = vrcp.pop %v1237
    %v1254 = vrcp.pop %v1238
    %v1255 = vrcp.pop %v1239
    %v1256 = vrcp.pop %v1240
    %v1257 = vrcp.pop %v1241
    %v1258 = vrcp.pop %v1242
    %v1259 = vmul.f32 %v1211, %v1243
    %v1260 = vmul.f32 %v1212, %v1244
    %v1261 = vmul.f32 %v1213, %v1245
    %v1262 = vmul.f32 %v1214, %v1246
    %v1263 = vmul.f32 %v1215, %v1247
    %v1264 = vmul.f32 %v1216, %v1248
    %v1265 = vmul.f32 %v1217, %v1249
    %v1266 = vmul.f32 %v1218, %v1250
    %v1267 = vmul.f32 %v1219, %v1251
    %v1268 = vmul.f32 %v1220, %v1252
    %v1269 = vmul.f32 %v1221, %v1253
    %v1270 = vmul.f32 %v1222, %v1254
    %v1271 = vmul.f32 %v1223, %v1255
    %v1272 = vmul.f32 %v1224, %v1256
    %v1273 = vmul.f32 %v1225, %v1257
    %v1274 = vmul.f32 %v1226, %v1258
    %1275 = vst [vmem:[#allocation3] sm:$0xff] 0.0
    %1276 = vst [vmem:[#allocation3 + $0x8] sm:$0x3] 0.0
    %1277 = vst [vmem:[#allocation3 + $0x10] sm:$0xff] 0.0
    %1278 = vst [vmem:[#allocation3 + $0x18] sm:$0x3] 0.0
    %1279 = vst [vmem:[#allocation3 + $0x20] sm:$0xff] 0.0
    %1280 = vst [vmem:[#allocation3 + $0x28] sm:$0x3] 0.0
    %1281 = vst [vmem:[#allocation3 + $0x30] sm:$0xff] 0.0
    %1282 = vst [vmem:[#allocation3 + $0x38] sm:$0x3] 0.0
    %1283 = vst [vmem:[#allocation3 + $0x40] sm:$0xff] 0.0
    %1284 = vst [vmem:[#allocation3 + $0x48] sm:$0x3] 0.0
    %1285 = vst [vmem:[#allocation3 + $0x50] sm:$0xff] 0.0
    %1286 = vst [vmem:[#allocation3 + $0x58] sm:$0x3] 0.0
    %1287 = vst [vmem:[#allocation3 + $0x60] sm:$0xff] 0.0
    %1288 = vst [vmem:[#allocation3 + $0x68] sm:$0x3] 0.0
    %1289 = vst [vmem:[#allocation3 + $0x70] sm:$0xff] 0.0
    %1290 = vst [vmem:[#allocation3 + $0x78] sm:$0x3] 0.0
    %1291 = vst [vmem:[#allocation3 + $0x80] sm:$0xff] 0.0
    %1292 = vst [vmem:[#allocation3 + $0x88] sm:$0x3] 0.0
    %1293 = vst [vmem:[#allocation3 + $0x90] sm:$0xff] 0.0
    %1294 = vst [vmem:[#allocation3 + $0x98] sm:$0x3] 0.0
    %1295 = vst [vmem:[#allocation3 + $0xa0] sm:$0xff] 0.0
    %1296 = vst [vmem:[#allocation3 + $0xa8] sm:$0x3] 0.0
    %1297 = vst [vmem:[#allocation3 + $0xb0] sm:$0xff] 0.0
    %1298 = vst [vmem:[#allocation3 + $0xb8] sm:$0x3] 0.0
    %1299 = vst [vmem:[#allocation3 + $0xc0] sm:$0xff] 0.0
    %1300 = vst [vmem:[#allocation3 + $0xc8] sm:$0x3] 0.0
    %1301 = vst [vmem:[#allocation3 + $0xd0] sm:$0xff] 0.0
    %1302 = vst [vmem:[#allocation3 + $0xd8] sm:$0x3] 0.0
    %1303 = vst [vmem:[#allocation3 + $0xe0] sm:$0xff] 0.0
    %1304 = vst [vmem:[#allocation3 + $0xe8] sm:$0x3] 0.0
    %1305 = vst [vmem:[#allocation3 + $0xf0] sm:$0xff] 0.0
    %1306 = vst [vmem:[#allocation3 + $0xf8] sm:$0x3] 0.0
    %1307 = vst [vmem:[#allocation3 + $0x100] sm:$0xff] 0.0
    %1308 = vst [vmem:[#allocation3 + $0x108] sm:$0x3] 0.0
    %1309 = vst [vmem:[#allocation3 + $0x110] sm:$0xff] 0.0
    %1310 = vst [vmem:[#allocation3 + $0x118] sm:$0x3] 0.0
    %1311 = vst [vmem:[#allocation3 + $0x120] sm:$0xff] 0.0
    %1312 = vst [vmem:[#allocation3 + $0x128] sm:$0x3] 0.0
    %1313 = vst [vmem:[#allocation3 + $0x130] sm:$0xff] 0.0
    %1314 = vst [vmem:[#allocation3 + $0x138] sm:$0x3] 0.0
    %v1315 = vpack.c.bf16 %v1260, %v1259
    %v1316 = vpack.c.bf16 %v1262, %v1261
    %v1317 = vpack.c.bf16 %v1264, %v1263
    %v1318 = vpack.c.bf16 %v1266, %v1265
    %v1319 = vpack.c.bf16 %v1268, %v1267
    %v1320 = vpack.c.bf16 %v1270, %v1269
    %v1321 = vpack.c.bf16 %v1272, %v1271
    %v1322 = vpack.c.bf16 %v1274, %v1273
    %v1323 = vld [vmem:[%s4] sm:$0xf]
    %v1324 = vld [vmem:[%s4 + $0x4] sm:$0xf]
    %v1325 = vld [vmem:[%s4 + $0x8] sm:$0xf]
    %v1326 = vld [vmem:[%s4 + $0xc] sm:$0xf]
    %v1327 = vld [vmem:[%s4 + $0x10] sm:$0xf]
    %v1328 = vld [vmem:[%s4 + $0x14] sm:$0xf]
    %v1329 = vld [vmem:[%s4 + $0x18] sm:$0xf]
    %v1330 = vld [vmem:[%s4 + $0x1c] sm:$0xf]
    %v1331 = vld [vmem:[%s4 + $0x20] sm:$0xf]
    %v1332 = vld [vmem:[%s4 + $0x24] sm:$0xf]
    %v1333 = vld [vmem:[%s4 + $0x28] sm:$0xf]
    %v1334 = vld [vmem:[%s4 + $0x2c] sm:$0xf]
    %v1335 = vld [vmem:[%s4 + $0x30] sm:$0xf]
    %v1336 = vld [vmem:[%s4 + $0x34] sm:$0xf]
    %v1337 = vld [vmem:[%s4 + $0x38] sm:$0xf]
    %v1338 = vld [vmem:[%s4 + $0x3c] sm:$0xf]
    %v1355 = vunpack.c.l.b16 %v1323
    %v1356 = vunpack.c.l.b16 %v1324
    %v1357 = vunpack.c.l.b16 %v1325
    %v1358 = vunpack.c.l.b16 %v1326
    %v1359 = vunpack.c.l.b16 %v1327
    %v1360 = vunpack.c.l.b16 %v1328
    %v1361 = vunpack.c.l.b16 %v1329
    %v1362 = vunpack.c.l.b16 %v1330
    %v1363 = vunpack.c.l.b16 %v1331
    %v1364 = vunpack.c.l.b16 %v1332
    %v1365 = vunpack.c.l.b16 %v1333
    %v1366 = vunpack.c.l.b16 %v1334
    %v1367 = vunpack.c.l.b16 %v1335
    %v1368 = vunpack.c.l.b16 %v1336
    %v1369 = vunpack.c.l.b16 %v1337
    %v1370 = vunpack.c.l.b16 %v1338
    %v1371 = vpack.c.b16 %v1356, %v1355
    %v1372 = vpack.c.b16 %v1358, %v1357
    %v1373 = vpack.c.b16 %v1360, %v1359
    %v1374 = vpack.c.b16 %v1362, %v1361
    %v1375 = vpack.c.b16 %v1364, %v1363
    %v1376 = vpack.c.b16 %v1366, %v1365
    %v1377 = vpack.c.b16 %v1368, %v1367
    %v1378 = vpack.c.b16 %v1370, %v1369
    %1387 = vmatprep.subr.bf16.mxu0 0
    %1388 = vmatpush1.bf16.msra.mxu0 %v1371
    %1389 = vmatprep.subr.bf16.mxu0 0
    %1390 = vmatpush1.bf16.msra.mxu0 %v1372
    %1391 = vmatprep.subr.bf16.mxu0 0
    %1392 = vmatpush1.bf16.msra.mxu0 %v1373
    %1393 = vmatprep.subr.bf16.mxu0 0
    %1394 = vmatpush1.bf16.msra.mxu0 %v1374
    %1395 = vmatprep.subr.bf16.mxu0 0
    %1396 = vmatpush1.bf16.msra.mxu0 %v1375
    %1397 = vmatprep.subr.bf16.mxu0 0
    %1398 = vmatpush1.bf16.msra.mxu0 %v1376
    %1399 = vmatprep.subr.bf16.mxu0 0
    %1400 = vmatpush1.bf16.msra.mxu0 %v1377
    %1401 = vmatprep.subr.bf16.mxu0 0
    %1402 = vmatpush1.bf16.msra.mxu0 %v1378
    %1403 = vmatprep.subr.bf16.mxu0 0
    %1404 = vmatpush1.bf16.msra.mxu0 0
    %1405 = vmatprep.subr.bf16.mxu0 0
    %1406 = vmatpush1.bf16.msra.mxu0 0
    %1407 = vmatprep.subr.bf16.mxu0 0
    %1408 = vmatpush1.bf16.msra.mxu0 0
    %1409 = vmatprep.subr.bf16.mxu0 0
    %1410 = vmatpush1.bf16.msra.mxu0 0
    %1411 = vmatprep.subr.bf16.mxu0 0
    %1412 = vmatpush1.bf16.msra.mxu0 0
    %1413 = vmatprep.subr.bf16.mxu0 0
    %1414 = vmatpush1.bf16.msra.mxu0 0
    %1415 = vmatprep.subr.bf16.mxu0 0
    %1416 = vmatpush1.bf16.msra.mxu0 0
    %1417 = vmatprep.subr.bf16.mxu0 0
    %1418 = vmatpush1.bf16.msra.mxu0 0
    %1419 = vmatprep.mubr.bf16.mxu0 0
    %1420 = vmatmul.mubr.bf16.gmra.mrb[0].mxu0 %v1315
    %v1421 = vpop.f32.mrb[0].mxu0
    %v1422 = vadd.f32 0.0, %v1421
    %v1423 = vpop.f32.mrb[0].mxu0
    %v1424 = vpop.f32.mrb[0].mxu0
    %v1425 = vadd.f32 0.0, %v1424
    %v1426 = vpop.f32.mrb[0].mxu0
    %1427 = vmatprep.mubr.bf16.mxu0 0
    %1428 = vmatmul.mubr.bf16.gmra.mrb[0].mxu0 %v1316
    %v1429 = vpop.f32.mrb[0].mxu0
    %v1430 = vadd.f32 0.0, %v1429
    %v1431 = vpop.f32.mrb[0].mxu0
    %v1432 = vpop.f32.mrb[0].mxu0
    %v1433 = vadd.f32 0.0, %v1432
    %v1434 = vpop.f32.mrb[0].mxu0
    %1435 = vmatprep.mubr.bf16.mxu0 0
    %1436 = vmatmul.mubr.bf16.gmra.mrb[0].mxu0 %v1317
    %v1437 = vpop.f32.mrb[0].mxu0
    %v1438 = vadd.f32 0.0, %v1437
    %v1439 = vpop.f32.mrb[0].mxu0
    %v1440 = vpop.f32.mrb[0].mxu0
    %v1441 = vadd.f32 0.0, %v1440
    %v1442 = vpop.f32.mrb[0].mxu0
    %1443 = vmatprep.mubr.bf16.mxu0 0
    %1444 = vmatmul.mubr.bf16.gmra.mrb[0].mxu0 %v1318
    %v1445 = vpop.f32.mrb[0].mxu0
    %v1446 = vadd.f32 0.0, %v1445
    %v1447 = vpop.f32.mrb[0].mxu0
    %v1448 = vpop.f32.mrb[0].mxu0
    %v1449 = vadd.f32 0.0, %v1448
    %v1450 = vpop.f32.mrb[0].mxu0
    %1451 = vmatprep.mubr.bf16.mxu0 0
    %1452 = vmatmul.mubr.bf16.gmra.mrb[0].mxu0 %v1319
    %v1453 = vpop.f32.mrb[0].mxu0
    %v1454 = vadd.f32 0.0, %v1453
    %v1455 = vpop.f32.mrb[0].mxu0
    %v1456 = vpop.f32.mrb[0].mxu0
    %v1457 = vadd.f32 0.0, %v1456
    %v1458 = vpop.f32.mrb[0].mxu0
    %1459 = vmatprep.mubr.bf16.mxu0 0
    %1460 = vmatmul.mubr.bf16.gmra.mrb[0].mxu0 %v1320
    %v1461 = vpop.f32.mrb[0].mxu0
    %v1462 = vadd.f32 0.0, %v1461
    %v1463 = vpop.f32.mrb[0].mxu0
    %v1464 = vpop.f32.mrb[0].mxu0
    %v1465 = vadd.f32 0.0, %v1464
    %v1466 = vpop.f32.mrb[0].mxu0
    %1467 = vmatprep.mubr.bf16.mxu0 0
    %1468 = vmatmul.mubr.bf16.gmra.mrb[0].mxu0 %v1321
    %v1469 = vpop.f32.mrb[0].mxu0
    %v1470 = vadd.f32 0.0, %v1469
    %v1471 = vpop.f32.mrb[0].mxu0
    %v1472 = vpop.f32.mrb[0].mxu0
    %v1473 = vadd.f32 0.0, %v1472
    %v1474 = vpop.f32.mrb[0].mxu0
    %1475 = vmatprep.mubr.bf16.mxu0 0
    %1476 = vmatmul.mubr.bf16.gmra.mrb[0].mxu0 %v1322
    %v1477 = vpop.f32.mrb[0].mxu0
    %v1478 = vadd.f32 0.0, %v1477
    %v1479 = vpop.f32.mrb[0].mxu0
    %v1480 = vpop.f32.mrb[0].mxu0
    %v1481 = vadd.f32 0.0, %v1480
    %v1482 = vpop.f32.mrb[0].mxu0
    %1483 = vdwg.mxu0
    %v1484 = vld [vmem:[%s5] sm:$0x1]
    %v1486 = vlaneseq
    %v1487 = vshrl.u32 %v1486, 7
    %v1488 = vsub.s32 0, %v1487
    %v1489 = vrot.slane %v1484, %v1488
    %v1491 = vmul.f32 %v1422, %v1489
    %v1492 = vmul.f32 %v1425, %v1489
    %v1493 = vmul.f32 %v1430, %v1489
    %v1494 = vmul.f32 %v1433, %v1489
    %v1495 = vmul.f32 %v1438, %v1489
    %v1496 = vmul.f32 %v1441, %v1489
    %v1497 = vmul.f32 %v1446, %v1489
    %v1498 = vmul.f32 %v1449, %v1489
    %v1499 = vmul.f32 %v1454, %v1489
    %v1500 = vmul.f32 %v1457, %v1489
    %v1501 = vmul.f32 %v1462, %v1489
    %v1502 = vmul.f32 %v1465, %v1489
    %v1503 = vmul.f32 %v1470, %v1489
    %v1504 = vmul.f32 %v1473, %v1489
    %v1505 = vmul.f32 %v1478, %v1489
    %v1506 = vmul.f32 %v1481, %v1489
    %v1507 = vld [vmem:[%s6] sm:$0x1]
    %v1509 = vlaneseq
    %v1510 = vshrl.u32 %v1509, 7
    %v1511 = vsub.s32 0, %v1510
    %v1512 = vrot.slane %v1507, %v1511
    %v1514 = vadd.f32 %v1491, %v1512
    %v1515 = vadd.f32 %v1492, %v1512
    %v1516 = vadd.f32 %v1493, %v1512
    %v1517 = vadd.f32 %v1494, %v1512
    %v1518 = vadd.f32 %v1495, %v1512
    %v1519 = vadd.f32 %v1496, %v1512
    %v1520 = vadd.f32 %v1497, %v1512
    %v1521 = vadd.f32 %v1498, %v1512
    %v1522 = vadd.f32 %v1499, %v1512
    %v1523 = vadd.f32 %v1500, %v1512
    %v1524 = vadd.f32 %v1501, %v1512
    %v1525 = vadd.f32 %v1502, %v1512
    %v1526 = vadd.f32 %v1503, %v1512
    %v1527 = vadd.f32 %v1504, %v1512
    %v1528 = vadd.f32 %v1505, %v1512
    %v1529 = vadd.f32 %v1506, %v1512
    %v1530 = vmin.f32 %v1514, 20.0
    %v1531 = vmin.f32 %v1515, 20.0
    %v1532 = vmin.f32 %v1516, 20.0
    %v1533 = vmin.f32 %v1517, 20.0
    %v1534 = vmin.f32 %v1518, 20.0
    %v1535 = vmin.f32 %v1519, 20.0
    %v1536 = vmin.f32 %v1520, 20.0
    %v1537 = vmin.f32 %v1521, 20.0
    %v1538 = vmin.f32 %v1522, 20.0
    %v1539 = vmin.f32 %v1523, 20.0
    %v1540 = vmin.f32 %v1524, 20.0
    %v1541 = vmin.f32 %v1525, 20.0
    %v1542 = vmin.f32 %v1526, 20.0
    %v1543 = vmin.f32 %v1527, 20.0
    %v1544 = vmin.f32 %v1528, 20.0
    %v1545 = vmin.f32 %v1529, 20.0
    %v1546 = vmul.f32 %v1530, 1.442695
    %v1547 = vpow.pop %v1546
    %v1548 = vmul.f32 %v1531, 1.442695
    %v1549 = vpow.pop %v1548
    %v1550 = vmul.f32 %v1532, 1.442695
    %v1551 = vpow.pop %v1550
    %v1552 = vmul.f32 %v1533, 1.442695
    %v1553 = vpow.pop %v1552
    %v1554 = vmul.f32 %v1534, 1.442695
    %v1555 = vpow.pop %v1554
    %v1556 = vmul.f32 %v1535, 1.442695
    %v1557 = vpow.pop %v1556
    %v1558 = vmul.f32 %v1536, 1.442695
    %v1559 = vpow.pop %v1558
    %v1560 = vmul.f32 %v1537, 1.442695
    %v1561 = vpow.pop %v1560
    %v1562 = vmul.f32 %v1538, 1.442695
    %v1563 = vpow.pop %v1562
    %v1564 = vmul.f32 %v1539, 1.442695
    %v1565 = vpow.pop %v1564
    %v1566 = vmul.f32 %v1540, 1.442695
    %v1567 = vpow.pop %v1566
    %v1568 = vmul.f32 %v1541, 1.442695
    %v1569 = vpow.pop %v1568
    %v1570 = vmul.f32 %v1542, 1.442695
    %v1571 = vpow.pop %v1570
    %v1572 = vmul.f32 %v1543, 1.442695
    %v1573 = vpow.pop %v1572
    %v1574 = vmul.f32 %v1544, 1.442695
    %v1575 = vpow.pop %v1574
    %v1576 = vmul.f32 %v1545, 1.442695
    %v1577 = vpow.pop %v1576
    %v1578 = vadd.f32 %v1547, 2.0
    %v1579 = vadd.f32 %v1549, 2.0
    %v1580 = vadd.f32 %v1551, 2.0
    %v1581 = vadd.f32 %v1553, 2.0
    %v1582 = vadd.f32 %v1555, 2.0
    %v1583 = vadd.f32 %v1557, 2.0
    %v1584 = vadd.f32 %v1559, 2.0
    %v1585 = vadd.f32 %v1561, 2.0
    %v1586 = vadd.f32 %v1563, 2.0
    %v1587 = vadd.f32 %v1565, 2.0
    %v1588 = vadd.f32 %v1567, 2.0
    %v1589 = vadd.f32 %v1569, 2.0
    %v1590 = vadd.f32 %v1571, 2.0
    %v1591 = vadd.f32 %v1573, 2.0
    %v1592 = vadd.f32 %v1575, 2.0
    %v1593 = vadd.f32 %v1577, 2.0
    %v1594 = vmul.f32 %v1547, %v1578
    %v1595 = vmul.f32 %v1549, %v1579
    %v1596 = vmul.f32 %v1551, %v1580
    %v1597 = vmul.f32 %v1553, %v1581
    %v1598 = vmul.f32 %v1555, %v1582
    %v1599 = vmul.f32 %v1557, %v1583
    %v1600 = vmul.f32 %v1559, %v1584
    %v1601 = vmul.f32 %v1561, %v1585
    %v1602 = vmul.f32 %v1563, %v1586
    %v1603 = vmul.f32 %v1565, %v1587
    %v1604 = vmul.f32 %v1567, %v1588
    %v1605 = vmul.f32 %v1569, %v1589
    %v1606 = vmul.f32 %v1571, %v1590
    %v1607 = vmul.f32 %v1573, %v1591
    %v1608 = vmul.f32 %v1575, %v1592
    %v1609 = vmul.f32 %v1577, %v1593
    %v1610 = vmul.f32 %v1514, %v1594
    %v1611 = vmul.f32 %v1515, %v1595
    %v1612 = vmul.f32 %v1516, %v1596
    %v1613 = vmul.f32 %v1517, %v1597
    %v1614 = vmul.f32 %v1518, %v1598
    %v1615 = vmul.f32 %v1519, %v1599
    %v1616 = vmul.f32 %v1520, %v1600
    %v1617 = vmul.f32 %v1521, %v1601
    %v1618 = vmul.f32 %v1522, %v1602
    %v1619 = vmul.f32 %v1523, %v1603
    %v1620 = vmul.f32 %v1524, %v1604
    %v1621 = vmul.f32 %v1525, %v1605
    %v1622 = vmul.f32 %v1526, %v1606
    %v1623 = vmul.f32 %v1527, %v1607
    %v1624 = vmul.f32 %v1528, %v1608
    %v1625 = vmul.f32 %v1529, %v1609
    %v1626 = vadd.f32 %v1594, 2.0
    %v1627 = vadd.f32 %v1595, 2.0
    %v1628 = vadd.f32 %v1596, 2.0
    %v1629 = vadd.f32 %v1597, 2.0
    %v1630 = vadd.f32 %v1598, 2.0
    %v1631 = vadd.f32 %v1599, 2.0
    %v1632 = vadd.f32 %v1600, 2.0
    %v1633 = vadd.f32 %v1601, 2.0
    %v1634 = vadd.f32 %v1602, 2.0
    %v1635 = vadd.f32 %v1603, 2.0
    %v1636 = vadd.f32 %v1604, 2.0
    %v1637 = vadd.f32 %v1605, 2.0
    %v1638 = vadd.f32 %v1606, 2.0
    %v1639 = vadd.f32 %v1607, 2.0
    %v1640 = vadd.f32 %v1608, 2.0
    %v1641 = vadd.f32 %v1609, 2.0
    %v1642 = vrcp.pop %v1626
    %v1643 = vrcp.pop %v1627
    %v1644 = vrcp.pop %v1628
    %v1645 = vrcp.pop %v1629
    %v1646 = vrcp.pop %v1630
    %v1647 = vrcp.pop %v1631
    %v1648 = vrcp.pop %v1632
    %v1649 = vrcp.pop %v1633
    %v1650 = vrcp.pop %v1634
    %v1651 = vrcp.pop %v1635
    %v1652 = vrcp.pop %v1636
    %v1653 = vrcp.pop %v1637
    %v1654 = vrcp.pop %v1638
    %v1655 = vrcp.pop %v1639
    %v1656 = vrcp.pop %v1640
    %v1657 = vrcp.pop %v1641
    %v1658 = vmul.f32 %v1610, %v1642
    %v1659 = vmul.f32 %v1611, %v1643
    %v1660 = vmul.f32 %v1612, %v1644
    %v1661 = vmul.f32 %v1613, %v1645
    %v1662 = vmul.f32 %v1614, %v1646
    %v1663 = vmul.f32 %v1615, %v1647
    %v1664 = vmul.f32 %v1616, %v1648
    %v1665 = vmul.f32 %v1617, %v1649
    %v1666 = vmul.f32 %v1618, %v1650
    %v1667 = vmul.f32 %v1619, %v1651
    %v1668 = vmul.f32 %v1620, %v1652
    %v1669 = vmul.f32 %v1621, %v1653
    %v1670 = vmul.f32 %v1622, %v1654
    %v1671 = vmul.f32 %v1623, %v1655
    %v1672 = vmul.f32 %v1624, %v1656
    %v1673 = vmul.f32 %v1625, %v1657
    %s1674 = scalar_lea.vmem [#allocation3], 16
    %1675 = vst [vmem:[%s1674 + $0x1] sm:$0xff] %v1658
    %1676 = vst [vmem:[%s1674 + $0x11] sm:$0xff] %v1659
    %1677 = vst [vmem:[%s1674 + $0x21] sm:$0xff] %v1660
    %1678 = vst [vmem:[%s1674 + $0x31] sm:$0xff] %v1661
    %1679 = vst [vmem:[%s1674 + $0x41] sm:$0xff] %v1662
    %1680 = vst [vmem:[%s1674 + $0x51] sm:$0xff] %v1663
    %1681 = vst [vmem:[%s1674 + $0x61] sm:$0xff] %v1664
    %1682 = vst [vmem:[%s1674 + $0x71] sm:$0xff] %v1665
    %1683 = vst [vmem:[%s1674 + $0xa1] sm:$0xff] %v1666
    %1684 = vst [vmem:[%s1674 + $0xb1] sm:$0xff] %v1667
    %1685 = vst [vmem:[%s1674 + $0xc1] sm:$0xff] %v1668
    %1686 = vst [vmem:[%s1674 + $0xd1] sm:$0xff] %v1669
    %1687 = vst [vmem:[%s1674 + $0xe1] sm:$0xff] %v1670
    %1688 = vst [vmem:[%s1674 + $0xf1] sm:$0xff] %v1671
    %1689 = vst [vmem:[%s1674 + $0x101] sm:$0xff] %v1672
    %1690 = vst [vmem:[%s1674 + $0x111] sm:$0xff] %v1673
    %v1691 = vld [vmem:[#allocation3] sm:$0xff]
    %v1692 = vld [vmem:[#allocation3 + $0x8] sm:$0x3]
    %v1693 = vld [vmem:[#allocation3 + $0x10] sm:$0xff]
    %v1694 = vld [vmem:[#allocation3 + $0x18] sm:$0x3]
    %v1695 = vld [vmem:[#allocation3 + $0x20] sm:$0xff]
    %v1696 = vld [vmem:[#allocation3 + $0x28] sm:$0x3]
    %v1697 = vld [vmem:[#allocation3 + $0x30] sm:$0xff]
    %v1698 = vld [vmem:[#allocation3 + $0x38] sm:$0x3]
    %v1699 = vld [vmem:[#allocation3 + $0x40] sm:$0xff]
    %v1700 = vld [vmem:[#allocation3 + $0x48] sm:$0x3]
    %v1701 = vld [vmem:[#allocation3 + $0x50] sm:$0xff]
    %v1702 = vld [vmem:[#allocation3 + $0x58] sm:$0x3]
    %v1703 = vld [vmem:[#allocation3 + $0x60] sm:$0xff]
    %v1704 = vld [vmem:[#allocation3 + $0x68] sm:$0x3]
    %v1705 = vld [vmem:[#allocation3 + $0x70] sm:$0xff]
    %v1706 = vld [vmem:[#allocation3 + $0x78] sm:$0x3]
    %v1707 = vld [vmem:[#allocation3 + $0x80] sm:$0xff]
    %v1708 = vld [vmem:[#allocation3 + $0x88] sm:$0x3]
    %v1709 = vld [vmem:[#allocation3 + $0x90] sm:$0xff]
    %v1710 = vld [vmem:[#allocation3 + $0x98] sm:$0x3]
    %v1727 = vrot.slane %v1691, 1
    %v1728 = vrot.slane %v1692, 1
    %v1729 = vsel %vm171, %v1727, %v1728
    %v1730 = vrot.slane %v1693, 1
    %v1731 = vrot.slane %v1694, 1
    %v1732 = vsel %vm171, %v1730, %v1731
    %v1733 = vrot.slane %v1695, 1
    %v1734 = vrot.slane %v1696, 1
    %v1735 = vsel %vm171, %v1733, %v1734
    %v1736 = vrot.slane %v1697, 1
    %v1737 = vrot.slane %v1698, 1
    %v1738 = vsel %vm171, %v1736, %v1737
    %v1739 = vrot.slane %v1699, 1
    %v1740 = vrot.slane %v1700, 1
    %v1741 = vsel %vm171, %v1739, %v1740
    %v1742 = vrot.slane %v1701, 1
    %v1743 = vrot.slane %v1702, 1
    %v1744 = vsel %vm171, %v1742, %v1743
    %v1745 = vrot.slane %v1703, 1
    %v1746 = vrot.slane %v1704, 1
    %v1747 = vsel %vm171, %v1745, %v1746
    %v1748 = vrot.slane %v1705, 1
    %v1749 = vrot.slane %v1706, 1
    %v1750 = vsel %vm171, %v1748, %v1749
    %vm1759 = vcmask 1045504
    %v1760 = vrot.slane %v1691, 2
    %v1761 = vrot.slane %v1692, 2
    %v1762 = vsel %vm1759, %v1760, %v1761
    %v1763 = vrot.slane %v1693, 2
    %v1764 = vrot.slane %v1694, 2
    %v1765 = vsel %vm1759, %v1763, %v1764
    %v1766 = vrot.slane %v1695, 2
    %v1767 = vrot.slane %v1696, 2
    %v1768 = vsel %vm1759, %v1766, %v1767
    %v1769 = vrot.slane %v1697, 2
    %v1770 = vrot.slane %v1698, 2
    %v1771 = vsel %vm1759, %v1769, %v1770
    %v1772 = vrot.slane %v1699, 2
    %v1773 = vrot.slane %v1700, 2
    %v1774 = vsel %vm1759, %v1772, %v1773
    %v1775 = vrot.slane %v1701, 2
    %v1776 = vrot.slane %v1702, 2
    %v1777 = vsel %vm1759, %v1775, %v1776
    %v1778 = vrot.slane %v1703, 2
    %v1779 = vrot.slane %v1704, 2
    %v1780 = vsel %vm1759, %v1778, %v1779
    %v1781 = vrot.slane %v1705, 2
    %v1782 = vrot.slane %v1706, 2
    %v1783 = vsel %vm1759, %v1781, %v1782
    %v1794 = vrot.slane %v1707, 1
    %v1795 = vrot.slane %v1708, 1
    %v1796 = vsel %vm171, %v1794, %v1795
    %v1798 = vrot.slane %v1707, 2
    %v1799 = vrot.slane %v1708, 2
    %v1800 = vsel %vm1759, %v1798, %v1799
    %v1804 = vrot.slane %v1709, 1
    %v1805 = vrot.slane %v1710, 1
    %v1806 = vsel %vm171, %v1804, %v1805
    %v1808 = vrot.slane %v1709, 2
    %v1809 = vrot.slane %v1710, 2
    %v1810 = vsel %vm1759, %v1808, %v1809
    %v1812 = vpack.c.bf16 %v1693, %v1691
    %v1813 = vpack.c.bf16 %v1732, %v1729
    %v1814 = vpack.c.bf16 %v1765, %v1762
    %v1815 = vpack.c.bf16 %v1695, %v1693
    %v1816 = vpack.c.bf16 %v1735, %v1732
    %v1817 = vpack.c.bf16 %v1768, %v1765
    %v1818 = vpack.c.bf16 %v1697, %v1695
    %v1819 = vpack.c.bf16 %v1738, %v1735
    %v1820 = vpack.c.bf16 %v1771, %v1768
    %v1821 = vpack.c.bf16 %v1699, %v1697
    %v1822 = vpack.c.bf16 %v1741, %v1738
    %v1823 = vpack.c.bf16 %v1774, %v1771
    %v1824 = vpack.c.bf16 %v1701, %v1699
    %v1825 = vpack.c.bf16 %v1744, %v1741
    %v1826 = vpack.c.bf16 %v1777, %v1774
    %v1827 = vpack.c.bf16 %v1703, %v1701
    %v1828 = vpack.c.bf16 %v1747, %v1744
    %v1829 = vpack.c.bf16 %v1780, %v1777
    %v1830 = vpack.c.bf16 %v1705, %v1703
    %v1831 = vpack.c.bf16 %v1750, %v1747
    %v1832 = vpack.c.bf16 %v1783, %v1780
    %v1833 = vpack.c.bf16 %v1707, %v1705
    %v1834 = vpack.c.bf16 %v1796, %v1750
    %v1835 = vpack.c.bf16 %v1800, %v1783
    %v1836 = vpack.c.bf16 %v1709, %v1707
    %v1837 = vpack.c.bf16 %v1806, %v1796
    %v1838 = vpack.c.bf16 %v1810, %v1800
    %s1839 = scalar_lea.vmem [#allocation3], 160
    %v1840 = vld [vmem:[%s1839] sm:$0xff]
    %v1841 = vld [vmem:[%s1839 + $0x8] sm:$0x3]
    %v1842 = vld [vmem:[%s1839 + $0x10] sm:$0xff]
    %v1843 = vld [vmem:[%s1839 + $0x18] sm:$0x3]
    %v1844 = vld [vmem:[%s1839 + $0x20] sm:$0xff]
    %v1845 = vld [vmem:[%s1839 + $0x28] sm:$0x3]
    %v1846 = vld [vmem:[%s1839 + $0x30] sm:$0xff]
    %v1847 = vld [vmem:[%s1839 + $0x38] sm:$0x3]
    %v1848 = vld [vmem:[%s1839 + $0x40] sm:$0xff]
    %v1849 = vld [vmem:[%s1839 + $0x48] sm:$0x3]
    %v1850 = vld [vmem:[%s1839 + $0x50] sm:$0xff]
    %v1851 = vld [vmem:[%s1839 + $0x58] sm:$0x3]
    %v1852 = vld [vmem:[%s1839 + $0x60] sm:$0xff]
    %v1853 = vld [vmem:[%s1839 + $0x68] sm:$0x3]
    %v1854 = vld [vmem:[%s1839 + $0x70] sm:$0xff]
    %v1855 = vld [vmem:[%s1839 + $0x78] sm:$0x3]
    %v1856 = vld [vmem:[%s1839 + $0x80] sm:$0xff]
    %v1857 = vld [vmem:[%s1839 + $0x88] sm:$0x3]
    %v1858 = vld [vmem:[%s1839 + $0x90] sm:$0xff]
    %v1859 = vld [vmem:[%s1839 + $0x98] sm:$0x3]
    %v1876 = vrot.slane %v1840, 1
    %v1877 = vrot.slane %v1841, 1
    %v1878 = vsel %vm171, %v1876, %v1877
    %v1879 = vrot.slane %v1842, 1
    %v1880 = vrot.slane %v1843, 1
    %v1881 = vsel %vm171, %v1879, %v1880
    %v1882 = vrot.slane %v1844, 1
    %v1883 = vrot.slane %v1845, 1
    %v1884 = vsel %vm171, %v1882, %v1883
    %v1885 = vrot.slane %v1846, 1
    %v1886 = vrot.slane %v1847, 1
    %v1887 = vsel %vm171, %v1885, %v1886
    %v1888 = vrot.slane %v1848, 1
    %v1889 = vrot.slane %v1849, 1
    %v1890 = vsel %vm171, %v1888, %v1889
    %v1891 = vrot.slane %v1850, 1
    %v1892 = vrot.slane %v1851, 1
    %v1893 = vsel %vm171, %v1891, %v1892
    %v1894 = vrot.slane %v1852, 1
    %v1895 = vrot.slane %v1853, 1
    %v1896 = vsel %vm171, %v1894, %v1895
    %v1897 = vrot.slane %v1854, 1
    %v1898 = vrot.slane %v1855, 1
    %v1899 = vsel %vm171, %v1897, %v1898
    %v1908 = vrot.slane %v1840, 2
    %v1909 = vrot.slane %v1841, 2
    %v1910 = vsel %vm1759, %v1908, %v1909
    %v1911 = vrot.slane %v1842, 2
    %v1912 = vrot.slane %v1843, 2
    %v1913 = vsel %vm1759, %v1911, %v1912
    %v1914 = vrot.slane %v1844, 2
    %v1915 = vrot.slane %v1845, 2
    %v1916 = vsel %vm1759, %v1914, %v1915
    %v1917 = vrot.slane %v1846, 2
    %v1918 = vrot.slane %v1847, 2
    %v1919 = vsel %vm1759, %v1917, %v1918
    %v1920 = vrot.slane %v1848, 2
    %v1921 = vrot.slane %v1849, 2
    %v1922 = vsel %vm1759, %v1920, %v1921
    %v1923 = vrot.slane %v1850, 2
    %v1924 = vrot.slane %v1851, 2
    %v1925 = vsel %vm1759, %v1923, %v1924
    %v1926 = vrot.slane %v1852, 2
    %v1927 = vrot.slane %v1853, 2
    %v1928 = vsel %vm1759, %v1926, %v1927
    %v1929 = vrot.slane %v1854, 2
    %v1930 = vrot.slane %v1855, 2
    %v1931 = vsel %vm1759, %v1929, %v1930
    %v1942 = vrot.slane %v1856, 1
    %v1943 = vrot.slane %v1857, 1
    %v1944 = vsel %vm171, %v1942, %v1943
    %v1946 = vrot.slane %v1856, 2
    %v1947 = vrot.slane %v1857, 2
    %v1948 = vsel %vm1759, %v1946, %v1947
    %v1952 = vrot.slane %v1858, 1
    %v1953 = vrot.slane %v1859, 1
    %v1954 = vsel %vm171, %v1952, %v1953
    %v1956 = vrot.slane %v1858, 2
    %v1957 = vrot.slane %v1859, 2
    %v1958 = vsel %vm1759, %v1956, %v1957
    %v1960 = vpack.c.bf16 %v1842, %v1840
    %v1961 = vpack.c.bf16 %v1881, %v1878
    %v1962 = vpack.c.bf16 %v1913, %v1910
    %v1963 = vpack.c.bf16 %v1844, %v1842
    %v1964 = vpack.c.bf16 %v1884, %v1881
    %v1965 = vpack.c.bf16 %v1916, %v1913
    %v1966 = vpack.c.bf16 %v1846, %v1844
    %v1967 = vpack.c.bf16 %v1887, %v1884
    %v1968 = vpack.c.bf16 %v1919, %v1916
    %v1969 = vpack.c.bf16 %v1848, %v1846
    %v1970 = vpack.c.bf16 %v1890, %v1887
    %v1971 = vpack.c.bf16 %v1922, %v1919
    %v1972 = vpack.c.bf16 %v1850, %v1848
    %v1973 = vpack.c.bf16 %v1893, %v1890
    %v1974 = vpack.c.bf16 %v1925, %v1922
    %v1975 = vpack.c.bf16 %v1852, %v1850
    %v1976 = vpack.c.bf16 %v1896, %v1893
    %v1977 = vpack.c.bf16 %v1928, %v1925
    %v1978 = vpack.c.bf16 %v1854, %v1852
    %v1979 = vpack.c.bf16 %v1899, %v1896
    %v1980 = vpack.c.bf16 %v1931, %v1928
    %v1981 = vpack.c.bf16 %v1856, %v1854
    %v1982 = vpack.c.bf16 %v1944, %v1899
    %v1983 = vpack.c.bf16 %v1948, %v1931
    %v1984 = vpack.c.bf16 %v1858, %v1856
    %v1985 = vpack.c.bf16 %v1954, %v1944
    %v1986 = vpack.c.bf16 %v1958, %v1948
    %v1987 = vld [vmem:[%s7] sm:$0xf]
    %v1988 = vld [vmem:[%s7 + $0x4] sm:$0xf]
    %v1989 = vld [vmem:[%s7 + $0x8] sm:$0xf]
    %v1990 = vld [vmem:[%s7 + $0xc] sm:$0xf]
    %v1991 = vld [vmem:[%s7 + $0x10] sm:$0xf]
    %v1992 = vld [vmem:[%s7 + $0x14] sm:$0xf]
    %v1993 = vld [vmem:[%s7 + $0x18] sm:$0xf]
    %v1994 = vld [vmem:[%s7 + $0x1c] sm:$0xf]
    %v1995 = vld [vmem:[%s7 + $0x20] sm:$0xf]
    %v1996 = vld [vmem:[%s7 + $0x24] sm:$0xf]
    %v1997 = vld [vmem:[%s7 + $0x28] sm:$0xf]
    %v1998 = vld [vmem:[%s7 + $0x2c] sm:$0xf]
    %v1999 = vld [vmem:[%s7 + $0x30] sm:$0xf]
    %v2000 = vld [vmem:[%s7 + $0x34] sm:$0xf]
    %v2001 = vld [vmem:[%s7 + $0x38] sm:$0xf]
    %v2002 = vld [vmem:[%s7 + $0x3c] sm:$0xf]
    %v2003 = vld [vmem:[%s7 + $0x40] sm:$0xf]
    %v2004 = vld [vmem:[%s7 + $0x44] sm:$0xf]
    %v2005 = vld [vmem:[%s7 + $0x48] sm:$0xf]
    %v2006 = vld [vmem:[%s7 + $0x4c] sm:$0xf]
    %v2007 = vld [vmem:[%s7 + $0x50] sm:$0xf]
    %v2008 = vld [vmem:[%s7 + $0x54] sm:$0xf]
    %v2009 = vld [vmem:[%s7 + $0x58] sm:$0xf]
    %v2010 = vld [vmem:[%s7 + $0x5c] sm:$0xf]
    %v2011 = vld [vmem:[%s7 + $0x60] sm:$0xf]
    %v2012 = vld [vmem:[%s7 + $0x64] sm:$0xf]
    %v2013 = vld [vmem:[%s7 + $0x68] sm:$0xf]
    %v2014 = vld [vmem:[%s7 + $0x6c] sm:$0xf]
    %v2015 = vld [vmem:[%s7 + $0x70] sm:$0xf]
    %v2016 = vld [vmem:[%s7 + $0x74] sm:$0xf]
    %v2017 = vld [vmem:[%s7 + $0x78] sm:$0xf]
    %v2018 = vld [vmem:[%s7 + $0x7c] sm:$0xf]
    %v2019 = vld [vmem:[%s7 + $0x80] sm:$0xf]
    %v2020 = vld [vmem:[%s7 + $0x84] sm:$0xf]
    %v2021 = vld [vmem:[%s7 + $0x88] sm:$0xf]
    %v2022 = vld [vmem:[%s7 + $0x8c] sm:$0xf]
    %v2023 = vld [vmem:[%s7 + $0x90] sm:$0xf]
    %v2024 = vld [vmem:[%s7 + $0x94] sm:$0xf]
    %v2025 = vld [vmem:[%s7 + $0x98] sm:$0xf]
    %v2026 = vld [vmem:[%s7 + $0x9c] sm:$0xf]
    %v2027 = vld [vmem:[%s7 + $0xa0] sm:$0xf]
    %v2028 = vld [vmem:[%s7 + $0xa4] sm:$0xf]
    %v2029 = vld [vmem:[%s7 + $0xa8] sm:$0xf]
    %v2030 = vld [vmem:[%s7 + $0xac] sm:$0xf]
    %v2031 = vld [vmem:[%s7 + $0xb0] sm:$0xf]
    %v2032 = vld [vmem:[%s7 + $0xb4] sm:$0xf]
    %v2033 = vld [vmem:[%s7 + $0xb8] sm:$0xf]
    %v2034 = vld [vmem:[%s7 + $0xbc] sm:$0xf]
    %v2035 = vld [vmem:[%s7 + $0xc0] sm:$0xf]
    %v2036 = vld [vmem:[%s7 + $0xc4] sm:$0xf]
    %v2037 = vld [vmem:[%s7 + $0xc8] sm:$0xf]
    %v2038 = vld [vmem:[%s7 + $0xcc] sm:$0xf]
    %v2039 = vld [vmem:[%s7 + $0xd0] sm:$0xf]
    %v2040 = vld [vmem:[%s7 + $0xd4] sm:$0xf]
    %v2041 = vld [vmem:[%s7 + $0xd8] sm:$0xf]
    %v2042 = vld [vmem:[%s7 + $0xdc] sm:$0xf]
    %v2043 = vld [vmem:[%s7 + $0xe0] sm:$0xf]
    %v2044 = vld [vmem:[%s7 + $0xe4] sm:$0xf]
    %v2045 = vld [vmem:[%s7 + $0xe8] sm:$0xf]
    %v2046 = vld [vmem:[%s7 + $0xec] sm:$0xf]
    %v2047 = vld [vmem:[%s7 + $0xf0] sm:$0xf]
    %v2048 = vld [vmem:[%s7 + $0xf4] sm:$0xf]
    %v2049 = vld [vmem:[%s7 + $0xf8] sm:$0xf]
    %v2050 = vld [vmem:[%s7 + $0xfc] sm:$0xf]
    %v2051 = vld [vmem:[%s7 + $0x100] sm:$0xf]
    %v2052 = vld [vmem:[%s7 + $0x104] sm:$0xf]
    %v2053 = vld [vmem:[%s7 + $0x108] sm:$0xf]
    %v2054 = vld [vmem:[%s7 + $0x10c] sm:$0xf]
    %v2055 = vld [vmem:[%s7 + $0x110] sm:$0xf]
    %v2056 = vld [vmem:[%s7 + $0x114] sm:$0xf]
    %v2057 = vld [vmem:[%s7 + $0x118] sm:$0xf]
    %v2058 = vld [vmem:[%s7 + $0x11c] sm:$0xf]
    %v2059 = vld [vmem:[%s7 + $0x120] sm:$0xf]
    %v2060 = vld [vmem:[%s7 + $0x124] sm:$0xf]
    %v2061 = vld [vmem:[%s7 + $0x128] sm:$0xf]
    %v2062 = vld [vmem:[%s7 + $0x12c] sm:$0xf]
    %v2063 = vld [vmem:[%s7 + $0x130] sm:$0xf]
    %v2064 = vld [vmem:[%s7 + $0x134] sm:$0xf]
    %v2065 = vld [vmem:[%s7 + $0x138] sm:$0xf]
    %v2066 = vld [vmem:[%s7 + $0x13c] sm:$0xf]
    %v2067 = vld [vmem:[%s7 + $0x140] sm:$0xf]
    %v2068 = vld [vmem:[%s7 + $0x144] sm:$0xf]
    %v2069 = vld [vmem:[%s7 + $0x148] sm:$0xf]
    %v2070 = vld [vmem:[%s7 + $0x14c] sm:$0xf]
    %v2071 = vld [vmem:[%s7 + $0x150] sm:$0xf]
    %v2072 = vld [vmem:[%s7 + $0x154] sm:$0xf]
    %v2073 = vld [vmem:[%s7 + $0x158] sm:$0xf]
    %v2074 = vld [vmem:[%s7 + $0x15c] sm:$0xf]
    %v2075 = vld [vmem:[%s7 + $0x160] sm:$0xf]
    %v2076 = vld [vmem:[%s7 + $0x164] sm:$0xf]
    %v2077 = vld [vmem:[%s7 + $0x168] sm:$0xf]
    %v2078 = vld [vmem:[%s7 + $0x16c] sm:$0xf]
    %v2079 = vld [vmem:[%s7 + $0x170] sm:$0xf]
    %v2080 = vld [vmem:[%s7 + $0x174] sm:$0xf]
    %v2081 = vld [vmem:[%s7 + $0x178] sm:$0xf]
    %v2082 = vld [vmem:[%s7 + $0x17c] sm:$0xf]
    %v2083 = vld [vmem:[%s7 + $0x180] sm:$0xf]
    %v2084 = vld [vmem:[%s7 + $0x184] sm:$0xf]
    %v2085 = vld [vmem:[%s7 + $0x188] sm:$0xf]
    %v2086 = vld [vmem:[%s7 + $0x18c] sm:$0xf]
    %v2087 = vld [vmem:[%s7 + $0x190] sm:$0xf]
    %v2088 = vld [vmem:[%s7 + $0x194] sm:$0xf]
    %v2089 = vld [vmem:[%s7 + $0x198] sm:$0xf]
    %v2090 = vld [vmem:[%s7 + $0x19c] sm:$0xf]
    %v2091 = vld [vmem:[%s7 + $0x1a0] sm:$0xf]
    %v2092 = vld [vmem:[%s7 + $0x1a4] sm:$0xf]
    %v2093 = vld [vmem:[%s7 + $0x1a8] sm:$0xf]
    %v2094 = vld [vmem:[%s7 + $0x1ac] sm:$0xf]
    %v2095 = vld [vmem:[%s7 + $0x1b0] sm:$0xf]
    %v2096 = vld [vmem:[%s7 + $0x1b4] sm:$0xf]
    %v2097 = vld [vmem:[%s7 + $0x1b8] sm:$0xf]
    %v2098 = vld [vmem:[%s7 + $0x1bc] sm:$0xf]
    %v2099 = vld [vmem:[%s7 + $0x1c0] sm:$0xf]
    %v2100 = vld [vmem:[%s7 + $0x1c4] sm:$0xf]
    %v2101 = vld [vmem:[%s7 + $0x1c8] sm:$0xf]
    %v2102 = vld [vmem:[%s7 + $0x1cc] sm:$0xf]
    %v2103 = vld [vmem:[%s7 + $0x1d0] sm:$0xf]
    %v2104 = vld [vmem:[%s7 + $0x1d4] sm:$0xf]
    %v2105 = vld [vmem:[%s7 + $0x1d8] sm:$0xf]
    %v2106 = vld [vmem:[%s7 + $0x1dc] sm:$0xf]
    %v2107 = vld [vmem:[%s7 + $0x1e0] sm:$0xf]
    %v2108 = vld [vmem:[%s7 + $0x1e4] sm:$0xf]
    %v2109 = vld [vmem:[%s7 + $0x1e8] sm:$0xf]
    %v2110 = vld [vmem:[%s7 + $0x1ec] sm:$0xf]
    %v2111 = vld [vmem:[%s7 + $0x1f0] sm:$0xf]
    %v2112 = vld [vmem:[%s7 + $0x1f4] sm:$0xf]
    %v2113 = vld [vmem:[%s7 + $0x1f8] sm:$0xf]
    %v2114 = vld [vmem:[%s7 + $0x1fc] sm:$0xf]
    %v2115 = vld [vmem:[%s7 + $0x200] sm:$0xf]
    %v2116 = vld [vmem:[%s7 + $0x204] sm:$0xf]
    %v2117 = vld [vmem:[%s7 + $0x208] sm:$0xf]
    %v2118 = vld [vmem:[%s7 + $0x20c] sm:$0xf]
    %v2119 = vld [vmem:[%s7 + $0x210] sm:$0xf]
    %v2120 = vld [vmem:[%s7 + $0x214] sm:$0xf]
    %v2121 = vld [vmem:[%s7 + $0x218] sm:$0xf]
    %v2122 = vld [vmem:[%s7 + $0x21c] sm:$0xf]
    %v2123 = vld [vmem:[%s7 + $0x220] sm:$0xf]
    %v2124 = vld [vmem:[%s7 + $0x224] sm:$0xf]
    %v2125 = vld [vmem:[%s7 + $0x228] sm:$0xf]
    %v2126 = vld [vmem:[%s7 + $0x22c] sm:$0xf]
    %v2127 = vld [vmem:[%s7 + $0x230] sm:$0xf]
    %v2128 = vld [vmem:[%s7 + $0x234] sm:$0xf]
    %v2129 = vld [vmem:[%s7 + $0x238] sm:$0xf]
    %v2130 = vld [vmem:[%s7 + $0x23c] sm:$0xf]
    %v2275 = vunpack.c.l.b16 %v1987
    %v2276 = vunpack.c.l.b16 %v1988
    %v2277 = vunpack.c.l.b16 %v1989
    %v2278 = vunpack.c.l.b16 %v1990
    %v2279 = vunpack.c.l.b16 %v1991
    %v2280 = vunpack.c.l.b16 %v1992
    %v2281 = vunpack.c.l.b16 %v1993
    %v2282 = vunpack.c.l.b16 %v1994
    %v2283 = vunpack.c.l.b16 %v1995
    %v2284 = vunpack.c.l.b16 %v1996
    %v2285 = vunpack.c.l.b16 %v1997
    %v2286 = vunpack.c.l.b16 %v1998
    %v2287 = vunpack.c.l.b16 %v1999
    %v2288 = vunpack.c.l.b16 %v2000
    %v2289 = vunpack.c.l.b16 %v2001
    %v2290 = vunpack.c.l.b16 %v2002
    %v2291 = vunpack.c.l.b16 %v2003
    %v2292 = vunpack.c.l.b16 %v2004
    %v2293 = vunpack.c.l.b16 %v2005
    %v2294 = vunpack.c.l.b16 %v2006
    %v2295 = vunpack.c.l.b16 %v2007
    %v2296 = vunpack.c.l.b16 %v2008
    %v2297 = vunpack.c.l.b16 %v2009
    %v2298 = vunpack.c.l.b16 %v2010
    %v2299 = vunpack.c.l.b16 %v2011
    %v2300 = vunpack.c.l.b16 %v2012
    %v2301 = vunpack.c.l.b16 %v2013
    %v2302 = vunpack.c.l.b16 %v2014
    %v2303 = vunpack.c.l.b16 %v2015
    %v2304 = vunpack.c.l.b16 %v2016
    %v2305 = vunpack.c.l.b16 %v2017
    %v2306 = vunpack.c.l.b16 %v2018
    %v2307 = vunpack.c.l.b16 %v2019
    %v2308 = vunpack.c.l.b16 %v2020
    %v2309 = vunpack.c.l.b16 %v2021
    %v2310 = vunpack.c.l.b16 %v2022
    %v2311 = vunpack.c.l.b16 %v2023
    %v2312 = vunpack.c.l.b16 %v2024
    %v2313 = vunpack.c.l.b16 %v2025
    %v2314 = vunpack.c.l.b16 %v2026
    %v2315 = vunpack.c.l.b16 %v2027
    %v2316 = vunpack.c.l.b16 %v2028
    %v2317 = vunpack.c.l.b16 %v2029
    %v2318 = vunpack.c.l.b16 %v2030
    %v2319 = vunpack.c.l.b16 %v2031
    %v2320 = vunpack.c.l.b16 %v2032
    %v2321 = vunpack.c.l.b16 %v2033
    %v2322 = vunpack.c.l.b16 %v2034
    %v2323 = vunpack.c.l.b16 %v2035
    %v2324 = vunpack.c.l.b16 %v2036
    %v2325 = vunpack.c.l.b16 %v2037
    %v2326 = vunpack.c.l.b16 %v2038
    %v2327 = vunpack.c.l.b16 %v2039
    %v2328 = vunpack.c.l.b16 %v2040
    %v2329 = vunpack.c.l.b16 %v2041
    %v2330 = vunpack.c.l.b16 %v2042
    %v2331 = vunpack.c.l.b16 %v2043
    %v2332 = vunpack.c.l.b16 %v2044
    %v2333 = vunpack.c.l.b16 %v2045
    %v2334 = vunpack.c.l.b16 %v2046
    %v2335 = vunpack.c.l.b16 %v2047
    %v2336 = vunpack.c.l.b16 %v2048
    %v2337 = vunpack.c.l.b16 %v2049
    %v2338 = vunpack.c.l.b16 %v2050
    %v2339 = vunpack.c.l.b16 %v2051
    %v2340 = vunpack.c.l.b16 %v2052
    %v2341 = vunpack.c.l.b16 %v2053
    %v2342 = vunpack.c.l.b16 %v2054
    %v2343 = vunpack.c.l.b16 %v2055
    %v2344 = vunpack.c.l.b16 %v2056
    %v2345 = vunpack.c.l.b16 %v2057
    %v2346 = vunpack.c.l.b16 %v2058
    %v2347 = vunpack.c.l.b16 %v2059
    %v2348 = vunpack.c.l.b16 %v2060
    %v2349 = vunpack.c.l.b16 %v2061
    %v2350 = vunpack.c.l.b16 %v2062
    %v2351 = vunpack.c.l.b16 %v2063
    %v2352 = vunpack.c.l.b16 %v2064
    %v2353 = vunpack.c.l.b16 %v2065
    %v2354 = vunpack.c.l.b16 %v2066
    %v2355 = vunpack.c.l.b16 %v2067
    %v2356 = vunpack.c.l.b16 %v2068
    %v2357 = vunpack.c.l.b16 %v2069
    %v2358 = vunpack.c.l.b16 %v2070
    %v2359 = vunpack.c.l.b16 %v2071
    %v2360 = vunpack.c.l.b16 %v2072
    %v2361 = vunpack.c.l.b16 %v2073
    %v2362 = vunpack.c.l.b16 %v2074
    %v2363 = vunpack.c.l.b16 %v2075
    %v2364 = vunpack.c.l.b16 %v2076
    %v2365 = vunpack.c.l.b16 %v2077
    %v2366 = vunpack.c.l.b16 %v2078
    %v2367 = vunpack.c.l.b16 %v2079
    %v2368 = vunpack.c.l.b16 %v2080
    %v2369 = vunpack.c.l.b16 %v2081
    %v2370 = vunpack.c.l.b16 %v2082
    %v2371 = vunpack.c.l.b16 %v2083
    %v2372 = vunpack.c.l.b16 %v2084
    %v2373 = vunpack.c.l.b16 %v2085
    %v2374 = vunpack.c.l.b16 %v2086
    %v2375 = vunpack.c.l.b16 %v2087
    %v2376 = vunpack.c.l.b16 %v2088
    %v2377 = vunpack.c.l.b16 %v2089
    %v2378 = vunpack.c.l.b16 %v2090
    %v2379 = vunpack.c.l.b16 %v2091
    %v2380 = vunpack.c.l.b16 %v2092
    %v2381 = vunpack.c.l.b16 %v2093
    %v2382 = vunpack.c.l.b16 %v2094
    %v2383 = vunpack.c.l.b16 %v2095
    %v2384 = vunpack.c.l.b16 %v2096
    %v2385 = vunpack.c.l.b16 %v2097
    %v2386 = vunpack.c.l.b16 %v2098
    %v2387 = vunpack.c.l.b16 %v2099
    %v2388 = vunpack.c.l.b16 %v2100
    %v2389 = vunpack.c.l.b16 %v2101
    %v2390 = vunpack.c.l.b16 %v2102
    %v2391 = vunpack.c.l.b16 %v2103
    %v2392 = vunpack.c.l.b16 %v2104
    %v2393 = vunpack.c.l.b16 %v2105
    %v2394 = vunpack.c.l.b16 %v2106
    %v2395 = vunpack.c.l.b16 %v2107
    %v2396 = vunpack.c.l.b16 %v2108
    %v2397 = vunpack.c.l.b16 %v2109
    %v2398 = vunpack.c.l.b16 %v2110
    %v2399 = vunpack.c.l.b16 %v2111
    %v2400 = vunpack.c.l.b16 %v2112
    %v2401 = vunpack.c.l.b16 %v2113
    %v2402 = vunpack.c.l.b16 %v2114
    %v2403 = vunpack.c.l.b16 %v2115
    %v2404 = vunpack.c.l.b16 %v2116
    %v2405 = vunpack.c.l.b16 %v2117
    %v2406 = vunpack.c.l.b16 %v2118
    %v2407 = vunpack.c.l.b16 %v2119
    %v2408 = vunpack.c.l.b16 %v2120
    %v2409 = vunpack.c.l.b16 %v2121
    %v2410 = vunpack.c.l.b16 %v2122
    %v2411 = vunpack.c.l.b16 %v2123
    %v2412 = vunpack.c.l.b16 %v2124
    %v2413 = vunpack.c.l.b16 %v2125
    %v2414 = vunpack.c.l.b16 %v2126
    %v2415 = vunpack.c.l.b16 %v2127
    %v2416 = vunpack.c.l.b16 %v2128
    %v2417 = vunpack.c.l.b16 %v2129
    %v2418 = vunpack.c.l.b16 %v2130
    %v2419 = vpack.c.b16 %v2276, %v2275
    %v2420 = vpack.c.b16 %v2278, %v2277
    %v2421 = vpack.c.b16 %v2280, %v2279
    %v2422 = vpack.c.b16 %v2282, %v2281
    %v2423 = vpack.c.b16 %v2284, %v2283
    %v2424 = vpack.c.b16 %v2286, %v2285
    %v2425 = vpack.c.b16 %v2288, %v2287
    %v2426 = vpack.c.b16 %v2290, %v2289
    %v2427 = vpack.c.b16 %v2292, %v2291
    %v2428 = vpack.c.b16 %v2294, %v2293
    %v2429 = vpack.c.b16 %v2296, %v2295
    %v2430 = vpack.c.b16 %v2298, %v2297
    %v2431 = vpack.c.b16 %v2300, %v2299
    %v2432 = vpack.c.b16 %v2302, %v2301
    %v2433 = vpack.c.b16 %v2304, %v2303
    %v2434 = vpack.c.b16 %v2306, %v2305
    %v2435 = vpack.c.b16 %v2308, %v2307
    %v2436 = vpack.c.b16 %v2310, %v2309
    %v2437 = vpack.c.b16 %v2312, %v2311
    %v2438 = vpack.c.b16 %v2314, %v2313
    %v2439 = vpack.c.b16 %v2316, %v2315
    %v2440 = vpack.c.b16 %v2318, %v2317
    %v2441 = vpack.c.b16 %v2320, %v2319
    %v2442 = vpack.c.b16 %v2322, %v2321
    %v2443 = vpack.c.b16 %v2324, %v2323
    %v2444 = vpack.c.b16 %v2326, %v2325
    %v2445 = vpack.c.b16 %v2328, %v2327
    %v2446 = vpack.c.b16 %v2330, %v2329
    %v2447 = vpack.c.b16 %v2332, %v2331
    %v2448 = vpack.c.b16 %v2334, %v2333
    %v2449 = vpack.c.b16 %v2336, %v2335
    %v2450 = vpack.c.b16 %v2338, %v2337
    %v2451 = vpack.c.b16 %v2340, %v2339
    %v2452 = vpack.c.b16 %v2342, %v2341
    %v2453 = vpack.c.b16 %v2344, %v2343
    %v2454 = vpack.c.b16 %v2346, %v2345
    %v2455 = vpack.c.b16 %v2348, %v2347
    %v2456 = vpack.c.b16 %v2350, %v2349
    %v2457 = vpack.c.b16 %v2352, %v2351
    %v2458 = vpack.c.b16 %v2354, %v2353
    %v2459 = vpack.c.b16 %v2356, %v2355
    %v2460 = vpack.c.b16 %v2358, %v2357
    %v2461 = vpack.c.b16 %v2360, %v2359
    %v2462 = vpack.c.b16 %v2362, %v2361
    %v2463 = vpack.c.b16 %v2364, %v2363
    %v2464 = vpack.c.b16 %v2366, %v2365
    %v2465 = vpack.c.b16 %v2368, %v2367
    %v2466 = vpack.c.b16 %v2370, %v2369
    %v2467 = vpack.c.b16 %v2372, %v2371
    %v2468 = vpack.c.b16 %v2374, %v2373
    %v2469 = vpack.c.b16 %v2376, %v2375
    %v2470 = vpack.c.b16 %v2378, %v2377
    %v2471 = vpack.c.b16 %v2380, %v2379
    %v2472 = vpack.c.b16 %v2382, %v2381
    %v2473 = vpack.c.b16 %v2384, %v2383
    %v2474 = vpack.c.b16 %v2386, %v2385
    %v2475 = vpack.c.b16 %v2388, %v2387
    %v2476 = vpack.c.b16 %v2390, %v2389
    %v2477 = vpack.c.b16 %v2392, %v2391
    %v2478 = vpack.c.b16 %v2394, %v2393
    %v2479 = vpack.c.b16 %v2396, %v2395
    %v2480 = vpack.c.b16 %v2398, %v2397
    %v2481 = vpack.c.b16 %v2400, %v2399
    %v2482 = vpack.c.b16 %v2402, %v2401
    %v2483 = vpack.c.b16 %v2404, %v2403
    %v2484 = vpack.c.b16 %v2406, %v2405
    %v2485 = vpack.c.b16 %v2408, %v2407
    %v2486 = vpack.c.b16 %v2410, %v2409
    %v2487 = vpack.c.b16 %v2412, %v2411
    %v2488 = vpack.c.b16 %v2414, %v2413
    %v2489 = vpack.c.b16 %v2416, %v2415
    %v2490 = vpack.c.b16 %v2418, %v2417
    %2563 = vmatprep.subr.bf16.mxu0 0
    %2564 = vmatpush1.bf16.msra.mxu0 %v2419
    %2565 = vmatprep.subr.bf16.mxu0 0
    %2566 = vmatpush1.bf16.msra.mxu0 %v2420
    %2567 = vmatprep.subr.bf16.mxu0 0
    %2568 = vmatpush1.bf16.msra.mxu0 %v2421
    %2569 = vmatprep.subr.bf16.mxu0 0
    %2570 = vmatpush1.bf16.msra.mxu0 %v2422
    %2571 = vmatprep.subr.bf16.mxu0 0
    %2572 = vmatpush1.bf16.msra.mxu0 %v2423
    %2573 = vmatprep.subr.bf16.mxu0 0
    %2574 = vmatpush1.bf16.msra.mxu0 %v2424
    %2575 = vmatprep.subr.bf16.mxu0 0
    %2576 = vmatpush1.bf16.msra.mxu0 %v2425
    %2577 = vmatprep.subr.bf16.mxu0 0
    %2578 = vmatpush1.bf16.msra.mxu0 %v2426
    %2579 = vmatprep.subr.bf16.mxu0 0
    %2580 = vmatpush1.bf16.msra.mxu0 %v2427
    %2581 = vmatprep.subr.bf16.mxu0 0
    %2582 = vmatpush1.bf16.msra.mxu0 %v2428
    %2583 = vmatprep.subr.bf16.mxu0 0
    %2584 = vmatpush1.bf16.msra.mxu0 %v2429
    %2585 = vmatprep.subr.bf16.mxu0 0
    %2586 = vmatpush1.bf16.msra.mxu0 %v2430
    %2587 = vmatprep.subr.bf16.mxu0 0
    %2588 = vmatpush1.bf16.msra.mxu0 %v2431
    %2589 = vmatprep.subr.bf16.mxu0 0
    %2590 = vmatpush1.bf16.msra.mxu0 %v2432
    %2591 = vmatprep.subr.bf16.mxu0 0
    %2592 = vmatpush1.bf16.msra.mxu0 %v2433
    %2593 = vmatprep.subr.bf16.mxu0 0
    %2594 = vmatpush1.bf16.msra.mxu0 %v2434
    %2595 = vmatprep.mubr.bf16.mxu0 %v1813
    %2596 = vmatmul.mubr.bf16.gmra.mrb[0].mxu0 %v1812
    %v2597 = vpop.f32.mrb[0].mxu0
    %v2598 = vadd.f32 0.0, %v2597
    %v2599 = vpop.f32.mrb[0].mxu0
    %v2600 = vpop.f32.mrb[0].mxu0
    %v2601 = vadd.f32 0.0, %v2600
    %v2602 = vpop.f32.mrb[0].mxu0
    %2603 = vmatprep.mubr.bf16.mxu0 %v1819
    %2604 = vmatmul.mubr.bf16.gmra.mrb[0].mxu0 %v1818
    %v2605 = vpop.f32.mrb[0].mxu0
    %v2606 = vadd.f32 0.0, %v2605
    %v2607 = vpop.f32.mrb[0].mxu0
    %v2608 = vpop.f32.mrb[0].mxu0
    %v2609 = vadd.f32 0.0, %v2608
    %v2610 = vpop.f32.mrb[0].mxu0
    %2611 = vmatprep.mubr.bf16.mxu0 %v1825
    %2612 = vmatmul.mubr.bf16.gmra.mrb[0].mxu0 %v1824
    %v2613 = vpop.f32.mrb[0].mxu0
    %v2614 = vadd.f32 0.0, %v2613
    %v2615 = vpop.f32.mrb[0].mxu0
    %v2616 = vpop.f32.mrb[0].mxu0
    %v2617 = vadd.f32 0.0, %v2616
    %v2618 = vpop.f32.mrb[0].mxu0
    %2619 = vmatprep.mubr.bf16.mxu0 %v1831
    %2620 = vmatmul.mubr.bf16.gmra.mrb[0].mxu0 %v1830
    %v2621 = vpop.f32.mrb[0].mxu0
    %v2622 = vadd.f32 0.0, %v2621
    %v2623 = vpop.f32.mrb[0].mxu0
    %v2624 = vpop.f32.mrb[0].mxu0
    %v2625 = vadd.f32 0.0, %v2624
    %v2626 = vpop.f32.mrb[0].mxu0
    %2627 = vmatprep.mubr.bf16.mxu0 %v1961
    %2628 = vmatmul.mubr.bf16.gmra.mrb[0].mxu0 %v1960
    %v2629 = vpop.f32.mrb[0].mxu0
    %v2630 = vadd.f32 0.0, %v2629
    %v2631 = vpop.f32.mrb[0].mxu0
    %v2632 = vpop.f32.mrb[0].mxu0
    %v2633 = vadd.f32 0.0, %v2632
    %v2634 = vpop.f32.mrb[0].mxu0
    %2635 = vmatprep.mubr.bf16.mxu0 %v1967
    %2636 = vmatmul.mubr.bf16.gmra.mrb[0].mxu0 %v1966
    %v2637 = vpop.f32.mrb[0].mxu0
    %v2638 = vadd.f32 0.0, %v2637
    %v2639 = vpop.f32.mrb[0].mxu0
    %v2640 = vpop.f32.mrb[0].mxu0
    %v2641 = vadd.f32 0.0, %v2640
    %v2642 = vpop.f32.mrb[0].mxu0
    %2643 = vmatprep.mubr.bf16.mxu0 %v1973
    %2644 = vmatmul.mubr.bf16.gmra.mrb[0].mxu0 %v1972
    %v2645 = vpop.f32.mrb[0].mxu0
    %v2646 = vadd.f32 0.0, %v2645
    %v2647 = vpop.f32.mrb[0].mxu0
    %v2648 = vpop.f32.mrb[0].mxu0
    %v2649 = vadd.f32 0.0, %v2648
    %v2650 = vpop.f32.mrb[0].mxu0
    %2651 = vmatprep.mubr.bf16.mxu0 %v1979
    %2652 = vmatmul.mubr.bf16.gmra.mrb[0].mxu0 %v1978
    %v2653 = vpop.f32.mrb[0].mxu0
    %v2654 = vadd.f32 0.0, %v2653
    %v2655 = vpop.f32.mrb[0].mxu0
    %v2656 = vpop.f32.mrb[0].mxu0
    %v2657 = vadd.f32 0.0, %v2656
    %v2658 = vpop.f32.mrb[0].mxu0
    %2659 = vdwg.mxu0
    %2660 = vmatprep.subr.bf16.mxu0 0
    %2661 = vmatpush1.bf16.msra.mxu0 %v2435
    %2662 = vmatprep.subr.bf16.mxu0 0
    %2663 = vmatpush1.bf16.msra.mxu0 %v2436
    %2664 = vmatprep.subr.bf16.mxu0 0
    %2665 = vmatpush1.bf16.msra.mxu0 %v2437
    %2666 = vmatprep.subr.bf16.mxu0 0
    %2667 = vmatpush1.bf16.msra.mxu0 %v2438
    %2668 = vmatprep.subr.bf16.mxu0 0
    %2669 = vmatpush1.bf16.msra.mxu0 %v2439
    %2670 = vmatprep.subr.bf16.mxu0 0
    %2671 = vmatpush1.bf16.msra.mxu0 %v2440
    %2672 = vmatprep.subr.bf16.mxu0 0
    %2673 = vmatpush1.bf16.msra.mxu0 %v2441
    %2674 = vmatprep.subr.bf16.mxu0 0
    %2675 = vmatpush1.bf16.msra.mxu0 %v2442
    %2676 = vmatprep.subr.bf16.mxu0 0
    %2677 = vmatpush1.bf16.msra.mxu0 %v2443
    %2678 = vmatprep.subr.bf16.mxu0 0
    %2679 = vmatpush1.bf16.msra.mxu0 %v2444
    %2680 = vmatprep.subr.bf16.mxu0 0
    %2681 = vmatpush1.bf16.msra.mxu0 %v2445
    %2682 = vmatprep.subr.bf16.mxu0 0
    %2683 = vmatpush1.bf16.msra.mxu0 %v2446
    %2684 = vmatprep.subr.bf16.mxu0 0
    %2685 = vmatpush1.bf16.msra.mxu0 %v2447
    %2686 = vmatprep.subr.bf16.mxu0 0
    %2687 = vmatpush1.bf16.msra.mxu0 %v2448
    %2688 = vmatprep.subr.bf16.mxu0 0
    %2689 = vmatpush1.bf16.msra.mxu0 %v2449
    %2690 = vmatprep.subr.bf16.mxu0 0
    %2691 = vmatpush1.bf16.msra.mxu0 %v2450
    %2692 = vmatprep.mubr.bf16.mxu0 %v1815
    %2693 = vmatmul.mubr.bf16.gmra.mrb[0].mxu0 %v1814
    %v2694 = vpop.f32.mrb[0].mxu0
    %v2695 = vadd.f32 %v2598, %v2694
    %v2696 = vpop.f32.mrb[0].mxu0
    %v2697 = vpop.f32.mrb[0].mxu0
    %v2698 = vadd.f32 %v2601, %v2697
    %v2699 = vpop.f32.mrb[0].mxu0
    %2700 = vmatprep.mubr.bf16.mxu0 %v1821
    %2701 = vmatmul.mubr.bf16.gmra.mrb[0].mxu0 %v1820
    %v2702 = vpop.f32.mrb[0].mxu0
    %v2703 = vadd.f32 %v2606, %v2702
    %v2704 = vpop.f32.mrb[0].mxu0
    %v2705 = vpop.f32.mrb[0].mxu0
    %v2706 = vadd.f32 %v2609, %v2705
    %v2707 = vpop.f32.mrb[0].mxu0
    %2708 = vmatprep.mubr.bf16.mxu0 %v1827
    %2709 = vmatmul.mubr.bf16.gmra.mrb[0].mxu0 %v1826
    %v2710 = vpop.f32.mrb[0].mxu0
    %v2711 = vadd.f32 %v2614, %v2710
    %v2712 = vpop.f32.mrb[0].mxu0
    %v2713 = vpop.f32.mrb[0].mxu0
    %v2714 = vadd.f32 %v2617, %v2713
    %v2715 = vpop.f32.mrb[0].mxu0
    %2716 = vmatprep.mubr.bf16.mxu0 %v1833
    %2717 = vmatmul.mubr.bf16.gmra.mrb[0].mxu0 %v1832
    %v2718 = vpop.f32.mrb[0].mxu0
    %v2719 = vadd.f32 %v2622, %v2718
    %v2720 = vpop.f32.mrb[0].mxu0
    %v2721 = vpop.f32.mrb[0].mxu0
    %v2722 = vadd.f32 %v2625, %v2721
    %v2723 = vpop.f32.mrb[0].mxu0
    %2724 = vmatprep.mubr.bf16.mxu0 %v1963
    %2725 = vmatmul.mubr.bf16.gmra.mrb[0].mxu0 %v1962
    %v2726 = vpop.f32.mrb[0].mxu0
    %v2727 = vadd.f32 %v2630, %v2726
    %v2728 = vpop.f32.mrb[0].mxu0
    %v2729 = vpop.f32.mrb[0].mxu0
    %v2730 = vadd.f32 %v2633, %v2729
    %v2731 = vpop.f32.mrb[0].mxu0
    %2732 = vmatprep.mubr.bf16.mxu0 %v1969
    %2733 = vmatmul.mubr.bf16.gmra.mrb[0].mxu0 %v1968
    %v2734 = vpop.f32.mrb[0].mxu0
    %v2735 = vadd.f32 %v2638, %v2734
    %v2736 = vpop.f32.mrb[0].mxu0
    %v2737 = vpop.f32.mrb[0].mxu0
    %v2738 = vadd.f32 %v2641, %v2737
    %v2739 = vpop.f32.mrb[0].mxu0
    %2740 = vmatprep.mubr.bf16.mxu0 %v1975
    %2741 = vmatmul.mubr.bf16.gmra.mrb[0].mxu0 %v1974
    %v2742 = vpop.f32.mrb[0].mxu0
    %v2743 = vadd.f32 %v2646, %v2742
    %v2744 = vpop.f32.mrb[0].mxu0
    %v2745 = vpop.f32.mrb[0].mxu0
    %v2746 = vadd.f32 %v2649, %v2745
    %v2747 = vpop.f32.mrb[0].mxu0
    %2748 = vmatprep.mubr.bf16.mxu0 %v1981
    %2749 = vmatmul.mubr.bf16.gmra.mrb[0].mxu0 %v1980
    %v2750 = vpop.f32.mrb[0].mxu0
    %v2751 = vadd.f32 %v2654, %v2750
    %v2752 = vpop.f32.mrb[0].mxu0
    %v2753 = vpop.f32.mrb[0].mxu0
    %v2754 = vadd.f32 %v2657, %v2753
    %v2755 = vpop.f32.mrb[0].mxu0
    %2756 = vdwg.mxu0
    %2757 = vmatprep.subr.bf16.mxu0 0
    %2758 = vmatpush1.bf16.msra.mxu0 %v2451
    %2759 = vmatprep.subr.bf16.mxu0 0
    %2760 = vmatpush1.bf16.msra.mxu0 %v2452
    %2761 = vmatprep.subr.bf16.mxu0 0
    %2762 = vmatpush1.bf16.msra.mxu0 %v2453
    %2763 = vmatprep.subr.bf16.mxu0 0
    %2764 = vmatpush1.bf16.msra.mxu0 %v2454
    %2765 = vmatprep.subr.bf16.mxu0 0
    %2766 = vmatpush1.bf16.msra.mxu0 %v2455
    %2767 = vmatprep.subr.bf16.mxu0 0
    %2768 = vmatpush1.bf16.msra.mxu0 %v2456
    %2769 = vmatprep.subr.bf16.mxu0 0
    %2770 = vmatpush1.bf16.msra.mxu0 %v2457
    %2771 = vmatprep.subr.bf16.mxu0 0
    %2772 = vmatpush1.bf16.msra.mxu0 %v2458
    %2773 = vmatprep.subr.bf16.mxu0 0
    %2774 = vmatpush1.bf16.msra.mxu0 %v2459
    %2775 = vmatprep.subr.bf16.mxu0 0
    %2776 = vmatpush1.bf16.msra.mxu0 %v2460
    %2777 = vmatprep.subr.bf16.mxu0 0
    %2778 = vmatpush1.bf16.msra.mxu0 %v2461
    %2779 = vmatprep.subr.bf16.mxu0 0
    %2780 = vmatpush1.bf16.msra.mxu0 %v2462
    %2781 = vmatprep.subr.bf16.mxu0 0
    %2782 = vmatpush1.bf16.msra.mxu0 %v2463
    %2783 = vmatprep.subr.bf16.mxu0 0
    %2784 = vmatpush1.bf16.msra.mxu0 %v2464
    %2785 = vmatprep.subr.bf16.mxu0 0
    %2786 = vmatpush1.bf16.msra.mxu0 %v2465
    %2787 = vmatprep.subr.bf16.mxu0 0
    %2788 = vmatpush1.bf16.msra.mxu0 %v2466
    %2789 = vmatprep.mubr.bf16.mxu0 %v1817
    %2790 = vmatmul.mubr.bf16.gmra.mrb[0].mxu0 %v1816
    %v2791 = vpop.f32.mrb[0].mxu0
    %v2792 = vadd.f32 %v2695, %v2791
    %v2793 = vpop.f32.mrb[0].mxu0
    %v2794 = vpop.f32.mrb[0].mxu0
    %v2795 = vadd.f32 %v2698, %v2794
    %v2796 = vpop.f32.mrb[0].mxu0
    %2797 = vmatprep.mubr.bf16.mxu0 %v1823
    %2798 = vmatmul.mubr.bf16.gmra.mrb[0].mxu0 %v1822
    %v2799 = vpop.f32.mrb[0].mxu0
    %v2800 = vadd.f32 %v2703, %v2799
    %v2801 = vpop.f32.mrb[0].mxu0
    %v2802 = vpop.f32.mrb[0].mxu0
    %v2803 = vadd.f32 %v2706, %v2802
    %v2804 = vpop.f32.mrb[0].mxu0
    %2805 = vmatprep.mubr.bf16.mxu0 %v1829
    %2806 = vmatmul.mubr.bf16.gmra.mrb[0].mxu0 %v1828
    %v2807 = vpop.f32.mrb[0].mxu0
    %v2808 = vadd.f32 %v2711, %v2807
    %v2809 = vpop.f32.mrb[0].mxu0
    %v2810 = vpop.f32.mrb[0].mxu0
    %v2811 = vadd.f32 %v2714, %v2810
    %v2812 = vpop.f32.mrb[0].mxu0
    %2813 = vmatprep.mubr.bf16.mxu0 %v1835
    %2814 = vmatmul.mubr.bf16.gmra.mrb[0].mxu0 %v1834
    %v2815 = vpop.f32.mrb[0].mxu0
    %v2816 = vadd.f32 %v2719, %v2815
    %v2817 = vpop.f32.mrb[0].mxu0
    %v2818 = vpop.f32.mrb[0].mxu0
    %v2819 = vadd.f32 %v2722, %v2818
    %v2820 = vpop.f32.mrb[0].mxu0
    %2821 = vmatprep.mubr.bf16.mxu0 %v1965
    %2822 = vmatmul.mubr.bf16.gmra.mrb[0].mxu0 %v1964
    %v2823 = vpop.f32.mrb[0].mxu0
    %v2824 = vadd.f32 %v2727, %v2823
    %v2825 = vpop.f32.mrb[0].mxu0
    %v2826 = vpop.f32.mrb[0].mxu0
    %v2827 = vadd.f32 %v2730, %v2826
    %v2828 = vpop.f32.mrb[0].mxu0
    %2829 = vmatprep.mubr.bf16.mxu0 %v1971
    %2830 = vmatmul.mubr.bf16.gmra.mrb[0].mxu0 %v1970
    %v2831 = vpop.f32.mrb[0].mxu0
    %v2832 = vadd.f32 %v2735, %v2831
    %v2833 = vpop.f32.mrb[0].mxu0
    %v2834 = vpop.f32.mrb[0].mxu0
    %v2835 = vadd.f32 %v2738, %v2834
    %v2836 = vpop.f32.mrb[0].mxu0
    %2837 = vmatprep.mubr.bf16.mxu0 %v1977
    %2838 = vmatmul.mubr.bf16.gmra.mrb[0].mxu0 %v1976
    %v2839 = vpop.f32.mrb[0].mxu0
    %v2840 = vadd.f32 %v2743, %v2839
    %v2841 = vpop.f32.mrb[0].mxu0
    %v2842 = vpop.f32.mrb[0].mxu0
    %v2843 = vadd.f32 %v2746, %v2842
    %v2844 = vpop.f32.mrb[0].mxu0
    %2845 = vmatprep.mubr.bf16.mxu0 %v1983
    %2846 = vmatmul.mubr.bf16.gmra.mrb[0].mxu0 %v1982
    %v2847 = vpop.f32.mrb[0].mxu0
    %v2848 = vadd.f32 %v2751, %v2847
    %v2849 = vpop.f32.mrb[0].mxu0
    %v2850 = vpop.f32.mrb[0].mxu0
    %v2851 = vadd.f32 %v2754, %v2850
    %v2852 = vpop.f32.mrb[0].mxu0
    %2853 = vdwg.mxu0
    %2854 = vmatprep.subr.bf16.mxu0 0
    %2855 = vmatpush1.bf16.msra.mxu0 %v2467
    %2856 = vmatprep.subr.bf16.mxu0 0
    %2857 = vmatpush1.bf16.msra.mxu0 %v2468
    %2858 = vmatprep.subr.bf16.mxu0 0
    %2859 = vmatpush1.bf16.msra.mxu0 %v2469
    %2860 = vmatprep.subr.bf16.mxu0 0
    %2861 = vmatpush1.bf16.msra.mxu0 %v2470
    %2862 = vmatprep.subr.bf16.mxu0 0
    %2863 = vmatpush1.bf16.msra.mxu0 %v2471
    %2864 = vmatprep.subr.bf16.mxu0 0
    %2865 = vmatpush1.bf16.msra.mxu0 %v2472
    %2866 = vmatprep.subr.bf16.mxu0 0
    %2867 = vmatpush1.bf16.msra.mxu0 %v2473
    %2868 = vmatprep.subr.bf16.mxu0 0
    %2869 = vmatpush1.bf16.msra.mxu0 %v2474
    %2870 = vmatprep.subr.bf16.mxu0 0
    %2871 = vmatpush1.bf16.msra.mxu0 %v2475
    %2872 = vmatprep.subr.bf16.mxu0 0
    %2873 = vmatpush1.bf16.msra.mxu0 %v2476
    %2874 = vmatprep.subr.bf16.mxu0 0
    %2875 = vmatpush1.bf16.msra.mxu0 %v2477
    %2876 = vmatprep.subr.bf16.mxu0 0
    %2877 = vmatpush1.bf16.msra.mxu0 %v2478
    %2878 = vmatprep.subr.bf16.mxu0 0
    %2879 = vmatpush1.bf16.msra.mxu0 %v2479
    %2880 = vmatprep.subr.bf16.mxu0 0
    %2881 = vmatpush1.bf16.msra.mxu0 %v2480
    %2882 = vmatprep.subr.bf16.mxu0 0
    %2883 = vmatpush1.bf16.msra.mxu0 %v2481
    %2884 = vmatprep.subr.bf16.mxu0 0
    %2885 = vmatpush1.bf16.msra.mxu0 %v2482
    %2886 = vmatprep.mubr.bf16.mxu0 %v1819
    %2887 = vmatmul.mubr.bf16.gmra.mrb[0].mxu0 %v1818
    %v2888 = vpop.f32.mrb[0].mxu0
    %v2889 = vadd.f32 %v2792, %v2888
    %v2890 = vpop.f32.mrb[0].mxu0
    %v2891 = vpop.f32.mrb[0].mxu0
    %v2892 = vadd.f32 %v2795, %v2891
    %v2893 = vpop.f32.mrb[0].mxu0
    %2894 = vmatprep.mubr.bf16.mxu0 %v1825
    %2895 = vmatmul.mubr.bf16.gmra.mrb[0].mxu0 %v1824
    %v2896 = vpop.f32.mrb[0].mxu0
    %v2897 = vadd.f32 %v2800, %v2896
    %v2898 = vpop.f32.mrb[0].mxu0
    %v2899 = vpop.f32.mrb[0].mxu0
    %v2900 = vadd.f32 %v2803, %v2899
    %v2901 = vpop.f32.mrb[0].mxu0
    %2902 = vmatprep.mubr.bf16.mxu0 %v1831
    %2903 = vmatmul.mubr.bf16.gmra.mrb[0].mxu0 %v1830
    %v2904 = vpop.f32.mrb[0].mxu0
    %v2905 = vadd.f32 %v2808, %v2904
    %v2906 = vpop.f32.mrb[0].mxu0
    %v2907 = vpop.f32.mrb[0].mxu0
    %v2908 = vadd.f32 %v2811, %v2907
    %v2909 = vpop.f32.mrb[0].mxu0
    %2910 = vmatprep.mubr.bf16.mxu0 %v1837
    %2911 = vmatmul.mubr.bf16.gmra.mrb[0].mxu0 %v1836
    %v2912 = vpop.f32.mrb[0].mxu0
    %v2913 = vadd.f32 %v2816, %v2912
    %v2914 = vpop.f32.mrb[0].mxu0
    %v2915 = vpop.f32.mrb[0].mxu0
    %v2916 = vadd.f32 %v2819, %v2915
    %v2917 = vpop.f32.mrb[0].mxu0
    %2918 = vmatprep.mubr.bf16.mxu0 %v1967
    %2919 = vmatmul.mubr.bf16.gmra.mrb[0].mxu0 %v1966
    %v2920 = vpop.f32.mrb[0].mxu0
    %v2921 = vadd.f32 %v2824, %v2920
    %v2922 = vpop.f32.mrb[0].mxu0
    %v2923 = vpop.f32.mrb[0].mxu0
    %v2924 = vadd.f32 %v2827, %v2923
    %v2925 = vpop.f32.mrb[0].mxu0
    %2926 = vmatprep.mubr.bf16.mxu0 %v1973
    %2927 = vmatmul.mubr.bf16.gmra.mrb[0].mxu0 %v1972
    %v2928 = vpop.f32.mrb[0].mxu0
    %v2929 = vadd.f32 %v2832, %v2928
    %v2930 = vpop.f32.mrb[0].mxu0
    %v2931 = vpop.f32.mrb[0].mxu0
    %v2932 = vadd.f32 %v2835, %v2931
    %v2933 = vpop.f32.mrb[0].mxu0
    %2934 = vmatprep.mubr.bf16.mxu0 %v1979
    %2935 = vmatmul.mubr.bf16.gmra.mrb[0].mxu0 %v1978
    %v2936 = vpop.f32.mrb[0].mxu0
    %v2937 = vadd.f32 %v2840, %v2936
    %v2938 = vpop.f32.mrb[0].mxu0
    %v2939 = vpop.f32.mrb[0].mxu0
    %v2940 = vadd.f32 %v2843, %v2939
    %v2941 = vpop.f32.mrb[0].mxu0
    %2942 = vmatprep.mubr.bf16.mxu0 %v1985
    %2943 = vmatmul.mubr.bf16.gmra.mrb[0].mxu0 %v1984
    %v2944 = vpop.f32.mrb[0].mxu0
    %v2945 = vadd.f32 %v2848, %v2944
    %v2946 = vpop.f32.mrb[0].mxu0
    %v2947 = vpop.f32.mrb[0].mxu0
    %v2948 = vadd.f32 %v2851, %v2947
    %v2949 = vpop.f32.mrb[0].mxu0
    %2950 = vdwg.mxu0
    %2951 = vmatprep.subr.bf16.mxu0 0
    %2952 = vmatpush1.bf16.msra.mxu0 %v2483
    %2953 = vmatprep.subr.bf16.mxu0 0
    %2954 = vmatpush1.bf16.msra.mxu0 %v2484
    %2955 = vmatprep.subr.bf16.mxu0 0
    %2956 = vmatpush1.bf16.msra.mxu0 %v2485
    %2957 = vmatprep.subr.bf16.mxu0 0
    %2958 = vmatpush1.bf16.msra.mxu0 %v2486
    %2959 = vmatprep.subr.bf16.mxu0 0
    %2960 = vmatpush1.bf16.msra.mxu0 %v2487
    %2961 = vmatprep.subr.bf16.mxu0 0
    %2962 = vmatpush1.bf16.msra.mxu0 %v2488
    %2963 = vmatprep.subr.bf16.mxu0 0
    %2964 = vmatpush1.bf16.msra.mxu0 %v2489
    %2965 = vmatprep.subr.bf16.mxu0 0
    %2966 = vmatpush1.bf16.msra.mxu0 %v2490
    %2967 = vmatprep.subr.bf16.mxu0 0
    %2968 = vmatpush1.bf16.msra.mxu0 0
    %2969 = vmatprep.subr.bf16.mxu0 0
    %2970 = vmatpush1.bf16.msra.mxu0 0
    %2971 = vmatprep.subr.bf16.mxu0 0
    %2972 = vmatpush1.bf16.msra.mxu0 0
    %2973 = vmatprep.subr.bf16.mxu0 0
    %2974 = vmatpush1.bf16.msra.mxu0 0
    %2975 = vmatprep.subr.bf16.mxu0 0
    %2976 = vmatpush1.bf16.msra.mxu0 0
    %2977 = vmatprep.subr.bf16.mxu0 0
    %2978 = vmatpush1.bf16.msra.mxu0 0
    %2979 = vmatprep.subr.bf16.mxu0 0
    %2980 = vmatpush1.bf16.msra.mxu0 0
    %2981 = vmatprep.subr.bf16.mxu0 0
    %2982 = vmatpush1.bf16.msra.mxu0 0
    %2983 = vmatprep.mubr.bf16.mxu0 0
    %2984 = vmatmul.mubr.bf16.gmra.mrb[0].mxu0 %v1820
    %v2985 = vpop.f32.mrb[0].mxu0
    %v2986 = vadd.f32 %v2889, %v2985
    %v2987 = vpop.f32.mrb[0].mxu0
    %v2988 = vpop.f32.mrb[0].mxu0
    %v2989 = vadd.f32 %v2892, %v2988
    %v2990 = vpop.f32.mrb[0].mxu0
    %2991 = vmatprep.mubr.bf16.mxu0 0
    %2992 = vmatmul.mubr.bf16.gmra.mrb[0].mxu0 %v1826
    %v2993 = vpop.f32.mrb[0].mxu0
    %v2994 = vadd.f32 %v2897, %v2993
    %v2995 = vpop.f32.mrb[0].mxu0
    %v2996 = vpop.f32.mrb[0].mxu0
    %v2997 = vadd.f32 %v2900, %v2996
    %v2998 = vpop.f32.mrb[0].mxu0
    %2999 = vmatprep.mubr.bf16.mxu0 0
    %3000 = vmatmul.mubr.bf16.gmra.mrb[0].mxu0 %v1832
    %v3001 = vpop.f32.mrb[0].mxu0
    %v3002 = vadd.f32 %v2905, %v3001
    %v3003 = vpop.f32.mrb[0].mxu0
    %v3004 = vpop.f32.mrb[0].mxu0
    %v3005 = vadd.f32 %v2908, %v3004
    %v3006 = vpop.f32.mrb[0].mxu0
    %3007 = vmatprep.mubr.bf16.mxu0 0
    %3008 = vmatmul.mubr.bf16.gmra.mrb[0].mxu0 %v1838
    %v3009 = vpop.f32.mrb[0].mxu0
    %v3010 = vadd.f32 %v2913, %v3009
    %v3011 = vpop.f32.mrb[0].mxu0
    %v3012 = vpop.f32.mrb[0].mxu0
    %v3013 = vadd.f32 %v2916, %v3012
    %v3014 = vpop.f32.mrb[0].mxu0
    %3015 = vmatprep.mubr.bf16.mxu0 0
    %3016 = vmatmul.mubr.bf16.gmra.mrb[0].mxu0 %v1968
    %v3017 = vpop.f32.mrb[0].mxu0
    %v3018 = vadd.f32 %v2921, %v3017
    %v3019 = vpop.f32.mrb[0].mxu0
    %v3020 = vpop.f32.mrb[0].mxu0
    %v3021 = vadd.f32 %v2924, %v3020
    %v3022 = vpop.f32.mrb[0].mxu0
    %3023 = vmatprep.mubr.bf16.mxu0 0
    %3024 = vmatmul.mubr.bf16.gmra.mrb[0].mxu0 %v1974
    %v3025 = vpop.f32.mrb[0].mxu0
    %v3026 = vadd.f32 %v2929, %v3025
    %v3027 = vpop.f32.mrb[0].mxu0
    %v3028 = vpop.f32.mrb[0].mxu0
    %v3029 = vadd.f32 %v2932, %v3028
    %v3030 = vpop.f32.mrb[0].mxu0
    %3031 = vmatprep.mubr.bf16.mxu0 0
    %3032 = vmatmul.mubr.bf16.gmra.mrb[0].mxu0 %v1980
    %v3033 = vpop.f32.mrb[0].mxu0
    %v3034 = vadd.f32 %v2937, %v3033
    %v3035 = vpop.f32.mrb[0].mxu0
    %v3036 = vpop.f32.mrb[0].mxu0
    %v3037 = vadd.f32 %v2940, %v3036
    %v3038 = vpop.f32.mrb[0].mxu0
    %3039 = vmatprep.mubr.bf16.mxu0 0
    %3040 = vmatmul.mubr.bf16.gmra.mrb[0].mxu0 %v1986
    %v3041 = vpop.f32.mrb[0].mxu0
    %v3042 = vadd.f32 %v2945, %v3041
    %v3043 = vpop.f32.mrb[0].mxu0
    %v3044 = vpop.f32.mrb[0].mxu0
    %v3045 = vadd.f32 %v2948, %v3044
    %v3046 = vpop.f32.mrb[0].mxu0
    %3047 = vdwg.mxu0
    %v3048 = vld [vmem:[%s8] sm:$0x1]
    %v3050 = vlaneseq
    %v3051 = vshrl.u32 %v3050, 7
    %v3052 = vsub.s32 0, %v3051
    %v3053 = vrot.slane %v3048, %v3052
    %v3055 = vmul.f32 %v2986, %v3053
    %v3056 = vmul.f32 %v2989, %v3053
    %v3057 = vmul.f32 %v2994, %v3053
    %v3058 = vmul.f32 %v2997, %v3053
    %v3059 = vmul.f32 %v3002, %v3053
    %v3060 = vmul.f32 %v3005, %v3053
    %v3061 = vmul.f32 %v3010, %v3053
    %v3062 = vmul.f32 %v3013, %v3053
    %v3063 = vmul.f32 %v3018, %v3053
    %v3064 = vmul.f32 %v3021, %v3053
    %v3065 = vmul.f32 %v3026, %v3053
    %v3066 = vmul.f32 %v3029, %v3053
    %v3067 = vmul.f32 %v3034, %v3053
    %v3068 = vmul.f32 %v3037, %v3053
    %v3069 = vmul.f32 %v3042, %v3053
    %v3070 = vmul.f32 %v3045, %v3053
    %v3071 = vld [vmem:[%s9] sm:$0x1]
    %v3073 = vlaneseq
    %v3074 = vshrl.u32 %v3073, 7
    %v3075 = vsub.s32 0, %v3074
    %v3076 = vrot.slane %v3071, %v3075
    %v3078 = vadd.f32 %v3055, %v3076
    %v3079 = vadd.f32 %v3056, %v3076
    %v3080 = vadd.f32 %v3057, %v3076
    %v3081 = vadd.f32 %v3058, %v3076
    %v3082 = vadd.f32 %v3059, %v3076
    %v3083 = vadd.f32 %v3060, %v3076
    %v3084 = vadd.f32 %v3061, %v3076
    %v3085 = vadd.f32 %v3062, %v3076
    %v3086 = vadd.f32 %v3063, %v3076
    %v3087 = vadd.f32 %v3064, %v3076
    %v3088 = vadd.f32 %v3065, %v3076
    %v3089 = vadd.f32 %v3066, %v3076
    %v3090 = vadd.f32 %v3067, %v3076
    %v3091 = vadd.f32 %v3068, %v3076
    %v3092 = vadd.f32 %v3069, %v3076
    %v3093 = vadd.f32 %v3070, %v3076
    %v3094 = vmin.f32 %v3078, 20.0
    %v3095 = vmin.f32 %v3079, 20.0
    %v3096 = vmin.f32 %v3080, 20.0
    %v3097 = vmin.f32 %v3081, 20.0
    %v3098 = vmin.f32 %v3082, 20.0
    %v3099 = vmin.f32 %v3083, 20.0
    %v3100 = vmin.f32 %v3084, 20.0
    %v3101 = vmin.f32 %v3085, 20.0
    %v3102 = vmin.f32 %v3086, 20.0
    %v3103 = vmin.f32 %v3087, 20.0
    %v3104 = vmin.f32 %v3088, 20.0
    %v3105 = vmin.f32 %v3089, 20.0
    %v3106 = vmin.f32 %v3090, 20.0
    %v3107 = vmin.f32 %v3091, 20.0
    %v3108 = vmin.f32 %v3092, 20.0
    %v3109 = vmin.f32 %v3093, 20.0
    %v3110 = vmul.f32 %v3094, 1.442695
    %v3111 = vpow.pop %v3110
    %v3112 = vmul.f32 %v3095, 1.442695
    %v3113 = vpow.pop %v3112
    %v3114 = vmul.f32 %v3096, 1.442695
    %v3115 = vpow.pop %v3114
    %v3116 = vmul.f32 %v3097, 1.442695
    %v3117 = vpow.pop %v3116
    %v3118 = vmul.f32 %v3098, 1.442695
    %v3119 = vpow.pop %v3118
    %v3120 = vmul.f32 %v3099, 1.442695
    %v3121 = vpow.pop %v3120
    %v3122 = vmul.f32 %v3100, 1.442695
    %v3123 = vpow.pop %v3122
    %v3124 = vmul.f32 %v3101, 1.442695
    %v3125 = vpow.pop %v3124
    %v3126 = vmul.f32 %v3102, 1.442695
    %v3127 = vpow.pop %v3126
    %v3128 = vmul.f32 %v3103, 1.442695
    %v3129 = vpow.pop %v3128
    %v3130 = vmul.f32 %v3104, 1.442695
    %v3131 = vpow.pop %v3130
    %v3132 = vmul.f32 %v3105, 1.442695
    %v3133 = vpow.pop %v3132
    %v3134 = vmul.f32 %v3106, 1.442695
    %v3135 = vpow.pop %v3134
    %v3136 = vmul.f32 %v3107, 1.442695
    %v3137 = vpow.pop %v3136
    %v3138 = vmul.f32 %v3108, 1.442695
    %v3139 = vpow.pop %v3138
    %v3140 = vmul.f32 %v3109, 1.442695
    %v3141 = vpow.pop %v3140
    %v3142 = vadd.f32 %v3111, 2.0
    %v3143 = vadd.f32 %v3113, 2.0
    %v3144 = vadd.f32 %v3115, 2.0
    %v3145 = vadd.f32 %v3117, 2.0
    %v3146 = vadd.f32 %v3119, 2.0
    %v3147 = vadd.f32 %v3121, 2.0
    %v3148 = vadd.f32 %v3123, 2.0
    %v3149 = vadd.f32 %v3125, 2.0
    %v3150 = vadd.f32 %v3127, 2.0
    %v3151 = vadd.f32 %v3129, 2.0
    %v3152 = vadd.f32 %v3131, 2.0
    %v3153 = vadd.f32 %v3133, 2.0
    %v3154 = vadd.f32 %v3135, 2.0
    %v3155 = vadd.f32 %v3137, 2.0
    %v3156 = vadd.f32 %v3139, 2.0
    %v3157 = vadd.f32 %v3141, 2.0
    %v3158 = vmul.f32 %v3111, %v3142
    %v3159 = vmul.f32 %v3113, %v3143
    %v3160 = vmul.f32 %v3115, %v3144
    %v3161 = vmul.f32 %v3117, %v3145
    %v3162 = vmul.f32 %v3119, %v3146
    %v3163 = vmul.f32 %v3121, %v3147
    %v3164 = vmul.f32 %v3123, %v3148
    %v3165 = vmul.f32 %v3125, %v3149
    %v3166 = vmul.f32 %v3127, %v3150
    %v3167 = vmul.f32 %v3129, %v3151
    %v3168 = vmul.f32 %v3131, %v3152
    %v3169 = vmul.f32 %v3133, %v3153
    %v3170 = vmul.f32 %v3135, %v3154
    %v3171 = vmul.f32 %v3137, %v3155
    %v3172 = vmul.f32 %v3139, %v3156
    %v3173 = vmul.f32 %v3141, %v3157
    %v3174 = vmul.f32 %v3078, %v3158
    %v3175 = vmul.f32 %v3079, %v3159
    %v3176 = vmul.f32 %v3080, %v3160
    %v3177 = vmul.f32 %v3081, %v3161
    %v3178 = vmul.f32 %v3082, %v3162
    %v3179 = vmul.f32 %v3083, %v3163
    %v3180 = vmul.f32 %v3084, %v3164
    %v3181 = vmul.f32 %v3085, %v3165
    %v3182 = vmul.f32 %v3086, %v3166
    %v3183 = vmul.f32 %v3087, %v3167
    %v3184 = vmul.f32 %v3088, %v3168
    %v3185 = vmul.f32 %v3089, %v3169
    %v3186 = vmul.f32 %v3090, %v3170
    %v3187 = vmul.f32 %v3091, %v3171
    %v3188 = vmul.f32 %v3092, %v3172
    %v3189 = vmul.f32 %v3093, %v3173
    %v3190 = vadd.f32 %v3158, 2.0
    %v3191 = vadd.f32 %v3159, 2.0
    %v3192 = vadd.f32 %v3160, 2.0
    %v3193 = vadd.f32 %v3161, 2.0
    %v3194 = vadd.f32 %v3162, 2.0
    %v3195 = vadd.f32 %v3163, 2.0
    %v3196 = vadd.f32 %v3164, 2.0
    %v3197 = vadd.f32 %v3165, 2.0
    %v3198 = vadd.f32 %v3166, 2.0
    %v3199 = vadd.f32 %v3167, 2.0
    %v3200 = vadd.f32 %v3168, 2.0
    %v3201 = vadd.f32 %v3169, 2.0
    %v3202 = vadd.f32 %v3170, 2.0
    %v3203 = vadd.f32 %v3171, 2.0
    %v3204 = vadd.f32 %v3172, 2.0
    %v3205 = vadd.f32 %v3173, 2.0
    %v3206 = vrcp.pop %v3190
    %v3207 = vrcp.pop %v3191
    %v3208 = vrcp.pop %v3192
    %v3209 = vrcp.pop %v3193
    %v3210 = vrcp.pop %v3194
    %v3211 = vrcp.pop %v3195
    %v3212 = vrcp.pop %v3196
    %v3213 = vrcp.pop %v3197
    %v3214 = vrcp.pop %v3198
    %v3215 = vrcp.pop %v3199
    %v3216 = vrcp.pop %v3200
    %v3217 = vrcp.pop %v3201
    %v3218 = vrcp.pop %v3202
    %v3219 = vrcp.pop %v3203
    %v3220 = vrcp.pop %v3204
    %v3221 = vrcp.pop %v3205
    %v3222 = vmul.f32 %v3174, %v3206
    %v3223 = vmul.f32 %v3175, %v3207
    %v3224 = vmul.f32 %v3176, %v3208
    %v3225 = vmul.f32 %v3177, %v3209
    %v3226 = vmul.f32 %v3178, %v3210
    %v3227 = vmul.f32 %v3179, %v3211
    %v3228 = vmul.f32 %v3180, %v3212
    %v3229 = vmul.f32 %v3181, %v3213
    %v3230 = vmul.f32 %v3182, %v3214
    %v3231 = vmul.f32 %v3183, %v3215
    %v3232 = vmul.f32 %v3184, %v3216
    %v3233 = vmul.f32 %v3185, %v3217
    %v3234 = vmul.f32 %v3186, %v3218
    %v3235 = vmul.f32 %v3187, %v3219
    %v3236 = vmul.f32 %v3188, %v3220
    %v3237 = vmul.f32 %v3189, %v3221
    %v3238 = vadd.f32 %v1259, %v3222
    %v3239 = vadd.f32 %v1260, %v3223
    %v3240 = vadd.f32 %v1261, %v3224
    %v3241 = vadd.f32 %v1262, %v3225
    %v3242 = vadd.f32 %v1263, %v3226
    %v3243 = vadd.f32 %v1264, %v3227
    %v3244 = vadd.f32 %v1265, %v3228
    %v3245 = vadd.f32 %v1266, %v3229
    %v3246 = vadd.f32 %v1267, %v3230
    %v3247 = vadd.f32 %v1268, %v3231
    %v3248 = vadd.f32 %v1269, %v3232
    %v3249 = vadd.f32 %v1270, %v3233
    %v3250 = vadd.f32 %v1271, %v3234
    %v3251 = vadd.f32 %v1272, %v3235
    %v3252 = vadd.f32 %v1273, %v3236
    %v3253 = vadd.f32 %v1274, %v3237
    %v3254 = vpack.c.bf16 %v3239, %v3238
    %v3255 = vpack.c.bf16 %v3241, %v3240
    %v3256 = vpack.c.bf16 %v3243, %v3242
    %v3257 = vpack.c.bf16 %v3245, %v3244
    %v3258 = vpack.c.bf16 %v3247, %v3246
    %v3259 = vpack.c.bf16 %v3249, %v3248
    %v3260 = vpack.c.bf16 %v3251, %v3250
    %v3261 = vpack.c.bf16 %v3253, %v3252
    %s3262 = scalar_lea.vmem %s4, 64
    %v3263 = vld [vmem:[%s3262] sm:$0xf]
    %v3264 = vld [vmem:[%s3262 + $0x4] sm:$0xf]
    %v3265 = vld [vmem:[%s3262 + $0x8] sm:$0xf]
    %v3266 = vld [vmem:[%s3262 + $0xc] sm:$0xf]
    %v3267 = vld [vmem:[%s3262 + $0x10] sm:$0xf]
    %v3268 = vld [vmem:[%s3262 + $0x14] sm:$0xf]
    %v3269 = vld [vmem:[%s3262 + $0x18] sm:$0xf]
    %v3270 = vld [vmem:[%s3262 + $0x1c] sm:$0xf]
    %v3271 = vld [vmem:[%s3262 + $0x20] sm:$0xf]
    %v3272 = vld [vmem:[%s3262 + $0x24] sm:$0xf]
    %v3273 = vld [vmem:[%s3262 + $0x28] sm:$0xf]
    %v3274 = vld [vmem:[%s3262 + $0x2c] sm:$0xf]
    %v3275 = vld [vmem:[%s3262 + $0x30] sm:$0xf]
    %v3276 = vld [vmem:[%s3262 + $0x34] sm:$0xf]
    %v3277 = vld [vmem:[%s3262 + $0x38] sm:$0xf]
    %v3278 = vld [vmem:[%s3262 + $0x3c] sm:$0xf]
    %v3295 = vunpack.c.l.b16 %v3263
    %v3296 = vunpack.c.l.b16 %v3264
    %v3297 = vunpack.c.l.b16 %v3265
    %v3298 = vunpack.c.l.b16 %v3266
    %v3299 = vunpack.c.l.b16 %v3267
    %v3300 = vunpack.c.l.b16 %v3268
    %v3301 = vunpack.c.l.b16 %v3269
    %v3302 = vunpack.c.l.b16 %v3270
    %v3303 = vunpack.c.l.b16 %v3271
    %v3304 = vunpack.c.l.b16 %v3272
    %v3305 = vunpack.c.l.b16 %v3273
    %v3306 = vunpack.c.l.b16 %v3274
    %v3307 = vunpack.c.l.b16 %v3275
    %v3308 = vunpack.c.l.b16 %v3276
    %v3309 = vunpack.c.l.b16 %v3277
    %v3310 = vunpack.c.l.b16 %v3278
    %v3311 = vpack.c.b16 %v3296, %v3295
    %v3312 = vpack.c.b16 %v3298, %v3297
    %v3313 = vpack.c.b16 %v3300, %v3299
    %v3314 = vpack.c.b16 %v3302, %v3301
    %v3315 = vpack.c.b16 %v3304, %v3303
    %v3316 = vpack.c.b16 %v3306, %v3305
    %v3317 = vpack.c.b16 %v3308, %v3307
    %v3318 = vpack.c.b16 %v3310, %v3309
    %3327 = vmatprep.subr.bf16.mxu0 0
    %3328 = vmatpush1.bf16.msra.mxu0 %v3311
    %3329 = vmatprep.subr.bf16.mxu0 0
    %3330 = vmatpush1.bf16.msra.mxu0 %v3312
    %3331 = vmatprep.subr.bf16.mxu0 0
    %3332 = vmatpush1.bf16.msra.mxu0 %v3313
    %3333 = vmatprep.subr.bf16.mxu0 0
    %3334 = vmatpush1.bf16.msra.mxu0 %v3314
    %3335 = vmatprep.subr.bf16.mxu0 0
    %3336 = vmatpush1.bf16.msra.mxu0 %v3315
    %3337 = vmatprep.subr.bf16.mxu0 0
    %3338 = vmatpush1.bf16.msra.mxu0 %v3316
    %3339 = vmatprep.subr.bf16.mxu0 0
    %3340 = vmatpush1.bf16.msra.mxu0 %v3317
    %3341 = vmatprep.subr.bf16.mxu0 0
    %3342 = vmatpush1.bf16.msra.mxu0 %v3318
    %3343 = vmatprep.subr.bf16.mxu0 0
    %3344 = vmatpush1.bf16.msra.mxu0 0
    %3345 = vmatprep.subr.bf16.mxu0 0
    %3346 = vmatpush1.bf16.msra.mxu0 0
    %3347 = vmatprep.subr.bf16.mxu0 0
    %3348 = vmatpush1.bf16.msra.mxu0 0
    %3349 = vmatprep.subr.bf16.mxu0 0
    %3350 = vmatpush1.bf16.msra.mxu0 0
    %3351 = vmatprep.subr.bf16.mxu0 0
    %3352 = vmatpush1.bf16.msra.mxu0 0
    %3353 = vmatprep.subr.bf16.mxu0 0
    %3354 = vmatpush1.bf16.msra.mxu0 0
    %3355 = vmatprep.subr.bf16.mxu0 0
    %3356 = vmatpush1.bf16.msra.mxu0 0
    %3357 = vmatprep.subr.bf16.mxu0 0
    %3358 = vmatpush1.bf16.msra.mxu0 0
    %3359 = vmatprep.mubr.bf16.mxu0 0
    %3360 = vmatmul.mubr.bf16.gmra.mrb[0].mxu0 %v3254
    %v3361 = vpop.f32.mrb[0].mxu0
    %v3362 = vadd.f32 0.0, %v3361
    %v3363 = vpop.f32.mrb[0].mxu0
    %v3364 = vpop.f32.mrb[0].mxu0
    %v3365 = vadd.f32 0.0, %v3364
    %v3366 = vpop.f32.mrb[0].mxu0
    %3367 = vmatprep.mubr.bf16.mxu0 0
    %3368 = vmatmul.mubr.bf16.gmra.mrb[0].mxu0 %v3255
    %v3369 = vpop.f32.mrb[0].mxu0
    %v3370 = vadd.f32 0.0, %v3369
    %v3371 = vpop.f32.mrb[0].mxu0
    %v3372 = vpop.f32.mrb[0].mxu0
    %v3373 = vadd.f32 0.0, %v3372
    %v3374 = vpop.f32.mrb[0].mxu0
    %3375 = vmatprep.mubr.bf16.mxu0 0
    %3376 = vmatmul.mubr.bf16.gmra.mrb[0].mxu0 %v3256
    %v3377 = vpop.f32.mrb[0].mxu0
    %v3378 = vadd.f32 0.0, %v3377
    %v3379 = vpop.f32.mrb[0].mxu0
    %v3380 = vpop.f32.mrb[0].mxu0
    %v3381 = vadd.f32 0.0, %v3380
    %v3382 = vpop.f32.mrb[0].mxu0
    %3383 = vmatprep.mubr.bf16.mxu0 0
    %3384 = vmatmul.mubr.bf16.gmra.mrb[0].mxu0 %v3257
    %v3385 = vpop.f32.mrb[0].mxu0
    %v3386 = vadd.f32 0.0, %v3385
    %v3387 = vpop.f32.mrb[0].mxu0
    %v3388 = vpop.f32.mrb[0].mxu0
    %v3389 = vadd.f32 0.0, %v3388
    %v3390 = vpop.f32.mrb[0].mxu0
    %3391 = vmatprep.mubr.bf16.mxu0 0
    %3392 = vmatmul.mubr.bf16.gmra.mrb[0].mxu0 %v3258
    %v3393 = vpop.f32.mrb[0].mxu0
    %v3394 = vadd.f32 0.0, %v3393
    %v3395 = vpop.f32.mrb[0].mxu0
    %v3396 = vpop.f32.mrb[0].mxu0
    %v3397 = vadd.f32 0.0, %v3396
    %v3398 = vpop.f32.mrb[0].mxu0
    %3399 = vmatprep.mubr.bf16.mxu0 0
    %3400 = vmatmul.mubr.bf16.gmra.mrb[0].mxu0 %v3259
    %v3401 = vpop.f32.mrb[0].mxu0
    %v3402 = vadd.f32 0.0, %v3401
    %v3403 = vpop.f32.mrb[0].mxu0
    %v3404 = vpop.f32.mrb[0].mxu0
    %v3405 = vadd.f32 0.0, %v3404
    %v3406 = vpop.f32.mrb[0].mxu0
    %3407 = vmatprep.mubr.bf16.mxu0 0
    %3408 = vmatmul.mubr.bf16.gmra.mrb[0].mxu0 %v3260
    %v3409 = vpop.f32.mrb[0].mxu0
    %v3410 = vadd.f32 0.0, %v3409
    %v3411 = vpop.f32.mrb[0].mxu0
    %v3412 = vpop.f32.mrb[0].mxu0
    %v3413 = vadd.f32 0.0, %v3412
    %v3414 = vpop.f32.mrb[0].mxu0
    %3415 = vmatprep.mubr.bf16.mxu0 0
    %3416 = vmatmul.mubr.bf16.gmra.mrb[0].mxu0 %v3261
    %v3417 = vpop.f32.mrb[0].mxu0
    %v3418 = vadd.f32 0.0, %v3417
    %v3419 = vpop.f32.mrb[0].mxu0
    %v3420 = vpop.f32.mrb[0].mxu0
    %v3421 = vadd.f32 0.0, %v3420
    %v3422 = vpop.f32.mrb[0].mxu0
    %3423 = vdwg.mxu0
    %s3424 = scalar_lea.vmem %s5, 1
    %v3425 = vld [vmem:[%s3424] sm:$0x1]
    %v3427 = vlaneseq
    %v3428 = vshrl.u32 %v3427, 7
    %v3429 = vsub.s32 0, %v3428
    %v3430 = vrot.slane %v3425, %v3429
    %v3432 = vmul.f32 %v3362, %v3430
    %v3433 = vmul.f32 %v3365, %v3430
    %v3434 = vmul.f32 %v3370, %v3430
    %v3435 = vmul.f32 %v3373, %v3430
    %v3436 = vmul.f32 %v3378, %v3430
    %v3437 = vmul.f32 %v3381, %v3430
    %v3438 = vmul.f32 %v3386, %v3430
    %v3439 = vmul.f32 %v3389, %v3430
    %v3440 = vmul.f32 %v3394, %v3430
    %v3441 = vmul.f32 %v3397, %v3430
    %v3442 = vmul.f32 %v3402, %v3430
    %v3443 = vmul.f32 %v3405, %v3430
    %v3444 = vmul.f32 %v3410, %v3430
    %v3445 = vmul.f32 %v3413, %v3430
    %v3446 = vmul.f32 %v3418, %v3430
    %v3447 = vmul.f32 %v3421, %v3430
    %s3448 = scalar_lea.vmem %s6, 1
    %v3449 = vld [vmem:[%s3448] sm:$0x1]
    %v3451 = vlaneseq
    %v3452 = vshrl.u32 %v3451, 7
    %v3453 = vsub.s32 0, %v3452
    %v3454 = vrot.slane %v3449, %v3453
    %v3456 = vadd.f32 %v3432, %v3454
    %v3457 = vadd.f32 %v3433, %v3454
    %v3458 = vadd.f32 %v3434, %v3454
    %v3459 = vadd.f32 %v3435, %v3454
    %v3460 = vadd.f32 %v3436, %v3454
    %v3461 = vadd.f32 %v3437, %v3454
    %v3462 = vadd.f32 %v3438, %v3454
    %v3463 = vadd.f32 %v3439, %v3454
    %v3464 = vadd.f32 %v3440, %v3454
    %v3465 = vadd.f32 %v3441, %v3454
    %v3466 = vadd.f32 %v3442, %v3454
    %v3467 = vadd.f32 %v3443, %v3454
    %v3468 = vadd.f32 %v3444, %v3454
    %v3469 = vadd.f32 %v3445, %v3454
    %v3470 = vadd.f32 %v3446, %v3454
    %v3471 = vadd.f32 %v3447, %v3454
    %v3472 = vmin.f32 %v3456, 20.0
    %v3473 = vmin.f32 %v3457, 20.0
    %v3474 = vmin.f32 %v3458, 20.0
    %v3475 = vmin.f32 %v3459, 20.0
    %v3476 = vmin.f32 %v3460, 20.0
    %v3477 = vmin.f32 %v3461, 20.0
    %v3478 = vmin.f32 %v3462, 20.0
    %v3479 = vmin.f32 %v3463, 20.0
    %v3480 = vmin.f32 %v3464, 20.0
    %v3481 = vmin.f32 %v3465, 20.0
    %v3482 = vmin.f32 %v3466, 20.0
    %v3483 = vmin.f32 %v3467, 20.0
    %v3484 = vmin.f32 %v3468, 20.0
    %v3485 = vmin.f32 %v3469, 20.0
    %v3486 = vmin.f32 %v3470, 20.0
    %v3487 = vmin.f32 %v3471, 20.0
    %v3488 = vmul.f32 %v3472, 1.442695
    %v3489 = vpow.pop %v3488
    %v3490 = vmul.f32 %v3473, 1.442695
    %v3491 = vpow.pop %v3490
    %v3492 = vmul.f32 %v3474, 1.442695
    %v3493 = vpow.pop %v3492
    %v3494 = vmul.f32 %v3475, 1.442695
    %v3495 = vpow.pop %v3494
    %v3496 = vmul.f32 %v3476, 1.442695
    %v3497 = vpow.pop %v3496
    %v3498 = vmul.f32 %v3477, 1.442695
    %v3499 = vpow.pop %v3498
    %v3500 = vmul.f32 %v3478, 1.442695
    %v3501 = vpow.pop %v3500
    %v3502 = vmul.f32 %v3479, 1.442695
    %v3503 = vpow.pop %v3502
    %v3504 = vmul.f32 %v3480, 1.442695
    %v3505 = vpow.pop %v3504
    %v3506 = vmul.f32 %v3481, 1.442695
    %v3507 = vpow.pop %v3506
    %v3508 = vmul.f32 %v3482, 1.442695
    %v3509 = vpow.pop %v3508
    %v3510 = vmul.f32 %v3483, 1.442695
    %v3511 = vpow.pop %v3510
    %v3512 = vmul.f32 %v3484, 1.442695
    %v3513 = vpow.pop %v3512
    %v3514 = vmul.f32 %v3485, 1.442695
    %v3515 = vpow.pop %v3514
    %v3516 = vmul.f32 %v3486, 1.442695
    %v3517 = vpow.pop %v3516
    %v3518 = vmul.f32 %v3487, 1.442695
    %v3519 = vpow.pop %v3518
    %v3520 = vadd.f32 %v3489, 2.0
    %v3521 = vadd.f32 %v3491, 2.0
    %v3522 = vadd.f32 %v3493, 2.0
    %v3523 = vadd.f32 %v3495, 2.0
    %v3524 = vadd.f32 %v3497, 2.0
    %v3525 = vadd.f32 %v3499, 2.0
    %v3526 = vadd.f32 %v3501, 2.0
    %v3527 = vadd.f32 %v3503, 2.0
    %v3528 = vadd.f32 %v3505, 2.0
    %v3529 = vadd.f32 %v3507, 2.0
    %v3530 = vadd.f32 %v3509, 2.0
    %v3531 = vadd.f32 %v3511, 2.0
    %v3532 = vadd.f32 %v3513, 2.0
    %v3533 = vadd.f32 %v3515, 2.0
    %v3534 = vadd.f32 %v3517, 2.0
    %v3535 = vadd.f32 %v3519, 2.0
    %v3536 = vmul.f32 %v3489, %v3520
    %v3537 = vmul.f32 %v3491, %v3521
    %v3538 = vmul.f32 %v3493, %v3522
    %v3539 = vmul.f32 %v3495, %v3523
    %v3540 = vmul.f32 %v3497, %v3524
    %v3541 = vmul.f32 %v3499, %v3525
    %v3542 = vmul.f32 %v3501, %v3526
    %v3543 = vmul.f32 %v3503, %v3527
    %v3544 = vmul.f32 %v3505, %v3528
    %v3545 = vmul.f32 %v3507, %v3529
    %v3546 = vmul.f32 %v3509, %v3530
    %v3547 = vmul.f32 %v3511, %v3531
    %v3548 = vmul.f32 %v3513, %v3532
    %v3549 = vmul.f32 %v3515, %v3533
    %v3550 = vmul.f32 %v3517, %v3534
    %v3551 = vmul.f32 %v3519, %v3535
    %v3552 = vmul.f32 %v3456, %v3536
    %v3553 = vmul.f32 %v3457, %v3537
    %v3554 = vmul.f32 %v3458, %v3538
    %v3555 = vmul.f32 %v3459, %v3539
    %v3556 = vmul.f32 %v3460, %v3540
    %v3557 = vmul.f32 %v3461, %v3541
    %v3558 = vmul.f32 %v3462, %v3542
    %v3559 = vmul.f32 %v3463, %v3543
    %v3560 = vmul.f32 %v3464, %v3544
    %v3561 = vmul.f32 %v3465, %v3545
    %v3562 = vmul.f32 %v3466, %v3546
    %v3563 = vmul.f32 %v3467, %v3547
    %v3564 = vmul.f32 %v3468, %v3548
    %v3565 = vmul.f32 %v3469, %v3549
    %v3566 = vmul.f32 %v3470, %v3550
    %v3567 = vmul.f32 %v3471, %v3551
    %v3568 = vadd.f32 %v3536, 2.0
    %v3569 = vadd.f32 %v3537, 2.0
    %v3570 = vadd.f32 %v3538, 2.0
    %v3571 = vadd.f32 %v3539, 2.0
    %v3572 = vadd.f32 %v3540, 2.0
    %v3573 = vadd.f32 %v3541, 2.0
    %v3574 = vadd.f32 %v3542, 2.0
    %v3575 = vadd.f32 %v3543, 2.0
    %v3576 = vadd.f32 %v3544, 2.0
    %v3577 = vadd.f32 %v3545, 2.0
    %v3578 = vadd.f32 %v3546, 2.0
    %v3579 = vadd.f32 %v3547, 2.0
    %v3580 = vadd.f32 %v3548, 2.0
    %v3581 = vadd.f32 %v3549, 2.0
    %v3582 = vadd.f32 %v3550, 2.0
    %v3583 = vadd.f32 %v3551, 2.0
    %v3584 = vrcp.pop %v3568
    %v3585 = vrcp.pop %v3569
    %v3586 = vrcp.pop %v3570
    %v3587 = vrcp.pop %v3571
    %v3588 = vrcp.pop %v3572
    %v3589 = vrcp.pop %v3573
    %v3590 = vrcp.pop %v3574
    %v3591 = vrcp.pop %v3575
    %v3592 = vrcp.pop %v3576
    %v3593 = vrcp.pop %v3577
    %v3594 = vrcp.pop %v3578
    %v3595 = vrcp.pop %v3579
    %v3596 = vrcp.pop %v3580
    %v3597 = vrcp.pop %v3581
    %v3598 = vrcp.pop %v3582
    %v3599 = vrcp.pop %v3583
    %v3600 = vmul.f32 %v3552, %v3584
    %v3601 = vmul.f32 %v3553, %v3585
    %v3602 = vmul.f32 %v3554, %v3586
    %v3603 = vmul.f32 %v3555, %v3587
    %v3604 = vmul.f32 %v3556, %v3588
    %v3605 = vmul.f32 %v3557, %v3589
    %v3606 = vmul.f32 %v3558, %v3590
    %v3607 = vmul.f32 %v3559, %v3591
    %v3608 = vmul.f32 %v3560, %v3592
    %v3609 = vmul.f32 %v3561, %v3593
    %v3610 = vmul.f32 %v3562, %v3594
    %v3611 = vmul.f32 %v3563, %v3595
    %v3612 = vmul.f32 %v3564, %v3596
    %v3613 = vmul.f32 %v3565, %v3597
    %v3614 = vmul.f32 %v3566, %v3598
    %v3615 = vmul.f32 %v3567, %v3599
    %3616 = vst [vmem:[%s1674 + $0x1] sm:$0xff] %v3600
    %3617 = vst [vmem:[%s1674 + $0x11] sm:$0xff] %v3601
    %3618 = vst [vmem:[%s1674 + $0x21] sm:$0xff] %v3602
    %3619 = vst [vmem:[%s1674 + $0x31] sm:$0xff] %v3603
    %3620 = vst [vmem:[%s1674 + $0x41] sm:$0xff] %v3604
    %3621 = vst [vmem:[%s1674 + $0x51] sm:$0xff] %v3605
    %3622 = vst [vmem:[%s1674 + $0x61] sm:$0xff] %v3606
    %3623 = vst [vmem:[%s1674 + $0x71] sm:$0xff] %v3607
    %3624 = vst [vmem:[%s1674 + $0xa1] sm:$0xff] %v3608
    %3625 = vst [vmem:[%s1674 + $0xb1] sm:$0xff] %v3609
    %3626 = vst [vmem:[%s1674 + $0xc1] sm:$0xff] %v3610
    %3627 = vst [vmem:[%s1674 + $0xd1] sm:$0xff] %v3611
    %3628 = vst [vmem:[%s1674 + $0xe1] sm:$0xff] %v3612
    %3629 = vst [vmem:[%s1674 + $0xf1] sm:$0xff] %v3613
    %3630 = vst [vmem:[%s1674 + $0x101] sm:$0xff] %v3614
    %3631 = vst [vmem:[%s1674 + $0x111] sm:$0xff] %v3615
    %v3632 = vld [vmem:[#allocation3] sm:$0xff]
    %v3633 = vld [vmem:[#allocation3 + $0x8] sm:$0x3]
    %v3634 = vld [vmem:[#allocation3 + $0x10] sm:$0xff]
    %v3635 = vld [vmem:[#allocation3 + $0x18] sm:$0x3]
    %v3636 = vld [vmem:[#allocation3 + $0x20] sm:$0xff]
    %v3637 = vld [vmem:[#allocation3 + $0x28] sm:$0x3]
    %v3638 = vld [vmem:[#allocation3 + $0x30] sm:$0xff]
    %v3639 = vld [vmem:[#allocation3 + $0x38] sm:$0x3]
    %v3640 = vld [vmem:[#allocation3 + $0x40] sm:$0xff]
    %v3641 = vld [vmem:[#allocation3 + $0x48] sm:$0x3]
    %v3642 = vld [vmem:[#allocation3 + $0x50] sm:$0xff]
    %v3643 = vld [vmem:[#allocation3 + $0x58] sm:$0x3]
    %v3644 = vld [vmem:[#allocation3 + $0x60] sm:$0xff]
    %v3645 = vld [vmem:[#allocation3 + $0x68] sm:$0x3]
    %v3646 = vld [vmem:[#allocation3 + $0x70] sm:$0xff]
    %v3647 = vld [vmem:[#allocation3 + $0x78] sm:$0x3]
    %v3648 = vld [vmem:[#allocation3 + $0x80] sm:$0xff]
    %v3649 = vld [vmem:[#allocation3 + $0x88] sm:$0x3]
    %v3650 = vld [vmem:[#allocation3 + $0x90] sm:$0xff]
    %v3651 = vld [vmem:[#allocation3 + $0x98] sm:$0x3]
    %v3668 = vrot.slane %v3632, 1
    %v3669 = vrot.slane %v3633, 1
    %v3670 = vsel %vm171, %v3668, %v3669
    %v3671 = vrot.slane %v3634, 1
    %v3672 = vrot.slane %v3635, 1
    %v3673 = vsel %vm171, %v3671, %v3672
    %v3674 = vrot.slane %v3636, 1
    %v3675 = vrot.slane %v3637, 1
    %v3676 = vsel %vm171, %v3674, %v3675
    %v3677 = vrot.slane %v3638, 1
    %v3678 = vrot.slane %v3639, 1
    %v3679 = vsel %vm171, %v3677, %v3678
    %v3680 = vrot.slane %v3640, 1
    %v3681 = vrot.slane %v3641, 1
    %v3682 = vsel %vm171, %v3680, %v3681
    %v3683 = vrot.slane %v3642, 1
    %v3684 = vrot.slane %v3643, 1
    %v3685 = vsel %vm171, %v3683, %v3684
    %v3686 = vrot.slane %v3644, 1
    %v3687 = vrot.slane %v3645, 1
    %v3688 = vsel %vm171, %v3686, %v3687
    %v3689 = vrot.slane %v3646, 1
    %v3690 = vrot.slane %v3647, 1
    %v3691 = vsel %vm171, %v3689, %v3690
    %v3700 = vrot.slane %v3632, 2
    %v3701 = vrot.slane %v3633, 2
    %v3702 = vsel %vm1759, %v3700, %v3701
    %v3703 = vrot.slane %v3634, 2
    %v3704 = vrot.slane %v3635, 2
    %v3705 = vsel %vm1759, %v3703, %v3704
    %v3706 = vrot.slane %v3636, 2
    %v3707 = vrot.slane %v3637, 2
    %v3708 = vsel %vm1759, %v3706, %v3707
    %v3709 = vrot.slane %v3638, 2
    %v3710 = vrot.slane %v3639, 2
    %v3711 = vsel %vm1759, %v3709, %v3710
    %v3712 = vrot.slane %v3640, 2
    %v3713 = vrot.slane %v3641, 2
    %v3714 = vsel %vm1759, %v3712, %v3713
    %v3715 = vrot.slane %v3642, 2
    %v3716 = vrot.slane %v3643, 2
    %v3717 = vsel %vm1759, %v3715, %v3716
    %v3718 = vrot.slane %v3644, 2
    %v3719 = vrot.slane %v3645, 2
    %v3720 = vsel %vm1759, %v3718, %v3719
    %v3721 = vrot.slane %v3646, 2
    %v3722 = vrot.slane %v3647, 2
    %v3723 = vsel %vm1759, %v3721, %v3722
    %v3734 = vrot.slane %v3648, 1
    %v3735 = vrot.slane %v3649, 1
    %v3736 = vsel %vm171, %v3734, %v3735
    %v3738 = vrot.slane %v3648, 2
    %v3739 = vrot.slane %v3649, 2
    %v3740 = vsel %vm1759, %v3738, %v3739
    %v3744 = vrot.slane %v3650, 1
    %v3745 = vrot.slane %v3651, 1
    %v3746 = vsel %vm171, %v3744, %v3745
    %v3748 = vrot.slane %v3650, 2
    %v3749 = vrot.slane %v3651, 2
    %v3750 = vsel %vm1759, %v3748, %v3749
    %v3752 = vpack.c.bf16 %v3634, %v3632
    %v3753 = vpack.c.bf16 %v3673, %v3670
    %v3754 = vpack.c.bf16 %v3705, %v3702
    %v3755 = vpack.c.bf16 %v3636, %v3634
    %v3756 = vpack.c.bf16 %v3676, %v3673
    %v3757 = vpack.c.bf16 %v3708, %v3705
    %v3758 = vpack.c.bf16 %v3638, %v3636
    %v3759 = vpack.c.bf16 %v3679, %v3676
    %v3760 = vpack.c.bf16 %v3711, %v3708
    %v3761 = vpack.c.bf16 %v3640, %v3638
    %v3762 = vpack.c.bf16 %v3682, %v3679
    %v3763 = vpack.c.bf16 %v3714, %v3711
    %v3764 = vpack.c.bf16 %v3642, %v3640
    %v3765 = vpack.c.bf16 %v3685, %v3682
    %v3766 = vpack.c.bf16 %v3717, %v3714
    %v3767 = vpack.c.bf16 %v3644, %v3642
    %v3768 = vpack.c.bf16 %v3688, %v3685
    %v3769 = vpack.c.bf16 %v3720, %v3717
    %v3770 = vpack.c.bf16 %v3646, %v3644
    %v3771 = vpack.c.bf16 %v3691, %v3688
    %v3772 = vpack.c.bf16 %v3723, %v3720
    %v3773 = vpack.c.bf16 %v3648, %v3646
    %v3774 = vpack.c.bf16 %v3736, %v3691
    %v3775 = vpack.c.bf16 %v3740, %v3723
    %v3776 = vpack.c.bf16 %v3650, %v3648
    %v3777 = vpack.c.bf16 %v3746, %v3736
    %v3778 = vpack.c.bf16 %v3750, %v3740
    %v3779 = vld [vmem:[%s1839] sm:$0xff]
    %v3780 = vld [vmem:[%s1839 + $0x8] sm:$0x3]
    %v3781 = vld [vmem:[%s1839 + $0x10] sm:$0xff]
    %v3782 = vld [vmem:[%s1839 + $0x18] sm:$0x3]
    %v3783 = vld [vmem:[%s1839 + $0x20] sm:$0xff]
    %v3784 = vld [vmem:[%s1839 + $0x28] sm:$0x3]
    %v3785 = vld [vmem:[%s1839 + $0x30] sm:$0xff]
    %v3786 = vld [vmem:[%s1839 + $0x38] sm:$0x3]
    %v3787 = vld [vmem:[%s1839 + $0x40] sm:$0xff]
    %v3788 = vld [vmem:[%s1839 + $0x48] sm:$0x3]
    %v3789 = vld [vmem:[%s1839 + $0x50] sm:$0xff]
    %v3790 = vld [vmem:[%s1839 + $0x58] sm:$0x3]
    %v3791 = vld [vmem:[%s1839 + $0x60] sm:$0xff]
    %v3792 = vld [vmem:[%s1839 + $0x68] sm:$0x3]
    %v3793 = vld [vmem:[%s1839 + $0x70] sm:$0xff]
    %v3794 = vld [vmem:[%s1839 + $0x78] sm:$0x3]
    %v3795 = vld [vmem:[%s1839 + $0x80] sm:$0xff]
    %v3796 = vld [vmem:[%s1839 + $0x88] sm:$0x3]
    %v3797 = vld [vmem:[%s1839 + $0x90] sm:$0xff]
    %v3798 = vld [vmem:[%s1839 + $0x98] sm:$0x3]
    %v3815 = vrot.slane %v3779, 1
    %v3816 = vrot.slane %v3780, 1
    %v3817 = vsel %vm171, %v3815, %v3816
    %v3818 = vrot.slane %v3781, 1
    %v3819 = vrot.slane %v3782, 1
    %v3820 = vsel %vm171, %v3818, %v3819
    %v3821 = vrot.slane %v3783, 1
    %v3822 = vrot.slane %v3784, 1
    %v3823 = vsel %vm171, %v3821, %v3822
    %v3824 = vrot.slane %v3785, 1
    %v3825 = vrot.slane %v3786, 1
    %v3826 = vsel %vm171, %v3824, %v3825
    %v3827 = vrot.slane %v3787, 1
    %v3828 = vrot.slane %v3788, 1
    %v3829 = vsel %vm171, %v3827, %v3828
    %v3830 = vrot.slane %v3789, 1
    %v3831 = vrot.slane %v3790, 1
    %v3832 = vsel %vm171, %v3830, %v3831
    %v3833 = vrot.slane %v3791, 1
    %v3834 = vrot.slane %v3792, 1
    %v3835 = vsel %vm171, %v3833, %v3834
    %v3836 = vrot.slane %v3793, 1
    %v3837 = vrot.slane %v3794, 1
    %v3838 = vsel %vm171, %v3836, %v3837
    %v3847 = vrot.slane %v3779, 2
    %v3848 = vrot.slane %v3780, 2
    %v3849 = vsel %vm1759, %v3847, %v3848
    %v3850 = vrot.slane %v3781, 2
    %v3851 = vrot.slane %v3782, 2
    %v3852 = vsel %vm1759, %v3850, %v3851
    %v3853 = vrot.slane %v3783, 2
    %v3854 = vrot.slane %v3784, 2
    %v3855 = vsel %vm1759, %v3853, %v3854
    %v3856 = vrot.slane %v3785, 2
    %v3857 = vrot.slane %v3786, 2
    %v3858 = vsel %vm1759, %v3856, %v3857
    %v3859 = vrot.slane %v3787, 2
    %v3860 = vrot.slane %v3788, 2
    %v3861 = vsel %vm1759, %v3859, %v3860
    %v3862 = vrot.slane %v3789, 2
    %v3863 = vrot.slane %v3790, 2
    %v3864 = vsel %vm1759, %v3862, %v3863
    %v3865 = vrot.slane %v3791, 2
    %v3866 = vrot.slane %v3792, 2
    %v3867 = vsel %vm1759, %v3865, %v3866
    %v3868 = vrot.slane %v3793, 2
    %v3869 = vrot.slane %v3794, 2
    %v3870 = vsel %vm1759, %v3868, %v3869
    %v3881 = vrot.slane %v3795, 1
    %v3882 = vrot.slane %v3796, 1
    %v3883 = vsel %vm171, %v3881, %v3882
    %v3885 = vrot.slane %v3795, 2
    %v3886 = vrot.slane %v3796, 2
    %v3887 = vsel %vm1759, %v3885, %v3886
    %v3891 = vrot.slane %v3797, 1
    %v3892 = vrot.slane %v3798, 1
    %v3893 = vsel %vm171, %v3891, %v3892
    %v3895 = vrot.slane %v3797, 2
    %v3896 = vrot.slane %v3798, 2
    %v3897 = vsel %vm1759, %v3895, %v3896
    %v3899 = vpack.c.bf16 %v3781, %v3779
    %v3900 = vpack.c.bf16 %v3820, %v3817
    %v3901 = vpack.c.bf16 %v3852, %v3849
    %v3902 = vpack.c.bf16 %v3783, %v3781
    %v3903 = vpack.c.bf16 %v3823, %v3820
    %v3904 = vpack.c.bf16 %v3855, %v3852
    %v3905 = vpack.c.bf16 %v3785, %v3783
    %v3906 = vpack.c.bf16 %v3826, %v3823
    %v3907 = vpack.c.bf16 %v3858, %v3855
    %v3908 = vpack.c.bf16 %v3787, %v3785
    %v3909 = vpack.c.bf16 %v3829, %v3826
    %v3910 = vpack.c.bf16 %v3861, %v3858
    %v3911 = vpack.c.bf16 %v3789, %v3787
    %v3912 = vpack.c.bf16 %v3832, %v3829
    %v3913 = vpack.c.bf16 %v3864, %v3861
    %v3914 = vpack.c.bf16 %v3791, %v3789
    %v3915 = vpack.c.bf16 %v3835, %v3832
    %v3916 = vpack.c.bf16 %v3867, %v3864
    %v3917 = vpack.c.bf16 %v3793, %v3791
    %v3918 = vpack.c.bf16 %v3838, %v3835
    %v3919 = vpack.c.bf16 %v3870, %v3867
    %v3920 = vpack.c.bf16 %v3795, %v3793
    %v3921 = vpack.c.bf16 %v3883, %v3838
    %v3922 = vpack.c.bf16 %v3887, %v3870
    %v3923 = vpack.c.bf16 %v3797, %v3795
    %v3924 = vpack.c.bf16 %v3893, %v3883
    %v3925 = vpack.c.bf16 %v3897, %v3887
    %s3926 = scalar_lea.vmem %s7, 576
    %v3927 = vld [vmem:[%s3926] sm:$0xf]
    %v3928 = vld [vmem:[%s3926 + $0x4] sm:$0xf]
    %v3929 = vld [vmem:[%s3926 + $0x8] sm:$0xf]
    %v3930 = vld [vmem:[%s3926 + $0xc] sm:$0xf]
    %v3931 = vld [vmem:[%s3926 + $0x10] sm:$0xf]
    %v3932 = vld [vmem:[%s3926 + $0x14] sm:$0xf]
    %v3933 = vld [vmem:[%s3926 + $0x18] sm:$0xf]
    %v3934 = vld [vmem:[%s3926 + $0x1c] sm:$0xf]
    %v3935 = vld [vmem:[%s3926 + $0x20] sm:$0xf]
    %v3936 = vld [vmem:[%s3926 + $0x24] sm:$0xf]
    %v3937 = vld [vmem:[%s3926 + $0x28] sm:$0xf]
    %v3938 = vld [vmem:[%s3926 + $0x2c] sm:$0xf]
    %v3939 = vld [vmem:[%s3926 + $0x30] sm:$0xf]
    %v3940 = vld [vmem:[%s3926 + $0x34] sm:$0xf]
    %v3941 = vld [vmem:[%s3926 + $0x38] sm:$0xf]
    %v3942 = vld [vmem:[%s3926 + $0x3c] sm:$0xf]
    %v3943 = vld [vmem:[%s3926 + $0x40] sm:$0xf]
    %v3944 = vld [vmem:[%s3926 + $0x44] sm:$0xf]
    %v3945 = vld [vmem:[%s3926 + $0x48] sm:$0xf]
    %v3946 = vld [vmem:[%s3926 + $0x4c] sm:$0xf]
    %v3947 = vld [vmem:[%s3926 + $0x50] sm:$0xf]
    %v3948 = vld [vmem:[%s3926 + $0x54] sm:$0xf]
    %v3949 = vld [vmem:[%s3926 + $0x58] sm:$0xf]
    %v3950 = vld [vmem:[%s3926 + $0x5c] sm:$0xf]
    %v3951 = vld [vmem:[%s3926 + $0x60] sm:$0xf]
    %v3952 = vld [vmem:[%s3926 + $0x64] sm:$0xf]
    %v3953 = vld [vmem:[%s3926 + $0x68] sm:$0xf]
    %v3954 = vld [vmem:[%s3926 + $0x6c] sm:$0xf]
    %v3955 = vld [vmem:[%s3926 + $0x70] sm:$0xf]
    %v3956 = vld [vmem:[%s3926 + $0x74] sm:$0xf]
    %v3957 = vld [vmem:[%s3926 + $0x78] sm:$0xf]
    %v3958 = vld [vmem:[%s3926 + $0x7c] sm:$0xf]
    %v3959 = vld [vmem:[%s3926 + $0x80] sm:$0xf]
    %v3960 = vld [vmem:[%s3926 + $0x84] sm:$0xf]
    %v3961 = vld [vmem:[%s3926 + $0x88] sm:$0xf]
    %v3962 = vld [vmem:[%s3926 + $0x8c] sm:$0xf]
    %v3963 = vld [vmem:[%s3926 + $0x90] sm:$0xf]
    %v3964 = vld [vmem:[%s3926 + $0x94] sm:$0xf]
    %v3965 = vld [vmem:[%s3926 + $0x98] sm:$0xf]
    %v3966 = vld [vmem:[%s3926 + $0x9c] sm:$0xf]
    %v3967 = vld [vmem:[%s3926 + $0xa0] sm:$0xf]
    %v3968 = vld [vmem:[%s3926 + $0xa4] sm:$0xf]
    %v3969 = vld [vmem:[%s3926 + $0xa8] sm:$0xf]
    %v3970 = vld [vmem:[%s3926 + $0xac] sm:$0xf]
    %v3971 = vld [vmem:[%s3926 + $0xb0] sm:$0xf]
    %v3972 = vld [vmem:[%s3926 + $0xb4] sm:$0xf]
    %v3973 = vld [vmem:[%s3926 + $0xb8] sm:$0xf]
    %v3974 = vld [vmem:[%s3926 + $0xbc] sm:$0xf]
    %v3975 = vld [vmem:[%s3926 + $0xc0] sm:$0xf]
    %v3976 = vld [vmem:[%s3926 + $0xc4] sm:$0xf]
    %v3977 = vld [vmem:[%s3926 + $0xc8] sm:$0xf]
    %v3978 = vld [vmem:[%s3926 + $0xcc] sm:$0xf]
    %v3979 = vld [vmem:[%s3926 + $0xd0] sm:$0xf]
    %v3980 = vld [vmem:[%s3926 + $0xd4] sm:$0xf]
    %v3981 = vld [vmem:[%s3926 + $0xd8] sm:$0xf]
    %v3982 = vld [vmem:[%s3926 + $0xdc] sm:$0xf]
    %v3983 = vld [vmem:[%s3926 + $0xe0] sm:$0xf]
    %v3984 = vld [vmem:[%s3926 + $0xe4] sm:$0xf]
    %v3985 = vld [vmem:[%s3926 + $0xe8] sm:$0xf]
    %v3986 = vld [vmem:[%s3926 + $0xec] sm:$0xf]
    %v3987 = vld [vmem:[%s3926 + $0xf0] sm:$0xf]
    %v3988 = vld [vmem:[%s3926 + $0xf4] sm:$0xf]
    %v3989 = vld [vmem:[%s3926 + $0xf8] sm:$0xf]
    %v3990 = vld [vmem:[%s3926 + $0xfc] sm:$0xf]
    %v3991 = vld [vmem:[%s3926 + $0x100] sm:$0xf]
    %v3992 = vld [vmem:[%s3926 + $0x104] sm:$0xf]
    %v3993 = vld [vmem:[%s3926 + $0x108] sm:$0xf]
    %v3994 = vld [vmem:[%s3926 + $0x10c] sm:$0xf]
    %v3995 = vld [vmem:[%s3926 + $0x110] sm:$0xf]
    %v3996 = vld [vmem:[%s3926 + $0x114] sm:$0xf]
    %v3997 = vld [vmem:[%s3926 + $0x118] sm:$0xf]
    %v3998 = vld [vmem:[%s3926 + $0x11c] sm:$0xf]
    %v3999 = vld [vmem:[%s3926 + $0x120] sm:$0xf]
    %v4000 = vld [vmem:[%s3926 + $0x124] sm:$0xf]
    %v4001 = vld [vmem:[%s3926 + $0x128] sm:$0xf]
    %v4002 = vld [vmem:[%s3926 + $0x12c] sm:$0xf]
    %v4003 = vld [vmem:[%s3926 + $0x130] sm:$0xf]
    %v4004 = vld [vmem:[%s3926 + $0x134] sm:$0xf]
    %v4005 = vld [vmem:[%s3926 + $0x138] sm:$0xf]
    %v4006 = vld [vmem:[%s3926 + $0x13c] sm:$0xf]
    %v4007 = vld [vmem:[%s3926 + $0x140] sm:$0xf]
    %v4008 = vld [vmem:[%s3926 + $0x144] sm:$0xf]
    %v4009 = vld [vmem:[%s3926 + $0x148] sm:$0xf]
    %v4010 = vld [vmem:[%s3926 + $0x14c] sm:$0xf]
    %v4011 = vld [vmem:[%s3926 + $0x150] sm:$0xf]
    %v4012 = vld [vmem:[%s3926 + $0x154] sm:$0xf]
    %v4013 = vld [vmem:[%s3926 + $0x158] sm:$0xf]
    %v4014 = vld [vmem:[%s3926 + $0x15c] sm:$0xf]
    %v4015 = vld [vmem:[%s3926 + $0x160] sm:$0xf]
    %v4016 = vld [vmem:[%s3926 + $0x164] sm:$0xf]
    %v4017 = vld [vmem:[%s3926 + $0x168] sm:$0xf]
    %v4018 = vld [vmem:[%s3926 + $0x16c] sm:$0xf]
    %v4019 = vld [vmem:[%s3926 + $0x170] sm:$0xf]
    %v4020 = vld [vmem:[%s3926 + $0x174] sm:$0xf]
    %v4021 = vld [vmem:[%s3926 + $0x178] sm:$0xf]
    %v4022 = vld [vmem:[%s3926 + $0x17c] sm:$0xf]
    %v4023 = vld [vmem:[%s3926 + $0x180] sm:$0xf]
    %v4024 = vld [vmem:[%s3926 + $0x184] sm:$0xf]
    %v4025 = vld [vmem:[%s3926 + $0x188] sm:$0xf]
    %v4026 = vld [vmem:[%s3926 + $0x18c] sm:$0xf]
    %v4027 = vld [vmem:[%s3926 + $0x190] sm:$0xf]
    %v4028 = vld [vmem:[%s3926 + $0x194] sm:$0xf]
    %v4029 = vld [vmem:[%s3926 + $0x198] sm:$0xf]
    %v4030 = vld [vmem:[%s3926 + $0x19c] sm:$0xf]
    %v4031 = vld [vmem:[%s3926 + $0x1a0] sm:$0xf]
    %v4032 = vld [vmem:[%s3926 + $0x1a4] sm:$0xf]
    %v4033 = vld [vmem:[%s3926 + $0x1a8] sm:$0xf]
    %v4034 = vld [vmem:[%s3926 + $0x1ac] sm:$0xf]
    %v4035 = vld [vmem:[%s3926 + $0x1b0] sm:$0xf]
    %v4036 = vld [vmem:[%s3926 + $0x1b4] sm:$0xf]
    %v4037 = vld [vmem:[%s3926 + $0x1b8] sm:$0xf]
    %v4038 = vld [vmem:[%s3926 + $0x1bc] sm:$0xf]
    %v4039 = vld [vmem:[%s3926 + $0x1c0] sm:$0xf]
    %v4040 = vld [vmem:[%s3926 + $0x1c4] sm:$0xf]
    %v4041 = vld [vmem:[%s3926 + $0x1c8] sm:$0xf]
    %v4042 = vld [vmem:[%s3926 + $0x1cc] sm:$0xf]
    %v4043 = vld [vmem:[%s3926 + $0x1d0] sm:$0xf]
    %v4044 = vld [vmem:[%s3926 + $0x1d4] sm:$0xf]
    %v4045 = vld [vmem:[%s3926 + $0x1d8] sm:$0xf]
    %v4046 = vld [vmem:[%s3926 + $0x1dc] sm:$0xf]
    %v4047 = vld [vmem:[%s3926 + $0x1e0] sm:$0xf]
    %v4048 = vld [vmem:[%s3926 + $0x1e4] sm:$0xf]
    %v4049 = vld [vmem:[%s3926 + $0x1e8] sm:$0xf]
    %v4050 = vld [vmem:[%s3926 + $0x1ec] sm:$0xf]
    %v4051 = vld [vmem:[%s3926 + $0x1f0] sm:$0xf]
    %v4052 = vld [vmem:[%s3926 + $0x1f4] sm:$0xf]
    %v4053 = vld [vmem:[%s3926 + $0x1f8] sm:$0xf]
    %v4054 = vld [vmem:[%s3926 + $0x1fc] sm:$0xf]
    %v4055 = vld [vmem:[%s3926 + $0x200] sm:$0xf]
    %v4056 = vld [vmem:[%s3926 + $0x204] sm:$0xf]
    %v4057 = vld [vmem:[%s3926 + $0x208] sm:$0xf]
    %v4058 = vld [vmem:[%s3926 + $0x20c] sm:$0xf]
    %v4059 = vld [vmem:[%s3926 + $0x210] sm:$0xf]
    %v4060 = vld [vmem:[%s3926 + $0x214] sm:$0xf]
    %v4061 = vld [vmem:[%s3926 + $0x218] sm:$0xf]
    %v4062 = vld [vmem:[%s3926 + $0x21c] sm:$0xf]
    %v4063 = vld [vmem:[%s3926 + $0x220] sm:$0xf]
    %v4064 = vld [vmem:[%s3926 + $0x224] sm:$0xf]
    %v4065 = vld [vmem:[%s3926 + $0x228] sm:$0xf]
    %v4066 = vld [vmem:[%s3926 + $0x22c] sm:$0xf]
    %v4067 = vld [vmem:[%s3926 + $0x230] sm:$0xf]
    %v4068 = vld [vmem:[%s3926 + $0x234] sm:$0xf]
    %v4069 = vld [vmem:[%s3926 + $0x238] sm:$0xf]
    %v4070 = vld [vmem:[%s3926 + $0x23c] sm:$0xf]
    %v4215 = vunpack.c.l.b16 %v3927
    %v4216 = vunpack.c.l.b16 %v3928
    %v4217 = vunpack.c.l.b16 %v3929
    %v4218 = vunpack.c.l.b16 %v3930
    %v4219 = vunpack.c.l.b16 %v3931
    %v4220 = vunpack.c.l.b16 %v3932
    %v4221 = vunpack.c.l.b16 %v3933
    %v4222 = vunpack.c.l.b16 %v3934
    %v4223 = vunpack.c.l.b16 %v3935
    %v4224 = vunpack.c.l.b16 %v3936
    %v4225 = vunpack.c.l.b16 %v3937
    %v4226 = vunpack.c.l.b16 %v3938
    %v4227 = vunpack.c.l.b16 %v3939
    %v4228 = vunpack.c.l.b16 %v3940
    %v4229 = vunpack.c.l.b16 %v3941
    %v4230 = vunpack.c.l.b16 %v3942
    %v4231 = vunpack.c.l.b16 %v3943
    %v4232 = vunpack.c.l.b16 %v3944
    %v4233 = vunpack.c.l.b16 %v3945
    %v4234 = vunpack.c.l.b16 %v3946
    %v4235 = vunpack.c.l.b16 %v3947
    %v4236 = vunpack.c.l.b16 %v3948
    %v4237 = vunpack.c.l.b16 %v3949
    %v4238 = vunpack.c.l.b16 %v3950
    %v4239 = vunpack.c.l.b16 %v3951
    %v4240 = vunpack.c.l.b16 %v3952
    %v4241 = vunpack.c.l.b16 %v3953
    %v4242 = vunpack.c.l.b16 %v3954
    %v4243 = vunpack.c.l.b16 %v3955
    %v4244 = vunpack.c.l.b16 %v3956
    %v4245 = vunpack.c.l.b16 %v3957
    %v4246 = vunpack.c.l.b16 %v3958
    %v4247 = vunpack.c.l.b16 %v3959
    %v4248 = vunpack.c.l.b16 %v3960
    %v4249 = vunpack.c.l.b16 %v3961
    %v4250 = vunpack.c.l.b16 %v3962
    %v4251 = vunpack.c.l.b16 %v3963
    %v4252 = vunpack.c.l.b16 %v3964
    %v4253 = vunpack.c.l.b16 %v3965
    %v4254 = vunpack.c.l.b16 %v3966
    %v4255 = vunpack.c.l.b16 %v3967
    %v4256 = vunpack.c.l.b16 %v3968
    %v4257 = vunpack.c.l.b16 %v3969
    %v4258 = vunpack.c.l.b16 %v3970
    %v4259 = vunpack.c.l.b16 %v3971
    %v4260 = vunpack.c.l.b16 %v3972
    %v4261 = vunpack.c.l.b16 %v3973
    %v4262 = vunpack.c.l.b16 %v3974
    %v4263 = vunpack.c.l.b16 %v3975
    %v4264 = vunpack.c.l.b16 %v3976
    %v4265 = vunpack.c.l.b16 %v3977
    %v4266 = vunpack.c.l.b16 %v3978
    %v4267 = vunpack.c.l.b16 %v3979
    %v4268 = vunpack.c.l.b16 %v3980
    %v4269 = vunpack.c.l.b16 %v3981
    %v4270 = vunpack.c.l.b16 %v3982
    %v4271 = vunpack.c.l.b16 %v3983
    %v4272 = vunpack.c.l.b16 %v3984
    %v4273 = vunpack.c.l.b16 %v3985
    %v4274 = vunpack.c.l.b16 %v3986
    %v4275 = vunpack.c.l.b16 %v3987
    %v4276 = vunpack.c.l.b16 %v3988
    %v4277 = vunpack.c.l.b16 %v3989
    %v4278 = vunpack.c.l.b16 %v3990
    %v4279 = vunpack.c.l.b16 %v3991
    %v4280 = vunpack.c.l.b16 %v3992
    %v4281 = vunpack.c.l.b16 %v3993
    %v4282 = vunpack.c.l.b16 %v3994
    %v4283 = vunpack.c.l.b16 %v3995
    %v4284 = vunpack.c.l.b16 %v3996
    %v4285 = vunpack.c.l.b16 %v3997
    %v4286 = vunpack.c.l.b16 %v3998
    %v4287 = vunpack.c.l.b16 %v3999
    %v4288 = vunpack.c.l.b16 %v4000
    %v4289 = vunpack.c.l.b16 %v4001
    %v4290 = vunpack.c.l.b16 %v4002
    %v4291 = vunpack.c.l.b16 %v4003
    %v4292 = vunpack.c.l.b16 %v4004
    %v4293 = vunpack.c.l.b16 %v4005
    %v4294 = vunpack.c.l.b16 %v4006
    %v4295 = vunpack.c.l.b16 %v4007
    %v4296 = vunpack.c.l.b16 %v4008
    %v4297 = vunpack.c.l.b16 %v4009
    %v4298 = vunpack.c.l.b16 %v4010
    %v4299 = vunpack.c.l.b16 %v4011
    %v4300 = vunpack.c.l.b16 %v4012
    %v4301 = vunpack.c.l.b16 %v4013
    %v4302 = vunpack.c.l.b16 %v4014
    %v4303 = vunpack.c.l.b16 %v4015
    %v4304 = vunpack.c.l.b16 %v4016
    %v4305 = vunpack.c.l.b16 %v4017
    %v4306 = vunpack.c.l.b16 %v4018
    %v4307 = vunpack.c.l.b16 %v4019
    %v4308 = vunpack.c.l.b16 %v4020
    %v4309 = vunpack.c.l.b16 %v4021
    %v4310 = vunpack.c.l.b16 %v4022
    %v4311 = vunpack.c.l.b16 %v4023
    %v4312 = vunpack.c.l.b16 %v4024
    %v4313 = vunpack.c.l.b16 %v4025
    %v4314 = vunpack.c.l.b16 %v4026
    %v4315 = vunpack.c.l.b16 %v4027
    %v4316 = vunpack.c.l.b16 %v4028
    %v4317 = vunpack.c.l.b16 %v4029
    %v4318 = vunpack.c.l.b16 %v4030
    %v4319 = vunpack.c.l.b16 %v4031
    %v4320 = vunpack.c.l.b16 %v4032
    %v4321 = vunpack.c.l.b16 %v4033
    %v4322 = vunpack.c.l.b16 %v4034
    %v4323 = vunpack.c.l.b16 %v4035
    %v4324 = vunpack.c.l.b16 %v4036
    %v4325 = vunpack.c.l.b16 %v4037
    %v4326 = vunpack.c.l.b16 %v4038
    %v4327 = vunpack.c.l.b16 %v4039
    %v4328 = vunpack.c.l.b16 %v4040
    %v4329 = vunpack.c.l.b16 %v4041
    %v4330 = vunpack.c.l.b16 %v4042
    %v4331 = vunpack.c.l.b16 %v4043
    %v4332 = vunpack.c.l.b16 %v4044
    %v4333 = vunpack.c.l.b16 %v4045
    %v4334 = vunpack.c.l.b16 %v4046
    %v4335 = vunpack.c.l.b16 %v4047
    %v4336 = vunpack.c.l.b16 %v4048
    %v4337 = vunpack.c.l.b16 %v4049
    %v4338 = vunpack.c.l.b16 %v4050
    %v4339 = vunpack.c.l.b16 %v4051
    %v4340 = vunpack.c.l.b16 %v4052
    %v4341 = vunpack.c.l.b16 %v4053
    %v4342 = vunpack.c.l.b16 %v4054
    %v4343 = vunpack.c.l.b16 %v4055
    %v4344 = vunpack.c.l.b16 %v4056
    %v4345 = vunpack.c.l.b16 %v4057
    %v4346 = vunpack.c.l.b16 %v4058
    %v4347 = vunpack.c.l.b16 %v4059
    %v4348 = vunpack.c.l.b16 %v4060
    %v4349 = vunpack.c.l.b16 %v4061
    %v4350 = vunpack.c.l.b16 %v4062
    %v4351 = vunpack.c.l.b16 %v4063
    %v4352 = vunpack.c.l.b16 %v4064
    %v4353 = vunpack.c.l.b16 %v4065
    %v4354 = vunpack.c.l.b16 %v4066
    %v4355 = vunpack.c.l.b16 %v4067
    %v4356 = vunpack.c.l.b16 %v4068
    %v4357 = vunpack.c.l.b16 %v4069
    %v4358 = vunpack.c.l.b16 %v4070
    %v4359 = vpack.c.b16 %v4216, %v4215
    %v4360 = vpack.c.b16 %v4218, %v4217
    %v4361 = vpack.c.b16 %v4220, %v4219
    %v4362 = vpack.c.b16 %v4222, %v4221
    %v4363 = vpack.c.b16 %v4224, %v4223
    %v4364 = vpack.c.b16 %v4226, %v4225
    %v4365 = vpack.c.b16 %v4228, %v4227
    %v4366 = vpack.c.b16 %v4230, %v4229
    %v4367 = vpack.c.b16 %v4232, %v4231
    %v4368 = vpack.c.b16 %v4234, %v4233
    %v4369 = vpack.c.b16 %v4236, %v4235
    %v4370 = vpack.c.b16 %v4238, %v4237
    %v4371 = vpack.c.b16 %v4240, %v4239
    %v4372 = vpack.c.b16 %v4242, %v4241
    %v4373 = vpack.c.b16 %v4244, %v4243
    %v4374 = vpack.c.b16 %v4246, %v4245
    %v4375 = vpack.c.b16 %v4248, %v4247
    %v4376 = vpack.c.b16 %v4250, %v4249
    %v4377 = vpack.c.b16 %v4252, %v4251
    %v4378 = vpack.c.b16 %v4254, %v4253
    %v4379 = vpack.c.b16 %v4256, %v4255
    %v4380 = vpack.c.b16 %v4258, %v4257
    %v4381 = vpack.c.b16 %v4260, %v4259
    %v4382 = vpack.c.b16 %v4262, %v4261
    %v4383 = vpack.c.b16 %v4264, %v4263
    %v4384 = vpack.c.b16 %v4266, %v4265
    %v4385 = vpack.c.b16 %v4268, %v4267
    %v4386 = vpack.c.b16 %v4270, %v4269
    %v4387 = vpack.c.b16 %v4272, %v4271
    %v4388 = vpack.c.b16 %v4274, %v4273
    %v4389 = vpack.c.b16 %v4276, %v4275
    %v4390 = vpack.c.b16 %v4278, %v4277
    %v4391 = vpack.c.b16 %v4280, %v4279
    %v4392 = vpack.c.b16 %v4282, %v4281
    %v4393 = vpack.c.b16 %v4284, %v4283
    %v4394 = vpack.c.b16 %v4286, %v4285
    %v4395 = vpack.c.b16 %v4288, %v4287
    %v4396 = vpack.c.b16 %v4290, %v4289
    %v4397 = vpack.c.b16 %v4292, %v4291
    %v4398 = vpack.c.b16 %v4294, %v4293
    %v4399 = vpack.c.b16 %v4296, %v4295
    %v4400 = vpack.c.b16 %v4298, %v4297
    %v4401 = vpack.c.b16 %v4300, %v4299
    %v4402 = vpack.c.b16 %v4302, %v4301
    %v4403 = vpack.c.b16 %v4304, %v4303
    %v4404 = vpack.c.b16 %v4306, %v4305
    %v4405 = vpack.c.b16 %v4308, %v4307
    %v4406 = vpack.c.b16 %v4310, %v4309
    %v4407 = vpack.c.b16 %v4312, %v4311
    %v4408 = vpack.c.b16 %v4314, %v4313
    %v4409 = vpack.c.b16 %v4316, %v4315
    %v4410 = vpack.c.b16 %v4318, %v4317
    %v4411 = vpack.c.b16 %v4320, %v4319
    %v4412 = vpack.c.b16 %v4322, %v4321
    %v4413 = vpack.c.b16 %v4324, %v4323
    %v4414 = vpack.c.b16 %v4326, %v4325
    %v4415 = vpack.c.b16 %v4328, %v4327
    %v4416 = vpack.c.b16 %v4330, %v4329
    %v4417 = vpack.c.b16 %v4332, %v4331
    %v4418 = vpack.c.b16 %v4334, %v4333
    %v4419 = vpack.c.b16 %v4336, %v4335
    %v4420 = vpack.c.b16 %v4338, %v4337
    %v4421 = vpack.c.b16 %v4340, %v4339
    %v4422 = vpack.c.b16 %v4342, %v4341
    %v4423 = vpack.c.b16 %v4344, %v4343
    %v4424 = vpack.c.b16 %v4346, %v4345
    %v4425 = vpack.c.b16 %v4348, %v4347
    %v4426 = vpack.c.b16 %v4350, %v4349
    %v4427 = vpack.c.b16 %v4352, %v4351
    %v4428 = vpack.c.b16 %v4354, %v4353
    %v4429 = vpack.c.b16 %v4356, %v4355
    %v4430 = vpack.c.b16 %v4358, %v4357
    %4503 = vmatprep.subr.bf16.mxu0 0
    %4504 = vmatpush1.bf16.msra.mxu0 %v4359
    %4505 = vmatprep.subr.bf16.mxu0 0
    %4506 = vmatpush1.bf16.msra.mxu0 %v4360
    %4507 = vmatprep.subr.bf16.mxu0 0
    %4508 = vmatpush1.bf16.msra.mxu0 %v4361
    %4509 = vmatprep.subr.bf16.mxu0 0
    %4510 = vmatpush1.bf16.msra.mxu0 %v4362
    %4511 = vmatprep.subr.bf16.mxu0 0
    %4512 = vmatpush1.bf16.msra.mxu0 %v4363
    %4513 = vmatprep.subr.bf16.mxu0 0
    %4514 = vmatpush1.bf16.msra.mxu0 %v4364
    %4515 = vmatprep.subr.bf16.mxu0 0
    %4516 = vmatpush1.bf16.msra.mxu0 %v4365
    %4517 = vmatprep.subr.bf16.mxu0 0
    %4518 = vmatpush1.bf16.msra.mxu0 %v4366
    %4519 = vmatprep.subr.bf16.mxu0 0
    %4520 = vmatpush1.bf16.msra.mxu0 %v4367
    %4521 = vmatprep.subr.bf16.mxu0 0
    %4522 = vmatpush1.bf16.msra.mxu0 %v4368
    %4523 = vmatprep.subr.bf16.mxu0 0
    %4524 = vmatpush1.bf16.msra.mxu0 %v4369
    %4525 = vmatprep.subr.bf16.mxu0 0
    %4526 = vmatpush1.bf16.msra.mxu0 %v4370
    %4527 = vmatprep.subr.bf16.mxu0 0
    %4528 = vmatpush1.bf16.msra.mxu0 %v4371
    %4529 = vmatprep.subr.bf16.mxu0 0
    %4530 = vmatpush1.bf16.msra.mxu0 %v4372
    %4531 = vmatprep.subr.bf16.mxu0 0
    %4532 = vmatpush1.bf16.msra.mxu0 %v4373
    %4533 = vmatprep.subr.bf16.mxu0 0
    %4534 = vmatpush1.bf16.msra.mxu0 %v4374
    %4535 = vmatprep.mubr.bf16.mxu0 %v3753
    %4536 = vmatmul.mubr.bf16.gmra.mrb[0].mxu0 %v3752
    %v4537 = vpop.f32.mrb[0].mxu0
    %v4538 = vadd.f32 0.0, %v4537
    %v4539 = vpop.f32.mrb[0].mxu0
    %v4540 = vpop.f32.mrb[0].mxu0
    %v4541 = vadd.f32 0.0, %v4540
    %v4542 = vpop.f32.mrb[0].mxu0
    %4543 = vmatprep.mubr.bf16.mxu0 %v3759
    %4544 = vmatmul.mubr.bf16.gmra.mrb[0].mxu0 %v3758
    %v4545 = vpop.f32.mrb[0].mxu0
    %v4546 = vadd.f32 0.0, %v4545
    %v4547 = vpop.f32.mrb[0].mxu0
    %v4548 = vpop.f32.mrb[0].mxu0
    %v4549 = vadd.f32 0.0, %v4548
    %v4550 = vpop.f32.mrb[0].mxu0
    %4551 = vmatprep.mubr.bf16.mxu0 %v3765
    %4552 = vmatmul.mubr.bf16.gmra.mrb[0].mxu0 %v3764
    %v4553 = vpop.f32.mrb[0].mxu0
    %v4554 = vadd.f32 0.0, %v4553
    %v4555 = vpop.f32.mrb[0].mxu0
    %v4556 = vpop.f32.mrb[0].mxu0
    %v4557 = vadd.f32 0.0, %v4556
    %v4558 = vpop.f32.mrb[0].mxu0
    %4559 = vmatprep.mubr.bf16.mxu0 %v3771
    %4560 = vmatmul.mubr.bf16.gmra.mrb[0].mxu0 %v3770
    %v4561 = vpop.f32.mrb[0].mxu0
    %v4562 = vadd.f32 0.0, %v4561
    %v4563 = vpop.f32.mrb[0].mxu0
    %v4564 = vpop.f32.mrb[0].mxu0
    %v4565 = vadd.f32 0.0, %v4564
    %v4566 = vpop.f32.mrb[0].mxu0
    %4567 = vmatprep.mubr.bf16.mxu0 %v3900
    %4568 = vmatmul.mubr.bf16.gmra.mrb[0].mxu0 %v3899
    %v4569 = vpop.f32.mrb[0].mxu0
    %v4570 = vadd.f32 0.0, %v4569
    %v4571 = vpop.f32.mrb[0].mxu0
    %v4572 = vpop.f32.mrb[0].mxu0
    %v4573 = vadd.f32 0.0, %v4572
    %v4574 = vpop.f32.mrb[0].mxu0
    %4575 = vmatprep.mubr.bf16.mxu0 %v3906
    %4576 = vmatmul.mubr.bf16.gmra.mrb[0].mxu0 %v3905
    %v4577 = vpop.f32.mrb[0].mxu0
    %v4578 = vadd.f32 0.0, %v4577
    %v4579 = vpop.f32.mrb[0].mxu0
    %v4580 = vpop.f32.mrb[0].mxu0
    %v4581 = vadd.f32 0.0, %v4580
    %v4582 = vpop.f32.mrb[0].mxu0
    %4583 = vmatprep.mubr.bf16.mxu0 %v3912
    %4584 = vmatmul.mubr.bf16.gmra.mrb[0].mxu0 %v3911
    %v4585 = vpop.f32.mrb[0].mxu0
    %v4586 = vadd.f32 0.0, %v4585
    %v4587 = vpop.f32.mrb[0].mxu0
    %v4588 = vpop.f32.mrb[0].mxu0
    %v4589 = vadd.f32 0.0, %v4588
    %v4590 = vpop.f32.mrb[0].mxu0
    %4591 = vmatprep.mubr.bf16.mxu0 %v3918
    %4592 = vmatmul.mubr.bf16.gmra.mrb[0].mxu0 %v3917
    %v4593 = vpop.f32.mrb[0].mxu0
    %v4594 = vadd.f32 0.0, %v4593
    %v4595 = vpop.f32.mrb[0].mxu0
    %v4596 = vpop.f32.mrb[0].mxu0
    %v4597 = vadd.f32 0.0, %v4596
    %v4598 = vpop.f32.mrb[0].mxu0
    %4599 = vdwg.mxu0
    %4600 = vmatprep.subr.bf16.mxu0 0
    %4601 = vmatpush1.bf16.msra.mxu0 %v4375
    %4602 = vmatprep.subr.bf16.mxu0 0
    %4603 = vmatpush1.bf16.msra.mxu0 %v4376
    %4604 = vmatprep.subr.bf16.mxu0 0
    %4605 = vmatpush1.bf16.msra.mxu0 %v4377
    %4606 = vmatprep.subr.bf16.mxu0 0
    %4607 = vmatpush1.bf16.msra.mxu0 %v4378
    %4608 = vmatprep.subr.bf16.mxu0 0
    %4609 = vmatpush1.bf16.msra.mxu0 %v4379
    %4610 = vmatprep.subr.bf16.mxu0 0
    %4611 = vmatpush1.bf16.msra.mxu0 %v4380
    %4612 = vmatprep.subr.bf16.mxu0 0
    %4613 = vmatpush1.bf16.msra.mxu0 %v4381
    %4614 = vmatprep.subr.bf16.mxu0 0
    %4615 = vmatpush1.bf16.msra.mxu0 %v4382
    %4616 = vmatprep.subr.bf16.mxu0 0
    %4617 = vmatpush1.bf16.msra.mxu0 %v4383
    %4618 = vmatprep.subr.bf16.mxu0 0
    %4619 = vmatpush1.bf16.msra.mxu0 %v4384
    %4620 = vmatprep.subr.bf16.mxu0 0
    %4621 = vmatpush1.bf16.msra.mxu0 %v4385
    %4622 = vmatprep.subr.bf16.mxu0 0
    %4623 = vmatpush1.bf16.msra.mxu0 %v4386
    %4624 = vmatprep.subr.bf16.mxu0 0
    %4625 = vmatpush1.bf16.msra.mxu0 %v4387
    %4626 = vmatprep.subr.bf16.mxu0 0
    %4627 = vmatpush1.bf16.msra.mxu0 %v4388
    %4628 = vmatprep.subr.bf16.mxu0 0
    %4629 = vmatpush1.bf16.msra.mxu0 %v4389
    %4630 = vmatprep.subr.bf16.mxu0 0
    %4631 = vmatpush1.bf16.msra.mxu0 %v4390
    %4632 = vmatprep.mubr.bf16.mxu0 %v3755
    %4633 = vmatmul.mubr.bf16.gmra.mrb[0].mxu0 %v3754
    %v4634 = vpop.f32.mrb[0].mxu0
    %v4635 = vadd.f32 %v4538, %v4634
    %v4636 = vpop.f32.mrb[0].mxu0
    %v4637 = vpop.f32.mrb[0].mxu0
    %v4638 = vadd.f32 %v4541, %v4637
    %v4639 = vpop.f32.mrb[0].mxu0
    %4640 = vmatprep.mubr.bf16.mxu0 %v3761
    %4641 = vmatmul.mubr.bf16.gmra.mrb[0].mxu0 %v3760
    %v4642 = vpop.f32.mrb[0].mxu0
    %v4643 = vadd.f32 %v4546, %v4642
    %v4644 = vpop.f32.mrb[0].mxu0
    %v4645 = vpop.f32.mrb[0].mxu0
    %v4646 = vadd.f32 %v4549, %v4645
    %v4647 = vpop.f32.mrb[0].mxu0
    %4648 = vmatprep.mubr.bf16.mxu0 %v3767
    %4649 = vmatmul.mubr.bf16.gmra.mrb[0].mxu0 %v3766
    %v4650 = vpop.f32.mrb[0].mxu0
    %v4651 = vadd.f32 %v4554, %v4650
    %v4652 = vpop.f32.mrb[0].mxu0
    %v4653 = vpop.f32.mrb[0].mxu0
    %v4654 = vadd.f32 %v4557, %v4653
    %v4655 = vpop.f32.mrb[0].mxu0
    %4656 = vmatprep.mubr.bf16.mxu0 %v3773
    %4657 = vmatmul.mubr.bf16.gmra.mrb[0].mxu0 %v3772
    %v4658 = vpop.f32.mrb[0].mxu0
    %v4659 = vadd.f32 %v4562, %v4658
    %v4660 = vpop.f32.mrb[0].mxu0
    %v4661 = vpop.f32.mrb[0].mxu0
    %v4662 = vadd.f32 %v4565, %v4661
    %v4663 = vpop.f32.mrb[0].mxu0
    %4664 = vmatprep.mubr.bf16.mxu0 %v3902
    %4665 = vmatmul.mubr.bf16.gmra.mrb[0].mxu0 %v3901
    %v4666 = vpop.f32.mrb[0].mxu0
    %v4667 = vadd.f32 %v4570, %v4666
    %v4668 = vpop.f32.mrb[0].mxu0
    %v4669 = vpop.f32.mrb[0].mxu0
    %v4670 = vadd.f32 %v4573, %v4669
    %v4671 = vpop.f32.mrb[0].mxu0
    %4672 = vmatprep.mubr.bf16.mxu0 %v3908
    %4673 = vmatmul.mubr.bf16.gmra.mrb[0].mxu0 %v3907
    %v4674 = vpop.f32.mrb[0].mxu0
    %v4675 = vadd.f32 %v4578, %v4674
    %v4676 = vpop.f32.mrb[0].mxu0
    %v4677 = vpop.f32.mrb[0].mxu0
    %v4678 = vadd.f32 %v4581, %v4677
    %v4679 = vpop.f32.mrb[0].mxu0
    %4680 = vmatprep.mubr.bf16.mxu0 %v3914
    %4681 = vmatmul.mubr.bf16.gmra.mrb[0].mxu0 %v3913
    %v4682 = vpop.f32.mrb[0].mxu0
    %v4683 = vadd.f32 %v4586, %v4682
    %v4684 = vpop.f32.mrb[0].mxu0
    %v4685 = vpop.f32.mrb[0].mxu0
    %v4686 = vadd.f32 %v4589, %v4685
    %v4687 = vpop.f32.mrb[0].mxu0
    %4688 = vmatprep.mubr.bf16.mxu0 %v3920
    %4689 = vmatmul.mubr.bf16.gmra.mrb[0].mxu0 %v3919
    %v4690 = vpop.f32.mrb[0].mxu0
    %v4691 = vadd.f32 %v4594, %v4690
    %v4692 = vpop.f32.mrb[0].mxu0
    %v4693 = vpop.f32.mrb[0].mxu0
    %v4694 = vadd.f32 %v4597, %v4693
    %v4695 = vpop.f32.mrb[0].mxu0
    %4696 = vdwg.mxu0
    %4697 = vmatprep.subr.bf16.mxu0 0
    %4698 = vmatpush1.bf16.msra.mxu0 %v4391
    %4699 = vmatprep.subr.bf16.mxu0 0
    %4700 = vmatpush1.bf16.msra.mxu0 %v4392
    %4701 = vmatprep.subr.bf16.mxu0 0
    %4702 = vmatpush1.bf16.msra.mxu0 %v4393
    %4703 = vmatprep.subr.bf16.mxu0 0
    %4704 = vmatpush1.bf16.msra.mxu0 %v4394
    %4705 = vmatprep.subr.bf16.mxu0 0
    %4706 = vmatpush1.bf16.msra.mxu0 %v4395
    %4707 = vmatprep.subr.bf16.mxu0 0
    %4708 = vmatpush1.bf16.msra.mxu0 %v4396
    %4709 = vmatprep.subr.bf16.mxu0 0
    %4710 = vmatpush1.bf16.msra.mxu0 %v4397
    %4711 = vmatprep.subr.bf16.mxu0 0
    %4712 = vmatpush1.bf16.msra.mxu0 %v4398
    %4713 = vmatprep.subr.bf16.mxu0 0
    %4714 = vmatpush1.bf16.msra.mxu0 %v4399
    %4715 = vmatprep.subr.bf16.mxu0 0
    %4716 = vmatpush1.bf16.msra.mxu0 %v4400
    %4717 = vmatprep.subr.bf16.mxu0 0
    %4718 = vmatpush1.bf16.msra.mxu0 %v4401
    %4719 = vmatprep.subr.bf16.mxu0 0
    %4720 = vmatpush1.bf16.msra.mxu0 %v4402
    %4721 = vmatprep.subr.bf16.mxu0 0
    %4722 = vmatpush1.bf16.msra.mxu0 %v4403
    %4723 = vmatprep.subr.bf16.mxu0 0
    %4724 = vmatpush1.bf16.msra.mxu0 %v4404
    %4725 = vmatprep.subr.bf16.mxu0 0
    %4726 = vmatpush1.bf16.msra.mxu0 %v4405
    %4727 = vmatprep.subr.bf16.mxu0 0
    %4728 = vmatpush1.bf16.msra.mxu0 %v4406
    %4729 = vmatprep.mubr.bf16.mxu0 %v3757
    %4730 = vmatmul.mubr.bf16.gmra.mrb[0].mxu0 %v3756
    %v4731 = vpop.f32.mrb[0].mxu0
    %v4732 = vadd.f32 %v4635, %v4731
    %v4733 = vpop.f32.mrb[0].mxu0
    %v4734 = vpop.f32.mrb[0].mxu0
    %v4735 = vadd.f32 %v4638, %v4734
    %v4736 = vpop.f32.mrb[0].mxu0
    %4737 = vmatprep.mubr.bf16.mxu0 %v3763
    %4738 = vmatmul.mubr.bf16.gmra.mrb[0].mxu0 %v3762
    %v4739 = vpop.f32.mrb[0].mxu0
    %v4740 = vadd.f32 %v4643, %v4739
    %v4741 = vpop.f32.mrb[0].mxu0
    %v4742 = vpop.f32.mrb[0].mxu0
    %v4743 = vadd.f32 %v4646, %v4742
    %v4744 = vpop.f32.mrb[0].mxu0
    %4745 = vmatprep.mubr.bf16.mxu0 %v3769
    %4746 = vmatmul.mubr.bf16.gmra.mrb[0].mxu0 %v3768
    %v4747 = vpop.f32.mrb[0].mxu0
    %v4748 = vadd.f32 %v4651, %v4747
    %v4749 = vpop.f32.mrb[0].mxu0
    %v4750 = vpop.f32.mrb[0].mxu0
    %v4751 = vadd.f32 %v4654, %v4750
    %v4752 = vpop.f32.mrb[0].mxu0
    %4753 = vmatprep.mubr.bf16.mxu0 %v3775
    %4754 = vmatmul.mubr.bf16.gmra.mrb[0].mxu0 %v3774
    %v4755 = vpop.f32.mrb[0].mxu0
    %v4756 = vadd.f32 %v4659, %v4755
    %v4757 = vpop.f32.mrb[0].mxu0
    %v4758 = vpop.f32.mrb[0].mxu0
    %v4759 = vadd.f32 %v4662, %v4758
    %v4760 = vpop.f32.mrb[0].mxu0
    %4761 = vmatprep.mubr.bf16.mxu0 %v3904
    %4762 = vmatmul.mubr.bf16.gmra.mrb[0].mxu0 %v3903
    %v4763 = vpop.f32.mrb[0].mxu0
    %v4764 = vadd.f32 %v4667, %v4763
    %v4765 = vpop.f32.mrb[0].mxu0
    %v4766 = vpop.f32.mrb[0].mxu0
    %v4767 = vadd.f32 %v4670, %v4766
    %v4768 = vpop.f32.mrb[0].mxu0
    %4769 = vmatprep.mubr.bf16.mxu0 %v3910
    %4770 = vmatmul.mubr.bf16.gmra.mrb[0].mxu0 %v3909
    %v4771 = vpop.f32.mrb[0].mxu0
    %v4772 = vadd.f32 %v4675, %v4771
    %v4773 = vpop.f32.mrb[0].mxu0
    %v4774 = vpop.f32.mrb[0].mxu0
    %v4775 = vadd.f32 %v4678, %v4774
    %v4776 = vpop.f32.mrb[0].mxu0
    %4777 = vmatprep.mubr.bf16.mxu0 %v3916
    %4778 = vmatmul.mubr.bf16.gmra.mrb[0].mxu0 %v3915
    %v4779 = vpop.f32.mrb[0].mxu0
    %v4780 = vadd.f32 %v4683, %v4779
    %v4781 = vpop.f32.mrb[0].mxu0
    %v4782 = vpop.f32.mrb[0].mxu0
    %v4783 = vadd.f32 %v4686, %v4782
    %v4784 = vpop.f32.mrb[0].mxu0
    %4785 = vmatprep.mubr.bf16.mxu0 %v3922
    %4786 = vmatmul.mubr.bf16.gmra.mrb[0].mxu0 %v3921
    %v4787 = vpop.f32.mrb[0].mxu0
    %v4788 = vadd.f32 %v4691, %v4787
    %v4789 = vpop.f32.mrb[0].mxu0
    %v4790 = vpop.f32.mrb[0].mxu0
    %v4791 = vadd.f32 %v4694, %v4790
    %v4792 = vpop.f32.mrb[0].mxu0
    %4793 = vdwg.mxu0
    %4794 = vmatprep.subr.bf16.mxu0 0
    %4795 = vmatpush1.bf16.msra.mxu0 %v4407
    %4796 = vmatprep.subr.bf16.mxu0 0
    %4797 = vmatpush1.bf16.msra.mxu0 %v4408
    %4798 = vmatprep.subr.bf16.mxu0 0
    %4799 = vmatpush1.bf16.msra.mxu0 %v4409
    %4800 = vmatprep.subr.bf16.mxu0 0
    %4801 = vmatpush1.bf16.msra.mxu0 %v4410
    %4802 = vmatprep.subr.bf16.mxu0 0
    %4803 = vmatpush1.bf16.msra.mxu0 %v4411
    %4804 = vmatprep.subr.bf16.mxu0 0
    %4805 = vmatpush1.bf16.msra.mxu0 %v4412
    %4806 = vmatprep.subr.bf16.mxu0 0
    %4807 = vmatpush1.bf16.msra.mxu0 %v4413
    %4808 = vmatprep.subr.bf16.mxu0 0
    %4809 = vmatpush1.bf16.msra.mxu0 %v4414
    %4810 = vmatprep.subr.bf16.mxu0 0
    %4811 = vmatpush1.bf16.msra.mxu0 %v4415
    %4812 = vmatprep.subr.bf16.mxu0 0
    %4813 = vmatpush1.bf16.msra.mxu0 %v4416
    %4814 = vmatprep.subr.bf16.mxu0 0
    %4815 = vmatpush1.bf16.msra.mxu0 %v4417
    %4816 = vmatprep.subr.bf16.mxu0 0
    %4817 = vmatpush1.bf16.msra.mxu0 %v4418
    %4818 = vmatprep.subr.bf16.mxu0 0
    %4819 = vmatpush1.bf16.msra.mxu0 %v4419
    %4820 = vmatprep.subr.bf16.mxu0 0
    %4821 = vmatpush1.bf16.msra.mxu0 %v4420
    %4822 = vmatprep.subr.bf16.mxu0 0
    %4823 = vmatpush1.bf16.msra.mxu0 %v4421
    %4824 = vmatprep.subr.bf16.mxu0 0
    %4825 = vmatpush1.bf16.msra.mxu0 %v4422
    %4826 = vmatprep.mubr.bf16.mxu0 %v3759
    %4827 = vmatmul.mubr.bf16.gmra.mrb[0].mxu0 %v3758
    %v4828 = vpop.f32.mrb[0].mxu0
    %v4829 = vadd.f32 %v4732, %v4828
    %v4830 = vpop.f32.mrb[0].mxu0
    %v4831 = vpop.f32.mrb[0].mxu0
    %v4832 = vadd.f32 %v4735, %v4831
    %v4833 = vpop.f32.mrb[0].mxu0
    %4834 = vmatprep.mubr.bf16.mxu0 %v3765
    %4835 = vmatmul.mubr.bf16.gmra.mrb[0].mxu0 %v3764
    %v4836 = vpop.f32.mrb[0].mxu0
    %v4837 = vadd.f32 %v4740, %v4836
    %v4838 = vpop.f32.mrb[0].mxu0
    %v4839 = vpop.f32.mrb[0].mxu0
    %v4840 = vadd.f32 %v4743, %v4839
    %v4841 = vpop.f32.mrb[0].mxu0
    %4842 = vmatprep.mubr.bf16.mxu0 %v3771
    %4843 = vmatmul.mubr.bf16.gmra.mrb[0].mxu0 %v3770
    %v4844 = vpop.f32.mrb[0].mxu0
    %v4845 = vadd.f32 %v4748, %v4844
    %v4846 = vpop.f32.mrb[0].mxu0
    %v4847 = vpop.f32.mrb[0].mxu0
    %v4848 = vadd.f32 %v4751, %v4847
    %v4849 = vpop.f32.mrb[0].mxu0
    %4850 = vmatprep.mubr.bf16.mxu0 %v3777
    %4851 = vmatmul.mubr.bf16.gmra.mrb[0].mxu0 %v3776
    %v4852 = vpop.f32.mrb[0].mxu0
    %v4853 = vadd.f32 %v4756, %v4852
    %v4854 = vpop.f32.mrb[0].mxu0
    %v4855 = vpop.f32.mrb[0].mxu0
    %v4856 = vadd.f32 %v4759, %v4855
    %v4857 = vpop.f32.mrb[0].mxu0
    %4858 = vmatprep.mubr.bf16.mxu0 %v3906
    %4859 = vmatmul.mubr.bf16.gmra.mrb[0].mxu0 %v3905
    %v4860 = vpop.f32.mrb[0].mxu0
    %v4861 = vadd.f32 %v4764, %v4860
    %v4862 = vpop.f32.mrb[0].mxu0
    %v4863 = vpop.f32.mrb[0].mxu0
    %v4864 = vadd.f32 %v4767, %v4863
    %v4865 = vpop.f32.mrb[0].mxu0
    %4866 = vmatprep.mubr.bf16.mxu0 %v3912
    %4867 = vmatmul.mubr.bf16.gmra.mrb[0].mxu0 %v3911
    %v4868 = vpop.f32.mrb[0].mxu0
    %v4869 = vadd.f32 %v4772, %v4868
    %v4870 = vpop.f32.mrb[0].mxu0
    %v4871 = vpop.f32.mrb[0].mxu0
    %v4872 = vadd.f32 %v4775, %v4871
    %v4873 = vpop.f32.mrb[0].mxu0
    %4874 = vmatprep.mubr.bf16.mxu0 %v3918
    %4875 = vmatmul.mubr.bf16.gmra.mrb[0].mxu0 %v3917
    %v4876 = vpop.f32.mrb[0].mxu0
    %v4877 = vadd.f32 %v4780, %v4876
    %v4878 = vpop.f32.mrb[0].mxu0
    %v4879 = vpop.f32.mrb[0].mxu0
    %v4880 = vadd.f32 %v4783, %v4879
    %v4881 = vpop.f32.mrb[0].mxu0
    %4882 = vmatprep.mubr.bf16.mxu0 %v3924
    %4883 = vmatmul.mubr.bf16.gmra.mrb[0].mxu0 %v3923
    %v4884 = vpop.f32.mrb[0].mxu0
    %v4885 = vadd.f32 %v4788, %v4884
    %v4886 = vpop.f32.mrb[0].mxu0
    %v4887 = vpop.f32.mrb[0].mxu0
    %v4888 = vadd.f32 %v4791, %v4887
    %v4889 = vpop.f32.mrb[0].mxu0
    %4890 = vdwg.mxu0
    %4891 = vmatprep.subr.bf16.mxu0 0
    %4892 = vmatpush1.bf16.msra.mxu0 %v4423
    %4893 = vmatprep.subr.bf16.mxu0 0
    %4894 = vmatpush1.bf16.msra.mxu0 %v4424
    %4895 = vmatprep.subr.bf16.mxu0 0
    %4896 = vmatpush1.bf16.msra.mxu0 %v4425
    %4897 = vmatprep.subr.bf16.mxu0 0
    %4898 = vmatpush1.bf16.msra.mxu0 %v4426
    %4899 = vmatprep.subr.bf16.mxu0 0
    %4900 = vmatpush1.bf16.msra.mxu0 %v4427
    %4901 = vmatprep.subr.bf16.mxu0 0
    %4902 = vmatpush1.bf16.msra.mxu0 %v4428
    %4903 = vmatprep.subr.bf16.mxu0 0
    %4904 = vmatpush1.bf16.msra.mxu0 %v4429
    %4905 = vmatprep.subr.bf16.mxu0 0
    %4906 = vmatpush1.bf16.msra.mxu0 %v4430
    %4907 = vmatprep.subr.bf16.mxu0 0
    %4908 = vmatpush1.bf16.msra.mxu0 0
    %4909 = vmatprep.subr.bf16.mxu0 0
    %4910 = vmatpush1.bf16.msra.mxu0 0
    %4911 = vmatprep.subr.bf16.mxu0 0
    %4912 = vmatpush1.bf16.msra.mxu0 0
    %4913 = vmatprep.subr.bf16.mxu0 0
    %4914 = vmatpush1.bf16.msra.mxu0 0
    %4915 = vmatprep.subr.bf16.mxu0 0
    %4916 = vmatpush1.bf16.msra.mxu0 0
    %4917 = vmatprep.subr.bf16.mxu0 0
    %4918 = vmatpush1.bf16.msra.mxu0 0
    %4919 = vmatprep.subr.bf16.mxu0 0
    %4920 = vmatpush1.bf16.msra.mxu0 0
    %4921 = vmatprep.subr.bf16.mxu0 0
    %4922 = vmatpush1.bf16.msra.mxu0 0
    %4923 = vmatprep.mubr.bf16.mxu0 0
    %4924 = vmatmul.mubr.bf16.gmra.mrb[0].mxu0 %v3760
    %v4925 = vpop.f32.mrb[0].mxu0
    %v4926 = vadd.f32 %v4829, %v4925
    %v4927 = vpop.f32.mrb[0].mxu0
    %v4928 = vpop.f32.mrb[0].mxu0
    %v4929 = vadd.f32 %v4832, %v4928
    %v4930 = vpop.f32.mrb[0].mxu0
    %4931 = vmatprep.mubr.bf16.mxu0 0
    %4932 = vmatmul.mubr.bf16.gmra.mrb[0].mxu0 %v3766
    %v4933 = vpop.f32.mrb[0].mxu0
    %v4934 = vadd.f32 %v4837, %v4933
    %v4935 = vpop.f32.mrb[0].mxu0
    %v4936 = vpop.f32.mrb[0].mxu0
    %v4937 = vadd.f32 %v4840, %v4936
    %v4938 = vpop.f32.mrb[0].mxu0
    %4939 = vmatprep.mubr.bf16.mxu0 0
    %4940 = vmatmul.mubr.bf16.gmra.mrb[0].mxu0 %v3772
    %v4941 = vpop.f32.mrb[0].mxu0
    %v4942 = vadd.f32 %v4845, %v4941
    %v4943 = vpop.f32.mrb[0].mxu0
    %v4944 = vpop.f32.mrb[0].mxu0
    %v4945 = vadd.f32 %v4848, %v4944
    %v4946 = vpop.f32.mrb[0].mxu0
    %4947 = vmatprep.mubr.bf16.mxu0 0
    %4948 = vmatmul.mubr.bf16.gmra.mrb[0].mxu0 %v3778
    %v4949 = vpop.f32.mrb[0].mxu0
    %v4950 = vadd.f32 %v4853, %v4949
    %v4951 = vpop.f32.mrb[0].mxu0
    %v4952 = vpop.f32.mrb[0].mxu0
    %v4953 = vadd.f32 %v4856, %v4952
    %v4954 = vpop.f32.mrb[0].mxu0
    %4955 = vmatprep.mubr.bf16.mxu0 0
    %4956 = vmatmul.mubr.bf16.gmra.mrb[0].mxu0 %v3907
    %v4957 = vpop.f32.mrb[0].mxu0
    %v4958 = vadd.f32 %v4861, %v4957
    %v4959 = vpop.f32.mrb[0].mxu0
    %v4960 = vpop.f32.mrb[0].mxu0
    %v4961 = vadd.f32 %v4864, %v4960
    %v4962 = vpop.f32.mrb[0].mxu0
    %4963 = vmatprep.mubr.bf16.mxu0 0
    %4964 = vmatmul.mubr.bf16.gmra.mrb[0].mxu0 %v3913
    %v4965 = vpop.f32.mrb[0].mxu0
    %v4966 = vadd.f32 %v4869, %v4965
    %v4967 = vpop.f32.mrb[0].mxu0
    %v4968 = vpop.f32.mrb[0].mxu0
    %v4969 = vadd.f32 %v4872, %v4968
    %v4970 = vpop.f32.mrb[0].mxu0
    %4971 = vmatprep.mubr.bf16.mxu0 0
    %4972 = vmatmul.mubr.bf16.gmra.mrb[0].mxu0 %v3919
    %v4973 = vpop.f32.mrb[0].mxu0
    %v4974 = vadd.f32 %v4877, %v4973
    %v4975 = vpop.f32.mrb[0].mxu0
    %v4976 = vpop.f32.mrb[0].mxu0
    %v4977 = vadd.f32 %v4880, %v4976
    %v4978 = vpop.f32.mrb[0].mxu0
    %4979 = vmatprep.mubr.bf16.mxu0 0
    %4980 = vmatmul.mubr.bf16.gmra.mrb[0].mxu0 %v3925
    %v4981 = vpop.f32.mrb[0].mxu0
    %v4982 = vadd.f32 %v4885, %v4981
    %v4983 = vpop.f32.mrb[0].mxu0
    %v4984 = vpop.f32.mrb[0].mxu0
    %v4985 = vadd.f32 %v4888, %v4984
    %v4986 = vpop.f32.mrb[0].mxu0
    %4987 = vdwg.mxu0
    %s4988 = scalar_lea.vmem %s8, 1
    %v4989 = vld [vmem:[%s4988] sm:$0x1]
    %v4991 = vlaneseq
    %v4992 = vshrl.u32 %v4991, 7
    %v4993 = vsub.s32 0, %v4992
    %v4994 = vrot.slane %v4989, %v4993
    %v4996 = vmul.f32 %v4926, %v4994
    %v4997 = vmul.f32 %v4929, %v4994
    %v4998 = vmul.f32 %v4934, %v4994
    %v4999 = vmul.f32 %v4937, %v4994
    %v5000 = vmul.f32 %v4942, %v4994
    %v5001 = vmul.f32 %v4945, %v4994
    %v5002 = vmul.f32 %v4950, %v4994
    %v5003 = vmul.f32 %v4953, %v4994
    %v5004 = vmul.f32 %v4958, %v4994
    %v5005 = vmul.f32 %v4961, %v4994
    %v5006 = vmul.f32 %v4966, %v4994
    %v5007 = vmul.f32 %v4969, %v4994
    %v5008 = vmul.f32 %v4974, %v4994
    %v5009 = vmul.f32 %v4977, %v4994
    %v5010 = vmul.f32 %v4982, %v4994
    %v5011 = vmul.f32 %v4985, %v4994
    %s5012 = scalar_lea.vmem %s9, 1
    %v5013 = vld [vmem:[%s5012] sm:$0x1]
    %v5015 = vlaneseq
    %v5016 = vshrl.u32 %v5015, 7
    %v5017 = vsub.s32 0, %v5016
    %v5018 = vrot.slane %v5013, %v5017
    %v5020 = vadd.f32 %v4996, %v5018
    %v5021 = vadd.f32 %v4997, %v5018
    %v5022 = vadd.f32 %v4998, %v5018
    %v5023 = vadd.f32 %v4999, %v5018
    %v5024 = vadd.f32 %v5000, %v5018
    %v5025 = vadd.f32 %v5001, %v5018
    %v5026 = vadd.f32 %v5002, %v5018
    %v5027 = vadd.f32 %v5003, %v5018
    %v5028 = vadd.f32 %v5004, %v5018
    %v5029 = vadd.f32 %v5005, %v5018
    %v5030 = vadd.f32 %v5006, %v5018
    %v5031 = vadd.f32 %v5007, %v5018
    %v5032 = vadd.f32 %v5008, %v5018
    %v5033 = vadd.f32 %v5009, %v5018
    %v5034 = vadd.f32 %v5010, %v5018
    %v5035 = vadd.f32 %v5011, %v5018
    %v5036 = vmin.f32 %v5020, 20.0
    %v5037 = vmin.f32 %v5021, 20.0
    %v5038 = vmin.f32 %v5022, 20.0
    %v5039 = vmin.f32 %v5023, 20.0
    %v5040 = vmin.f32 %v5024, 20.0
    %v5041 = vmin.f32 %v5025, 20.0
    %v5042 = vmin.f32 %v5026, 20.0
    %v5043 = vmin.f32 %v5027, 20.0
    %v5044 = vmin.f32 %v5028, 20.0
    %v5045 = vmin.f32 %v5029, 20.0
    %v5046 = vmin.f32 %v5030, 20.0
    %v5047 = vmin.f32 %v5031, 20.0
    %v5048 = vmin.f32 %v5032, 20.0
    %v5049 = vmin.f32 %v5033, 20.0
    %v5050 = vmin.f32 %v5034, 20.0
    %v5051 = vmin.f32 %v5035, 20.0
    %v5052 = vmul.f32 %v5036, 1.442695
    %v5053 = vpow.pop %v5052
    %v5054 = vmul.f32 %v5037, 1.442695
    %v5055 = vpow.pop %v5054
    %v5056 = vmul.f32 %v5038, 1.442695
    %v5057 = vpow.pop %v5056
    %v5058 = vmul.f32 %v5039, 1.442695
    %v5059 = vpow.pop %v5058
    %v5060 = vmul.f32 %v5040, 1.442695
    %v5061 = vpow.pop %v5060
    %v5062 = vmul.f32 %v5041, 1.442695
    %v5063 = vpow.pop %v5062
    %v5064 = vmul.f32 %v5042, 1.442695
    %v5065 = vpow.pop %v5064
    %v5066 = vmul.f32 %v5043, 1.442695
    %v5067 = vpow.pop %v5066
    %v5068 = vmul.f32 %v5044, 1.442695
    %v5069 = vpow.pop %v5068
    %v5070 = vmul.f32 %v5045, 1.442695
    %v5071 = vpow.pop %v5070
    %v5072 = vmul.f32 %v5046, 1.442695
    %v5073 = vpow.pop %v5072
    %v5074 = vmul.f32 %v5047, 1.442695
    %v5075 = vpow.pop %v5074
    %v5076 = vmul.f32 %v5048, 1.442695
    %v5077 = vpow.pop %v5076
    %v5078 = vmul.f32 %v5049, 1.442695
    %v5079 = vpow.pop %v5078
    %v5080 = vmul.f32 %v5050, 1.442695
    %v5081 = vpow.pop %v5080
    %v5082 = vmul.f32 %v5051, 1.442695
    %v5083 = vpow.pop %v5082
    %v5084 = vadd.f32 %v5053, 2.0
    %v5085 = vadd.f32 %v5055, 2.0
    %v5086 = vadd.f32 %v5057, 2.0
    %v5087 = vadd.f32 %v5059, 2.0
    %v5088 = vadd.f32 %v5061, 2.0
    %v5089 = vadd.f32 %v5063, 2.0
    %v5090 = vadd.f32 %v5065, 2.0
    %v5091 = vadd.f32 %v5067, 2.0
    %v5092 = vadd.f32 %v5069, 2.0
    %v5093 = vadd.f32 %v5071, 2.0
    %v5094 = vadd.f32 %v5073, 2.0
    %v5095 = vadd.f32 %v5075, 2.0
    %v5096 = vadd.f32 %v5077, 2.0
    %v5097 = vadd.f32 %v5079, 2.0
    %v5098 = vadd.f32 %v5081, 2.0
    %v5099 = vadd.f32 %v5083, 2.0
    %v5100 = vmul.f32 %v5053, %v5084
    %v5101 = vmul.f32 %v5055, %v5085
    %v5102 = vmul.f32 %v5057, %v5086
    %v5103 = vmul.f32 %v5059, %v5087
    %v5104 = vmul.f32 %v5061, %v5088
    %v5105 = vmul.f32 %v5063, %v5089
    %v5106 = vmul.f32 %v5065, %v5090
    %v5107 = vmul.f32 %v5067, %v5091
    %v5108 = vmul.f32 %v5069, %v5092
    %v5109 = vmul.f32 %v5071, %v5093
    %v5110 = vmul.f32 %v5073, %v5094
    %v5111 = vmul.f32 %v5075, %v5095
    %v5112 = vmul.f32 %v5077, %v5096
    %v5113 = vmul.f32 %v5079, %v5097
    %v5114 = vmul.f32 %v5081, %v5098
    %v5115 = vmul.f32 %v5083, %v5099
    %v5116 = vmul.f32 %v5020, %v5100
    %v5117 = vmul.f32 %v5021, %v5101
    %v5118 = vmul.f32 %v5022, %v5102
    %v5119 = vmul.f32 %v5023, %v5103
    %v5120 = vmul.f32 %v5024, %v5104
    %v5121 = vmul.f32 %v5025, %v5105
    %v5122 = vmul.f32 %v5026, %v5106
    %v5123 = vmul.f32 %v5027, %v5107
    %v5124 = vmul.f32 %v5028, %v5108
    %v5125 = vmul.f32 %v5029, %v5109
    %v5126 = vmul.f32 %v5030, %v5110
    %v5127 = vmul.f32 %v5031, %v5111
    %v5128 = vmul.f32 %v5032, %v5112
    %v5129 = vmul.f32 %v5033, %v5113
    %v5130 = vmul.f32 %v5034, %v5114
    %v5131 = vmul.f32 %v5035, %v5115
    %v5132 = vadd.f32 %v5100, 2.0
    %v5133 = vadd.f32 %v5101, 2.0
    %v5134 = vadd.f32 %v5102, 2.0
    %v5135 = vadd.f32 %v5103, 2.0
    %v5136 = vadd.f32 %v5104, 2.0
    %v5137 = vadd.f32 %v5105, 2.0
    %v5138 = vadd.f32 %v5106, 2.0
    %v5139 = vadd.f32 %v5107, 2.0
    %v5140 = vadd.f32 %v5108, 2.0
    %v5141 = vadd.f32 %v5109, 2.0
    %v5142 = vadd.f32 %v5110, 2.0
    %v5143 = vadd.f32 %v5111, 2.0
    %v5144 = vadd.f32 %v5112, 2.0
    %v5145 = vadd.f32 %v5113, 2.0
    %v5146 = vadd.f32 %v5114, 2.0
    %v5147 = vadd.f32 %v5115, 2.0
    %v5148 = vrcp.pop %v5132
    %v5149 = vrcp.pop %v5133
    %v5150 = vrcp.pop %v5134
    %v5151 = vrcp.pop %v5135
    %v5152 = vrcp.pop %v5136
    %v5153 = vrcp.pop %v5137
    %v5154 = vrcp.pop %v5138
    %v5155 = vrcp.pop %v5139
    %v5156 = vrcp.pop %v5140
    %v5157 = vrcp.pop %v5141
    %v5158 = vrcp.pop %v5142
    %v5159 = vrcp.pop %v5143
    %v5160 = vrcp.pop %v5144
    %v5161 = vrcp.pop %v5145
    %v5162 = vrcp.pop %v5146
    %v5163 = vrcp.pop %v5147
    %v5164 = vmul.f32 %v5116, %v5148
    %v5165 = vmul.f32 %v5117, %v5149
    %v5166 = vmul.f32 %v5118, %v5150
    %v5167 = vmul.f32 %v5119, %v5151
    %v5168 = vmul.f32 %v5120, %v5152
    %v5169 = vmul.f32 %v5121, %v5153
    %v5170 = vmul.f32 %v5122, %v5154
    %v5171 = vmul.f32 %v5123, %v5155
    %v5172 = vmul.f32 %v5124, %v5156
    %v5173 = vmul.f32 %v5125, %v5157
    %v5174 = vmul.f32 %v5126, %v5158
    %v5175 = vmul.f32 %v5127, %v5159
    %v5176 = vmul.f32 %v5128, %v5160
    %v5177 = vmul.f32 %v5129, %v5161
    %v5178 = vmul.f32 %v5130, %v5162
    %v5179 = vmul.f32 %v5131, %v5163
    %v5180 = vadd.f32 %v3238, %v5164
    %v5181 = vadd.f32 %v3239, %v5165
    %v5182 = vadd.f32 %v3240, %v5166
    %v5183 = vadd.f32 %v3241, %v5167
    %v5184 = vadd.f32 %v3242, %v5168
    %v5185 = vadd.f32 %v3243, %v5169
    %v5186 = vadd.f32 %v3244, %v5170
    %v5187 = vadd.f32 %v3245, %v5171
    %v5188 = vadd.f32 %v3246, %v5172
    %v5189 = vadd.f32 %v3247, %v5173
    %v5190 = vadd.f32 %v3248, %v5174
    %v5191 = vadd.f32 %v3249, %v5175
    %v5192 = vadd.f32 %v3250, %v5176
    %v5193 = vadd.f32 %v3251, %v5177
    %v5194 = vadd.f32 %v3252, %v5178
    %v5195 = vadd.f32 %v3253, %v5179
    %5196 = vst [vmem:[#allocation4] sm:$0xff] %v5180
    %5197 = vst [vmem:[#allocation4 + $0x8] sm:$0xff] %v5181
    %5198 = vst [vmem:[#allocation4 + $0x10] sm:$0xff] %v5182
    %5199 = vst [vmem:[#allocation4 + $0x18] sm:$0xff] %v5183
    %5200 = vst [vmem:[#allocation4 + $0x20] sm:$0xff] %v5184
    %5201 = vst [vmem:[#allocation4 + $0x28] sm:$0xff] %v5185
    %5202 = vst [vmem:[#allocation4 + $0x30] sm:$0xff] %v5186
    %5203 = vst [vmem:[#allocation4 + $0x38] sm:$0xff] %v5187
    %5204 = vst [vmem:[#allocation4 + $0x40] sm:$0xff] %v5188
    %5205 = vst [vmem:[#allocation4 + $0x48] sm:$0xff] %v5189
    %5206 = vst [vmem:[#allocation4 + $0x50] sm:$0xff] %v5190
    %5207 = vst [vmem:[#allocation4 + $0x58] sm:$0xff] %v5191
    %5208 = vst [vmem:[#allocation4 + $0x60] sm:$0xff] %v5192
    %5209 = vst [vmem:[#allocation4 + $0x68] sm:$0xff] %v5193
    %5210 = vst [vmem:[#allocation4 + $0x70] sm:$0xff] %v5194
    %5211 = vst [vmem:[#allocation4 + $0x78] sm:$0xff] %v5195
    // Predicated region
    $region42: #{down_sample_layer.1} parent=1 // pred_check
      _
    $region43: #{down_sample_layer.1} parent=1 // pred_check_branch
      %5213 = sbr.rel (0) target = $region45
    $region44: #{down_sample_layer.1} parent=1 // pred_region
      %s5215 = ssub.s32 2048, 2048
      %5216 = vsyncadd [#allocation5], %s5215
      %s5217 = sshll.u32 [#allocation4], 4
      %s5218 = int_to_ptr.vmem [resolvable:$true] %s5217
      %5223 = dma.vmem_to_hbm [thread:$0]  %s5218, 2048, %s10, [#allocation5], 128, 128, 8
    $region45: #{down_sample_layer.1} parent=1 // pred_fallthru
      _
    // Predicated region
    $region46: #{down_sample_layer.1} parent=1 // pred_check
      _
    $region47: #{down_sample_layer.1} parent=1 // pred_check_branch
      %5225 = sbr.rel (0) target = $region49
    $region48: #{down_sample_layer.1} parent=1 // pred_region
      %5226 = dma.done [#allocation5], 2048
    $region49: #{down_sample_layer.1} parent=1 // pred_fallthru
      _
    %5227 = vsyncpa [#allocation5], 1

</llo_original>
